<compile_context>
chip_gen: v5e
topology: v5e:2x2
jax: 0.10.0
libtpu: 0.0.40
codegen_flags: <defaults>
</compile_context>

<pallas_src>
import functools

import jax
import jax.numpy as jnp
from jax import lax
from jax.experimental import pallas as pl
from jax.experimental.pallas import tpu as pltpu

CPAD = 128                       # all channel dims padded to one full lane group
NPAD = 128                       # classifier output lanes
VMEM_LIMIT = 32 * 1024 * 1024    # explicit scoped-VMEM budget (safe on v5e/v6e/v7x)
NEG = float(jnp.finfo(jnp.float32).min)


def _round8(n):
    return (n + 7) // 8 * 8


# ----------------------------------------------------------------------------------
# Shared in-kernel prune logic (top-k masks + resolve_overlap_mask + statistics)
# ----------------------------------------------------------------------------------
def _rank_desc(x, jj, ii):
    # descending rank, ties broken by lower channel index (stable argsort semantics)
    xj = x[:, :, None]                                   # (R, Cp, 1)
    xi = x[:, None, :]                                   # (R, 1, Cp)
    m = jnp.logical_or(xj > xi, jnp.logical_and(xj == xi, jj < ii))
    return jnp.sum(m.astype(jnp.float32), axis=1)        # (R, Cp)


def _prune_masks_logic(g_in, sg_in, srank0, va, sva, jj, ii, validf, c_real, dpr):
    # g_in / sg_in: gates with padded lanes already set to NEG.
    inv_c = 1.0 / float(c_real)

    def keep(rank, action):
        # active[c] = 1 iff action*C - rank(c) >= 0, or rank(c) == 0 (top channel forced)
        k = jnp.logical_or(action * float(c_real) - rank >= 0.0, rank == 0.0)
        return jnp.where(k, 1.0, 0.0) * validf

    active0 = keep(_rank_desc(g_in, jj, ii), va)
    sactive0 = keep(srank0, sva)

    overlap = (1.0 - active0) * (1.0 - sactive0) * validf
    orat = jnp.sum(overlap, axis=1, keepdims=True) * inv_c

    va2 = jnp.clip(1.0 - (1.0 - va - orat) * dpr - orat, 0.0, 1.0)
    sva2 = jnp.clip(1.0 - (1.0 - sva - orat) * (1.0 - dpr) - orat, 0.0, 1.0)

    g2 = jnp.where(overlap > 0.0, NEG, g_in)
    sg2 = jnp.where(overlap > 0.0, NEG, sg_in)

    active = keep(_rank_desc(g2, jj, ii), va2)
    sactive = keep(_rank_desc(sg2, jj, ii), sva2)

    prod_m = jnp.sum(active * sactive, axis=1, keepdims=True) * inv_c
    both_m = jnp.sum((1.0 - active) * (1.0 - sactive) * validf,
                     axis=1, keepdims=True) * inv_c
    return active, sactive, prod_m, orat, both_m


def _pack_stats(lane, prod_m, orat, both_m):
    # lane-dense stats slab: col0 = (a*sa).mean, col1 = overlap.mean, col2 = both-off.mean
    stats = jnp.where(lane == 0, prod_m, 0.0)
    stats = jnp.where(lane == 1, orat, stats)
    stats = jnp.where(lane == 2, both_m, stats)
    return stats


# ----------------------------------------------------------------------------------
# Pallas kernel 1:  [fused prune of previous layer] + mask-apply + ReLU
#                   + 3x3 conv (vreg accumulation) + bias + spatial mean + gate affine
#                   (+ emit the next layer's pre-padded bf16 activation)
#   one grid step == one batch element (grid axis marked "parallel")
# ----------------------------------------------------------------------------------
def _conv_gate_kernel(*refs, H, W, c_real, dpr, fuse_prune, emit_xpad):
    it = iter(refs)
    colmask_ref = next(it)                               # (H*Wp, 1) f32 wrap-column mask
    if fuse_prune:
        gprev_ref = next(it)                             # (1, Cp)  previous layer gates
        sg_ref = next(it)                                # (1, Cp)  static gates (NEG-padded)
        sr_ref = next(it)                                # (1, Cp)  precomputed static rank
        va_ref = next(it)                                # (1, 1)
        sva_ref = next(it)                               # (1, 1)
    x_ref = next(it)                                     # (ROWS, Cp) bf16, padded flat layout
    w_ref = next(it)                                     # (9, Cp, Cop) bf16 conv taps
    b_ref = next(it)                                     # (1, Cop)
    gs_ref = next(it)                                    # (1, Cop)
    gb_ref = next(it)                                    # (1, Cop)
    if emit_xpad:
        xpad_ref = next(it)                              # (ROWS, Cop) bf16 (next layer input)
    rmean_ref = next(it)                                 # (1, Cop) spatial mean of relu(y)
    ds_ref = next(it)                                    # (1, Cop) spatial mean of y
    g_out_ref = next(it)                                 # (1, Cop) gates
    if fuse_prune:
        stats_ref = next(it)                             # (1, Cop) packed statistics
        xs_ref = next(it)                                # (ROWS, Cp) bf16 scratch

    Wp = W + 2
    HWp = H * Wp
    load = _round8(HWp + 2)
    ROWS = x_ref.shape[0]
    Cop = w_ref.shape[-1]
    Cp = x_ref.shape[-1]

    if fuse_prune:
        # --- previous layer's prune (top-k + overlap resolve + stats), per element ---
        lane = lax.broadcasted_iota(jnp.int32, (1, Cp), 1)
        jj = lax.broadcasted_iota(jnp.int32, (1, Cp, Cp), 1)
        ii = lax.broadcasted_iota(jnp.int32, (1, Cp, Cp), 2)
        validf = (lane < c_real).astype(jnp.float32)
        g_in = jnp.where(lane < c_real, gprev_ref[...], NEG)
        active, sactive, prod_m, orat, both_m = _prune_masks_logic(
            g_in, sg_ref[...], sr_ref[...], va_ref[...], sva_ref[...],
            jj, ii, validf, c_real, dpr)
        stats_ref[...] = _pack_stats(lane, prod_m, orat, both_m)

        # --- apply previous-layer channel mask + ReLU, stage once as bf16 ------------
        mask16 = (active * sactive).astype(jnp.bfloat16)          # (1, Cp), exact 0/1
        xs_ref[...] = jnp.maximum(x_ref[...] * mask16, 0)
        src = xs_ref
    else:
        # layer 0: prev mask is statically all-ones and no activation -> no staging
        src = x_ref

    # --- 3x3 conv: 3 contiguous bf16 loads (even row offsets), 9 MXU matmuls,
    #     dw handled by cheap f32 value-slices of the result, vreg accumulation -------
    acc = jnp.zeros((HWp, Cop), jnp.float32)
    for dh in range(3):
        a = src[dh * Wp: dh * Wp + load, :]                       # (load, Cp) bf16
        for dw in range(3):
            z = jnp.dot(a, w_ref[dh * 3 + dw],
                        preferred_element_type=jnp.float32)       # (load, Cop) f32
            acc = acc + z[dw: dw + HWp, :]

    y = (acc + b_ref[...]) * colmask_ref[...]                     # zero the 2 wrap cols/row

    inv_hw = 1.0 / float(H * W)
    ds = jnp.sum(y, axis=0, keepdims=True) * inv_hw               # spatial "downsample"
    ds_ref[...] = ds
    g_out_ref[...] = ds * gs_ref[...] + gb_ref[...]               # gates = ds*scale + bias
    rmean_ref[...] = jnp.sum(jnp.maximum(y, 0.0), axis=0, keepdims=True) * inv_hw

    if emit_xpad:
        # emit next layer's activation directly in padded flat layout (halo = zeros):
        # padded_flat[Wp+1 : Wp+1+H*Wp] == wrap-masked wide output, rest zero.
        head = jnp.zeros((Wp + 1, Cop), jnp.float32)
        tail = jnp.zeros((ROWS - (Wp + 1) - HWp, Cop), jnp.float32)
        xpad_ref[...] = jnp.concatenate([head, y, tail], axis=0).astype(jnp.bfloat16)


def conv_gate_layer(x_flat, colmask, w_taps, b_pad, gs_pad, gb_pad, *, H, W,
                    fuse, emit_xpad, c_real, dpr):
    B, ROWS, Cp = x_flat.shape
    Cop = w_taps.shape[-1]
    Wp = W + 2
    HWp = H * Wp

    inputs = [colmask]
    in_specs = [pl.BlockSpec((HWp, 1), lambda b: (0, 0))]
    if fuse is not None:
        gprev, sgp, srp, va, sva = fuse
        inputs += [gprev, sgp, srp,
                   va.astype(jnp.float32).reshape(B, 1, 1),
                   sva.astype(jnp.float32).reshape(B, 1, 1)]
        in_specs += [pl.BlockSpec((None, 1, Cp), lambda b: (b, 0, 0)),
                     pl.BlockSpec((1, Cp), lambda b: (0, 0)),
                     pl.BlockSpec((1, Cp), lambda b: (0, 0)),
                     pl.BlockSpec((None, 1, 1), lambda b: (b, 0, 0)),
                     pl.BlockSpec((None, 1, 1), lambda b: (b, 0, 0))]
    inputs += [x_flat, w_taps, b_pad, gs_pad, gb_pad]
    in_specs += [pl.BlockSpec((None, ROWS, Cp), lambda b: (b, 0, 0)),
                 pl.BlockSpec((9, Cp, Cop), lambda b: (0, 0, 0)),
                 pl.BlockSpec((1, Cop), lambda b: (0, 0)),
                 pl.BlockSpec((1, Cop), lambda b: (0, 0)),
                 pl.BlockSpec((1, Cop), lambda b: (0, 0))]

    out_shape, out_specs = [], []
    if emit_xpad:
        out_shape.append(jax.ShapeDtypeStruct((B, ROWS, Cop), jnp.bfloat16))
        out_specs.append(pl.BlockSpec((None, ROWS, Cop), lambda b: (b, 0, 0)))
    for _ in range(3):                                   # relu-mean, downsample, gates
        out_shape.append(jax.ShapeDtypeStruct((B, 1, Cop), jnp.float32))
        out_specs.append(pl.BlockSpec((None, 1, Cop), lambda b: (b, 0, 0)))
    if fuse is not None:                                 # packed stats of previous layer
        out_shape.append(jax.ShapeDtypeStruct((B, 1, Cop), jnp.float32))
        out_specs.append(pl.BlockSpec((None, 1, Cop), lambda b: (b, 0, 0)))

    scratch = [pltpu.VMEM((ROWS, Cp), jnp.bfloat16)] if fuse is not None else []

    kernel = functools.partial(_conv_gate_kernel, H=H, W=W, c_real=int(c_real),
                               dpr=float(dpr), fuse_prune=fuse is not None,
                               emit_xpad=emit_xpad)
    return pl.pallas_call(
        kernel,
        out_shape=tuple(out_shape),
        grid=(B,),
        in_specs=in_specs,
        out_specs=tuple(out_specs),
        scratch_shapes=scratch,
        compiler_params=pltpu.CompilerParams(
            dimension_semantics=("parallel",),
            vmem_limit_bytes=VMEM_LIMIT),
    )(*inputs)


# ----------------------------------------------------------------------------------
# Pallas kernel 2 (last layer only): prune + stats + classifier head, all B rows in
# one grid step (the kernel is overhead-bound, not compute-bound)
# ----------------------------------------------------------------------------------
def _prune_head_kernel(g_ref, sg_ref, sr_ref, va_ref, sva_ref, rm_ref, fw_ref, fb_ref,
                       logits_ref, stats_ref, *, c_real, dpr):
    Bb, Cp = g_ref.shape
    lane = lax.broadcasted_iota(jnp.int32, (Bb, Cp), 1)
    jj = lax.broadcasted_iota(jnp.int32, (Bb, Cp, Cp), 1)
    ii = lax.broadcasted_iota(jnp.int32, (Bb, Cp, Cp), 2)
    validf = (lane < c_real).astype(jnp.float32)
    g_in = jnp.where(lane < c_real, g_ref[...], NEG)

    active, sactive, prod_m, orat, both_m = _prune_masks_logic(
        g_in, sg_ref[...], sr_ref[...], va_ref[...], sva_ref[...],
        jj, ii, validf, c_real, dpr)
    stats_ref[...] = _pack_stats(lane, prod_m, orat, both_m)

    # classifier head: relu(y * mask).mean_spatial == mask * relu(y).mean_spatial
    feat = active * sactive * rm_ref[...]                         # (B, Cp)
    logits_ref[...] = (jnp.dot(feat, fw_ref[...], preferred_element_type=jnp.float32)
                       + fb_ref[...])


def prune_head(gates, sg_pad, srank0, va, sva, relu_mean, fcw_pad, fcb_pad,
               *, c_real, dpr):
    B, Cp = gates.shape
    Np = fcw_pad.shape[-1]
    kernel = functools.partial(_prune_head_kernel, c_real=int(c_real), dpr=float(dpr))
    out_shape = (jax.ShapeDtypeStruct((B, Np), jnp.float32),
                 jax.ShapeDtypeStruct((B, Cp), jnp.float32))
    return pl.pallas_call(
        kernel,
        out_shape=out_shape,
        grid=(1,),
        in_specs=[pl.BlockSpec((B, Cp), lambda i: (0, 0)),
                  pl.BlockSpec((1, Cp), lambda i: (0, 0)),
                  pl.BlockSpec((1, Cp), lambda i: (0, 0)),
                  pl.BlockSpec((B, 1), lambda i: (0, 0)),
                  pl.BlockSpec((B, 1), lambda i: (0, 0)),
                  pl.BlockSpec((B, Cp), lambda i: (0, 0)),
                  pl.BlockSpec((Cp, Np), lambda i: (0, 0)),
                  pl.BlockSpec((1, Np), lambda i: (0, 0))],
        out_specs=(pl.BlockSpec((B, Np), lambda i: (0, 0)),
                   pl.BlockSpec((B, Cp), lambda i: (0, 0))),
        compiler_params=pltpu.CompilerParams(
            dimension_semantics=("arbitrary",),
            vmem_limit_bytes=VMEM_LIMIT),
    )(gates.astype(jnp.float32), sg_pad, srank0,
      va.astype(jnp.float32), sva.astype(jnp.float32),
      relu_mean, fcw_pad, fcb_pad)


# ----------------------------------------------------------------------------------
# init-time helper: descending rank with stable (lower-index) tie-break (plain JAX)
# ----------------------------------------------------------------------------------
def _rank_desc_stable(g_row):          # (1, Cp) -> (1, Cp)
    g = g_row[0]
    gj = g[:, None]
    gi = g[None, :]
    idx = jnp.arange(g.shape[0])
    m = (gj > gi) | ((gj == gi) & (idx[:, None] < idx[None, :]))
    return jnp.sum(m.astype(jnp.float32), axis=0, keepdims=True)


# ----------------------------------------------------------------------------------
# Deterministic stubs for the external actor / static_actor (tiny matmuls -> plain JAX)
# ----------------------------------------------------------------------------------
class ActorStub:
    def __init__(self, key, state_dim, hidden_dim, num_layers):
        ks = jax.random.split(key, 5)
        self.Ws = 0.1 * jax.random.normal(ks[0], (state_dim, hidden_dim), jnp.float32)
        self.Wh = 0.1 * jax.random.normal(ks[1], (hidden_dim, hidden_dim), jnp.float32)
        self.Wb = 0.1 * jax.random.normal(ks[2], (1, hidden_dim), jnp.float32)
        self.b = jnp.zeros((hidden_dim,), jnp.float32)
        self.Wo = 0.1 * jax.random.normal(ks[3], (hidden_dim, 1), jnp.float32)
        self.bo = jnp.zeros((1,), jnp.float32)
        self.hidden_dim = hidden_dim
        self.num_layers = num_layers
        self.training = False

    def zeros_state(self, batch_size, with_noise, is_train_gagent=False):
        layer_index = jnp.zeros((1,), jnp.int32)
        hidden = jnp.zeros((batch_size, self.hidden_dim), jnp.float32)
        return layer_index, hidden, None

    def predict_action(self, state, budget, layer_index, hidden, with_noise=False,
                       is_train_gagent=False):
        pre = state @ self.Ws + hidden @ self.Wh + budget @ self.Wb + self.b
        hidden_new = jnp.tanh(pre)
        action = jax.nn.sigmoid(hidden_new @ self.Wo + self.bo)       # (B, 1)
        info = action
        budget_new = budget - action / float(self.num_layers)
        return action, info, budget_new, layer_index + 1, hidden_new


class StaticActorStub:
    def __init__(self, key, hidden_dim, num_layers):
        ks = jax.random.split(key, 4)
        self.Wb = 0.1 * jax.random.normal(ks[0], (1, hidden_dim), jnp.float32)
        self.Wh = 0.1 * jax.random.normal(ks[1], (hidden_dim, hidden_dim), jnp.float32)
        self.b = jnp.zeros((hidden_dim,), jnp.float32)
        self.Wo = 0.1 * jax.random.normal(ks[2], (hidden_dim, 1), jnp.float32)
        self.bo = jnp.zeros((1,), jnp.float32)
        self.hidden_dim = hidden_dim
        self.num_layers = num_layers
        self.training = False

    def zeros_state(self, batch_size, with_noise, is_train_gagent=False):
        layer_index = jnp.zeros((1,), jnp.int32)
        hidden = jnp.zeros((batch_size, self.hidden_dim), jnp.float32)
        return layer_index, hidden, None

    def predict_action(self, budget, layer_index, hidden, with_noise=False,
                       is_train_gagent=False):
        pre = budget @ self.Wb + hidden @ self.Wh + self.b
        hidden_new = jnp.tanh(pre)
        action = jax.nn.sigmoid(hidden_new @ self.Wo + self.bo)
        info = action
        budget_new = budget - action / float(self.num_layers)
        return action, info, budget_new, layer_index + 1, hidden_new


# ----------------------------------------------------------------------------------
# PruningInference (JAX / Pallas): base_net stub + exact prune-hook semantics
# ----------------------------------------------------------------------------------
class PruningInferencePallas:
    def __init__(self, key, in_ch=4, ch=16, n_classes=10, hidden=8,
                 dynamic_prune_ratio=0.5):
        ks = jax.random.split(key, 12)
        self.dynamic_prune_ratio = float(dynamic_prune_ratio)
        self.budget_clip = False
        self.num_layers = 2
        self.in_ch = in_ch
        self.ch = ch
        self.n_classes = n_classes

        conv_w = [0.2 * jax.random.normal(ks[0], (3, 3, in_ch, ch), jnp.float32),
                  0.2 * jax.random.normal(ks[1], (3, 3, ch, ch), jnp.float32)]
        conv_b = [jnp.zeros((ch,), jnp.float32), jnp.zeros((ch,), jnp.float32)]
        gate_scale = [1.0 + 0.5 * jax.random.normal(ks[2], (ch,), jnp.float32),
                      1.0 + 0.5 * jax.random.normal(ks[3], (ch,), jnp.float32)]
        gate_bias = [0.1 * jax.random.normal(ks[4], (ch,), jnp.float32),
                     0.1 * jax.random.normal(ks[5], (ch,), jnp.float32)]
        static_gates = [jax.random.normal(ks[6], (1, ch), jnp.float32),
                        jax.random.normal(ks[7], (1, ch), jnp.float32)]
        self.fc_w = 0.1 * jax.random.normal(ks[8], (ch, n_classes), jnp.float32)
        self.fc_b = jnp.zeros((n_classes,), jnp.float32)
        self.actor = ActorStub(ks[9], state_dim=2 * ch, hidden_dim=hidden,
                               num_layers=self.num_layers)
        self.static_actor = StaticActorStub(ks[10], hidden_dim=hidden,
                                            num_layers=self.num_layers)

        # ---- one-time padding / packing of parameters for the Pallas kernels --------
        cins = [in_ch, ch]
        self.w_taps, self.b_pad, self.gs_pad, self.gb_pad = [], [], [], []
        self.sg_pad, self.srank0 = [], []
        for l in range(self.num_layers):
            w = conv_w[l].reshape(9, cins[l], ch)
            wp = jnp.zeros((9, CPAD, CPAD), jnp.float32).at[:, :cins[l], :ch].set(w)
            self.w_taps.append(wp.astype(jnp.bfloat16))
            self.b_pad.append(jnp.zeros((1, CPAD), jnp.float32).at[:, :ch].set(conv_b[l]))
            self.gs_pad.append(jnp.zeros((1, CPAD), jnp.float32).at[:, :ch].set(gate_scale[l]))
            self.gb_pad.append(jnp.zeros((1, CPAD), jnp.float32).at[:, :ch].set(gate_bias[l]))
            sg = jnp.full((1, CPAD), NEG, jnp.float32).at[:, :ch].set(static_gates[l])
            self.sg_pad.append(sg)
            # static gates are parameters only -> first-pass static rank precomputed once
            self.srank0.append(_rank_desc_stable(sg))
        self.fcw_pad = jnp.zeros((CPAD, NPAD), jnp.float32).at[:ch, :n_classes].set(self.fc_w)
        self.fcb_pad = jnp.zeros((1, NPAD), jnp.float32).at[:, :n_classes].set(self.fc_b)

    def forward(self, x_nchw, budget, static_budget, is_train_gagent=False,
                is_train_base=False, with_noise=None):
        B, _, H, W = x_nchw.shape
        C = self.ch
        Hp, Wp = H + 2, W + 2
        HWp = H * Wp
        load_rows = _round8(HWp + 2)
        rows = _round8(2 * Wp + load_rows)
        if with_noise is None:
            with_noise = self.actor.training

        states, actions, rl_info = [], [], []
        static_entries = []
        layer_index, hidden, _ = self.actor.zeros_state(B, with_noise, is_train_gagent)
        _, static_hidden0, _ = self.static_actor.zeros_state(B, with_noise, is_train_gagent)
        static_budget0 = static_budget   # original code never persists static budget/hidden

        # layer-0 input: NCHW -> NHWC, channel-pad to 128 lanes, spatial zero-pad,
        # flatten spatial, pad rows, cast bf16 (one-time host prep).
        x = jnp.transpose(x_nchw, (0, 2, 3, 1)).astype(jnp.float32)
        xc = jnp.zeros((B, H, W, CPAD), jnp.float32).at[..., :self.in_ch].set(x)
        xp = jnp.pad(xc, ((0, 0), (1, 1), (1, 1), (0, 0))).reshape(B, Hp * Wp, CPAD)
        x_flat = jnp.pad(xp, ((0, 0), (0, rows - Hp * Wp), (0, 0))).astype(jnp.bfloat16)

        # wrap-column mask for the wide conv compute (zeros the 2 garbage cols per row)
        colmask = ((jnp.arange(HWp) % Wp) < W).astype(jnp.float32).reshape(HWp, 1)

        pending_fuse = None   # prune inputs of the previous layer (fused into next conv)
        pending_meta = None   # (static_action, static_valid_action, sinfo) of prev layer
        logits = None

        for l in range(self.num_layers):
            is_last = (l == self.num_layers - 1)

            outs = list(conv_gate_layer(
                x_flat, colmask, self.w_taps[l], self.b_pad[l],
                self.gs_pad[l], self.gb_pad[l], H=H, W=W,
                fuse=pending_fuse, emit_xpad=not is_last,
                c_real=C, dpr=self.dynamic_prune_ratio))
            x_next = outs.pop(0) if not is_last else None
            rmean_p, ds_p, g_p = outs[0], outs[1], outs[2]
            if pending_fuse is not None:
                stats_prev = outs[3]
                sa_prev, sva_prev, sinfo_prev = pending_meta
                static_entries.append(((sa_prev, sva_prev), sinfo_prev,
                                       stats_prev[:, 0, 0], stats_prev[:, 0, 1],
                                       stats_prev[:, 0, 2]))

            downsample = ds_p[:, 0, :C]
            gates = g_p[:, 0, :C]

            # ------------------ prune hook (module semantics) -------------------------
            state = jnp.concatenate((downsample, gates), axis=-1)
            action, info, budget, _li_dyn, hidden = self.actor.predict_action(
                state, budget, layer_index, hidden,
                with_noise=with_noise, is_train_gagent=is_train_gagent)
            rl_info.append(info)
            states.append(state)
            valid_action = jnp.clip(action, 0.1, 1.0)
            actions.append((action, valid_action))
            # budget_clip is False -> no extra clamp

            # static actor gets the (old) layer_index; its returned layer_index persists
            static_action, sinfo, _sb, layer_index, _sh = self.static_actor.predict_action(
                static_budget0, layer_index, static_hidden0,
                with_noise=with_noise, is_train_gagent=is_train_gagent)
            static_valid_action = jnp.clip(static_action, 0.1, 1.0)

            if not is_last:
                # masks + stats for this layer are computed inside the NEXT layer's
                # fused conv kernel (mask is applied right where it is consumed)
                pending_fuse = (g_p, self.sg_pad[l], self.srank0[l],
                                valid_action, static_valid_action)
                pending_meta = (static_action, static_valid_action, sinfo)
                x_flat = x_next
            else:
                # last layer: standalone batched prune fused with the classifier head
                logits_p, stats_p = prune_head(
                    g_p[:, 0, :], self.sg_pad[l], self.srank0[l],
                    valid_action, static_valid_action, rmean_p[:, 0, :],
                    self.fcw_pad, self.fcb_pad,
                    c_real=C, dpr=self.dynamic_prune_ratio)
                static_entries.append(((static_action, static_valid_action), sinfo,
                                       stats_p[:, 0], stats_p[:, 1], stats_p[:, 2]))
                logits = logits_p[:, :self.n_classes]

        static_info = [[e[0] for e in static_entries], [e[1] for e in static_entries],
                       [e[2] for e in static_entries], [e[3] for e in static_entries],
                       [e[4] for e in static_entries]]
        return logits, states, actions, rl_info, static_info


# ----------------------------------------------------------------------------------
if __name__ == "__main__":
    key = jax.random.PRNGKey(0)
    k_param, k_x = jax.random.split(key)

    model = PruningInferencePallas(k_param, in_ch=4, ch=16, n_classes=10, hidden=8,
                                   dynamic_prune_ratio=0.5)

    B, Cin, H, W = 2, 4, 16, 16
    x = jax.random.normal(k_x, (B, Cin, H, W), jnp.float32)     # NCHW like PyTorch
    budget = jnp.full((B, 1), 0.8, jnp.float32)
    static_budget = jnp.full((B, 1), 0.7, jnp.float32)

    outs = model.forward(x, budget, static_budget,
                         is_train_gagent=False, is_train_base=False)
    jax.tree_util.tree_map(lambda a: jax.block_until_ready(a), outs)

    logits = outs[0]
    assert logits.shape == (B, 10)
    print("KERNEL_OK")
</pallas_src>

<mosaic_0001>
module attributes {stable_mosaic.version = 11 : i64} {
  func.func @_conv_gate_kernel(%arg0: i32, %arg1: memref<288x1xf32, #tpu.memory_space<vmem>>, %arg2: memref<1x336x128xbf16, #tpu.memory_space<vmem>>, %arg3: memref<9x128x128xbf16, #tpu.memory_space<vmem>>, %arg4: memref<1x128xf32, #tpu.memory_space<vmem>>, %arg5: memref<1x128xf32, #tpu.memory_space<vmem>>, %arg6: memref<1x128xf32, #tpu.memory_space<vmem>>, %arg7: memref<1x336x128xbf16, #tpu.memory_space<vmem>>, %arg8: memref<1x1x128xf32, #tpu.memory_space<vmem>>, %arg9: memref<1x1x128xf32, #tpu.memory_space<vmem>>, %arg10: memref<1x1x128xf32, #tpu.memory_space<vmem>>) attributes {dimension_semantics = [#tpu.dimension_semantics<parallel>], iteration_bounds = array<i64: 2>, scalar_prefetch = 0 : i64, scratch_operands = 0 : i64, tpu.core_type = #tpu.core_type<tc>, window_params = [{pipeline_mode = #tpu.pipeline_mode<synchronous>, transform_indices = @transform_0, window_bounds = array<i64: 288, 1>}, {transform_indices = @transform_1, window_bounds = array<i64: 1, 336, 128>}, {pipeline_mode = #tpu.pipeline_mode<synchronous>, transform_indices = @transform_2, window_bounds = array<i64: 9, 128, 128>}, {pipeline_mode = #tpu.pipeline_mode<synchronous>, transform_indices = @transform_3, window_bounds = array<i64: 1, 128>}, {pipeline_mode = #tpu.pipeline_mode<synchronous>, transform_indices = @transform_4, window_bounds = array<i64: 1, 128>}, {pipeline_mode = #tpu.pipeline_mode<synchronous>, transform_indices = @transform_5, window_bounds = array<i64: 1, 128>}, {transform_indices = @transform_6, window_bounds = array<i64: 1, 336, 128>}, {transform_indices = @transform_7, window_bounds = array<i64: 1, 1, 128>}, {transform_indices = @transform_8, window_bounds = array<i64: 1, 1, 128>}, {transform_indices = @transform_9, window_bounds = array<i64: 1, 1, 128>}]} {
    %cst = arith.constant 0.000000e+00 : f32
    %0 = vector.broadcast %cst : f32 to vector<288x128xf32>
    %c0 = arith.constant 0 : index
    %c0_0 = arith.constant 0 : index
    %c0_1 = arith.constant 0 : index
    %1 = vector.load %arg2[%c0, %c0_0, %c0_1] : memref<1x336x128xbf16, #tpu.memory_space<vmem>>, vector<1x296x128xbf16>
    %2 = vector.shape_cast %1 : vector<1x296x128xbf16> to vector<296x128xbf16>
    %c0_2 = arith.constant 0 : index
    %c0_3 = arith.constant 0 : index
    %c0_4 = arith.constant 0 : index
    %3 = vector.load %arg3[%c0_2, %c0_3, %c0_4] : memref<9x128x128xbf16, #tpu.memory_space<vmem>>, vector<1x128x128xbf16>
    %4 = vector.shape_cast %3 : vector<1x128x128xbf16> to vector<128x128xbf16>
    %cst_5 = arith.constant dense<0.000000e+00> : vector<296x128xf32>
    %5 = tpu.matmul %2, %4, %cst_5 {dimension_numbers = #tpu.dot_dimension_numbers<[1], [0], [0], [1], [0, 0, 1, 1], [], []>} : vector<296x128xbf16>, vector<128x128xbf16>, vector<296x128xf32> -> vector<296x128xf32>
    %6 = vector.extract_strided_slice %5 {offsets = [0, 0], sizes = [288, 128], strides = [1, 1]} : vector<296x128xf32> to vector<288x128xf32>
    %7 = arith.addf %0, %6 : vector<288x128xf32>
    %c1 = arith.constant 1 : index
    %c0_6 = arith.constant 0 : index
    %c0_7 = arith.constant 0 : index
    %8 = vector.load %arg3[%c1, %c0_6, %c0_7] : memref<9x128x128xbf16, #tpu.memory_space<vmem>>, vector<1x128x128xbf16>
    %9 = vector.shape_cast %8 : vector<1x128x128xbf16> to vector<128x128xbf16>
    %cst_8 = arith.constant dense<0.000000e+00> : vector<296x128xf32>
    %10 = tpu.matmul %2, %9, %cst_8 {dimension_numbers = #tpu.dot_dimension_numbers<[1], [0], [0], [1], [0, 0, 1, 1], [], []>} : vector<296x128xbf16>, vector<128x128xbf16>, vector<296x128xf32> -> vector<296x128xf32>
    %11 = vector.extract_strided_slice %10 {offsets = [1, 0], sizes = [288, 128], strides = [1, 1]} : vector<296x128xf32> to vector<288x128xf32>
    %12 = arith.addf %7, %11 : vector<288x128xf32>
    %c2 = arith.constant 2 : index
    %c0_9 = arith.constant 0 : index
    %c0_10 = arith.constant 0 : index
    %13 = vector.load %arg3[%c2, %c0_9, %c0_10] : memref<9x128x128xbf16, #tpu.memory_space<vmem>>, vector<1x128x128xbf16>
    %14 = vector.shape_cast %13 : vector<1x128x128xbf16> to vector<128x128xbf16>
    %cst_11 = arith.constant dense<0.000000e+00> : vector<296x128xf32>
    %15 = tpu.matmul %2, %14, %cst_11 {dimension_numbers = #tpu.dot_dimension_numbers<[1], [0], [0], [1], [0, 0, 1, 1], [], []>} : vector<296x128xbf16>, vector<128x128xbf16>, vector<296x128xf32> -> vector<296x128xf32>
    %16 = vector.extract_strided_slice %15 {offsets = [2, 0], sizes = [288, 128], strides = [1, 1]} : vector<296x128xf32> to vector<288x128xf32>
    %17 = arith.addf %12, %16 : vector<288x128xf32>
    %c0_12 = arith.constant 0 : index
    %c18 = arith.constant 18 : index
    %c0_13 = arith.constant 0 : index
    %18 = vector.load %arg2[%c0_12, %c18, %c0_13] : memref<1x336x128xbf16, #tpu.memory_space<vmem>>, vector<1x296x128xbf16>
    %19 = vector.shape_cast %18 : vector<1x296x128xbf16> to vector<296x128xbf16>
    %c3 = arith.constant 3 : index
    %c0_14 = arith.constant 0 : index
    %c0_15 = arith.constant 0 : index
    %20 = vector.load %arg3[%c3, %c0_14, %c0_15] : memref<9x128x128xbf16, #tpu.memory_space<vmem>>, vector<1x128x128xbf16>
    %21 = vector.shape_cast %20 : vector<1x128x128xbf16> to vector<128x128xbf16>
    %cst_16 = arith.constant dense<0.000000e+00> : vector<296x128xf32>
    %22 = tpu.matmul %19, %21, %cst_16 {dimension_numbers = #tpu.dot_dimension_numbers<[1], [0], [0], [1], [0, 0, 1, 1], [], []>} : vector<296x128xbf16>, vector<128x128xbf16>, vector<296x128xf32> -> vector<296x128xf32>
    %23 = vector.extract_strided_slice %22 {offsets = [0, 0], sizes = [288, 128], strides = [1, 1]} : vector<296x128xf32> to vector<288x128xf32>
    %24 = arith.addf %17, %23 : vector<288x128xf32>
    %c4 = arith.constant 4 : index
    %c0_17 = arith.constant 0 : index
    %c0_18 = arith.constant 0 : index
    %25 = vector.load %arg3[%c4, %c0_17, %c0_18] : memref<9x128x128xbf16, #tpu.memory_space<vmem>>, vector<1x128x128xbf16>
    %26 = vector.shape_cast %25 : vector<1x128x128xbf16> to vector<128x128xbf16>
    %cst_19 = arith.constant dense<0.000000e+00> : vector<296x128xf32>
    %27 = tpu.matmul %19, %26, %cst_19 {dimension_numbers = #tpu.dot_dimension_numbers<[1], [0], [0], [1], [0, 0, 1, 1], [], []>} : vector<296x128xbf16>, vector<128x128xbf16>, vector<296x128xf32> -> vector<296x128xf32>
    %28 = vector.extract_strided_slice %27 {offsets = [1, 0], sizes = [288, 128], strides = [1, 1]} : vector<296x128xf32> to vector<288x128xf32>
    %29 = arith.addf %24, %28 : vector<288x128xf32>
    %c5 = arith.constant 5 : index
    %c0_20 = arith.constant 0 : index
    %c0_21 = arith.constant 0 : index
    %30 = vector.load %arg3[%c5, %c0_20, %c0_21] : memref<9x128x128xbf16, #tpu.memory_space<vmem>>, vector<1x128x128xbf16>
    %31 = vector.shape_cast %30 : vector<1x128x128xbf16> to vector<128x128xbf16>
    %cst_22 = arith.constant dense<0.000000e+00> : vector<296x128xf32>
    %32 = tpu.matmul %19, %31, %cst_22 {dimension_numbers = #tpu.dot_dimension_numbers<[1], [0], [0], [1], [0, 0, 1, 1], [], []>} : vector<296x128xbf16>, vector<128x128xbf16>, vector<296x128xf32> -> vector<296x128xf32>
    %33 = vector.extract_strided_slice %32 {offsets = [2, 0], sizes = [288, 128], strides = [1, 1]} : vector<296x128xf32> to vector<288x128xf32>
    %34 = arith.addf %29, %33 : vector<288x128xf32>
    %c0_23 = arith.constant 0 : index
    %c36 = arith.constant 36 : index
    %c0_24 = arith.constant 0 : index
    %35 = vector.load %arg2[%c0_23, %c36, %c0_24] : memref<1x336x128xbf16, #tpu.memory_space<vmem>>, vector<1x296x128xbf16>
    %36 = vector.shape_cast %35 : vector<1x296x128xbf16> to vector<296x128xbf16>
    %c6 = arith.constant 6 : index
    %c0_25 = arith.constant 0 : index
    %c0_26 = arith.constant 0 : index
    %37 = vector.load %arg3[%c6, %c0_25, %c0_26] : memref<9x128x128xbf16, #tpu.memory_space<vmem>>, vector<1x128x128xbf16>
    %38 = vector.shape_cast %37 : vector<1x128x128xbf16> to vector<128x128xbf16>
    %cst_27 = arith.constant dense<0.000000e+00> : vector<296x128xf32>
    %39 = tpu.matmul %36, %38, %cst_27 {dimension_numbers = #tpu.dot_dimension_numbers<[1], [0], [0], [1], [0, 0, 1, 1], [], []>} : vector<296x128xbf16>, vector<128x128xbf16>, vector<296x128xf32> -> vector<296x128xf32>
    %40 = vector.extract_strided_slice %39 {offsets = [0, 0], sizes = [288, 128], strides = [1, 1]} : vector<296x128xf32> to vector<288x128xf32>
    %41 = arith.addf %34, %40 : vector<288x128xf32>
    %c7 = arith.constant 7 : index
    %c0_28 = arith.constant 0 : index
    %c0_29 = arith.constant 0 : index
    %42 = vector.load %arg3[%c7, %c0_28, %c0_29] : memref<9x128x128xbf16, #tpu.memory_space<vmem>>, vector<1x128x128xbf16>
    %43 = vector.shape_cast %42 : vector<1x128x128xbf16> to vector<128x128xbf16>
    %cst_30 = arith.constant dense<0.000000e+00> : vector<296x128xf32>
    %44 = tpu.matmul %36, %43, %cst_30 {dimension_numbers = #tpu.dot_dimension_numbers<[1], [0], [0], [1], [0, 0, 1, 1], [], []>} : vector<296x128xbf16>, vector<128x128xbf16>, vector<296x128xf32> -> vector<296x128xf32>
    %45 = vector.extract_strided_slice %44 {offsets = [1, 0], sizes = [288, 128], strides = [1, 1]} : vector<296x128xf32> to vector<288x128xf32>
    %46 = arith.addf %41, %45 : vector<288x128xf32>
    %c8 = arith.constant 8 : index
    %c0_31 = arith.constant 0 : index
    %c0_32 = arith.constant 0 : index
    %47 = vector.load %arg3[%c8, %c0_31, %c0_32] : memref<9x128x128xbf16, #tpu.memory_space<vmem>>, vector<1x128x128xbf16>
    %48 = vector.shape_cast %47 : vector<1x128x128xbf16> to vector<128x128xbf16>
    %cst_33 = arith.constant dense<0.000000e+00> : vector<296x128xf32>
    %49 = tpu.matmul %36, %48, %cst_33 {dimension_numbers = #tpu.dot_dimension_numbers<[1], [0], [0], [1], [0, 0, 1, 1], [], []>} : vector<296x128xbf16>, vector<128x128xbf16>, vector<296x128xf32> -> vector<296x128xf32>
    %50 = vector.extract_strided_slice %49 {offsets = [2, 0], sizes = [288, 128], strides = [1, 1]} : vector<296x128xf32> to vector<288x128xf32>
    %51 = arith.addf %46, %50 : vector<288x128xf32>
    %c0_34 = arith.constant 0 : index
    %c0_35 = arith.constant 0 : index
    %52 = vector.load %arg4[%c0_34, %c0_35] : memref<1x128xf32, #tpu.memory_space<vmem>>, vector<1x128xf32>
    %53 = vector.broadcast %52 : vector<1x128xf32> to vector<288x128xf32>
    %54 = arith.addf %51, %53 : vector<288x128xf32>
    %c0_36 = arith.constant 0 : index
    %c0_37 = arith.constant 0 : index
    %55 = vector.load %arg1[%c0_36, %c0_37] : memref<288x1xf32, #tpu.memory_space<vmem>>, vector<288x1xf32>
    %56 = vector.broadcast %55 : vector<288x1xf32> to vector<288x128xf32>
    %57 = arith.mulf %54, %56 : vector<288x128xf32>
    %cst_38 = arith.constant dense<0.000000e+00> : vector<128xf32>
    %58 = vector.multi_reduction <add>, %57, %cst_38 [0] : vector<288x128xf32> to vector<128xf32>
    %59 = vector.shape_cast %58 : vector<128xf32> to vector<1x128xf32>
    %cst_39 = arith.constant 3.906250e-03 : f32
    %60 = vector.broadcast %cst_39 : f32 to vector<1x128xf32>
    %61 = arith.mulf %59, %60 : vector<1x128xf32>
    %c0_40 = arith.constant 0 : index
    %c0_41 = arith.constant 0 : index
    %c0_42 = arith.constant 0 : index
    %62 = vector.load %arg9[%c0_40, %c0_41, %c0_42] : memref<1x1x128xf32, #tpu.memory_space<vmem>>, vector<1x1x128xf32>
    %63 = vector.shape_cast %62 : vector<1x1x128xf32> to vector<1x128xf32>
    %64 = vector.shape_cast %61 : vector<1x128xf32> to vector<1x1x128xf32>
    tpu.vector_store %arg9[%c0_40, %c0_41, %c0_42], %64 {strides = array<i32>} : memref<1x1x128xf32, #tpu.memory_space<vmem>>, vector<1x1x128xf32>,
    %c0_43 = arith.constant 0 : index
    %c0_44 = arith.constant 0 : index
    %65 = vector.load %arg5[%c0_43, %c0_44] : memref<1x128xf32, #tpu.memory_space<vmem>>, vector<1x128xf32>
    %66 = arith.mulf %61, %65 : vector<1x128xf32>
    %c0_45 = arith.constant 0 : index
    %c0_46 = arith.constant 0 : index
    %67 = vector.load %arg6[%c0_45, %c0_46] : memref<1x128xf32, #tpu.memory_space<vmem>>, vector<1x128xf32>
    %68 = arith.addf %66, %67 : vector<1x128xf32>
    %c0_47 = arith.constant 0 : index
    %c0_48 = arith.constant 0 : index
    %c0_49 = arith.constant 0 : index
    %69 = vector.load %arg10[%c0_47, %c0_48, %c0_49] : memref<1x1x128xf32, #tpu.memory_space<vmem>>, vector<1x1x128xf32>
    %70 = vector.shape_cast %69 : vector<1x1x128xf32> to vector<1x128xf32>
    %71 = vector.shape_cast %68 : vector<1x128xf32> to vector<1x1x128xf32>
    tpu.vector_store %arg10[%c0_47, %c0_48, %c0_49], %71 {strides = array<i32>} : memref<1x1x128xf32, #tpu.memory_space<vmem>>, vector<1x1x128xf32>,
    %cst_50 = arith.constant 0.000000e+00 : f32
    %72 = vector.broadcast %cst_50 : f32 to vector<288x128xf32>
    %73 = arith.maximumf %57, %72 : vector<288x128xf32>
    %cst_51 = arith.constant dense<0.000000e+00> : vector<128xf32>
    %74 = vector.multi_reduction <add>, %73, %cst_51 [0] : vector<288x128xf32> to vector<128xf32>
    %75 = vector.shape_cast %74 : vector<128xf32> to vector<1x128xf32>
    %cst_52 = arith.constant 3.906250e-03 : f32
    %76 = vector.broadcast %cst_52 : f32 to vector<1x128xf32>
    %77 = arith.mulf %75, %76 : vector<1x128xf32>
    %c0_53 = arith.constant 0 : index
    %c0_54 = arith.constant 0 : index
    %c0_55 = arith.constant 0 : index
    %78 = vector.load %arg8[%c0_53, %c0_54, %c0_55] : memref<1x1x128xf32, #tpu.memory_space<vmem>>, vector<1x1x128xf32>
    %79 = vector.shape_cast %78 : vector<1x1x128xf32> to vector<1x128xf32>
    %80 = vector.shape_cast %77 : vector<1x128xf32> to vector<1x1x128xf32>
    tpu.vector_store %arg8[%c0_53, %c0_54, %c0_55], %80 {strides = array<i32>} : memref<1x1x128xf32, #tpu.memory_space<vmem>>, vector<1x1x128xf32>,
    %cst_56 = arith.constant 0.000000e+00 : f32
    %81 = vector.broadcast %cst_56 : f32 to vector<19x128xf32>
    %cst_57 = arith.constant 0.000000e+00 : f32
    %82 = vector.broadcast %cst_57 : f32 to vector<29x128xf32>
    %83 = tpu.concatenate %81, %57, %82 in 0 : vector<19x128xf32>, vector<288x128xf32>, vector<29x128xf32> -> vector<336x128xf32>
    %84 = arith.truncf %83 : vector<336x128xf32> to vector<336x128xbf16>
    %c0_58 = arith.constant 0 : index
    %c0_59 = arith.constant 0 : index
    %c0_60 = arith.constant 0 : index
    %85 = vector.load %arg7[%c0_58, %c0_59, %c0_60] : memref<1x336x128xbf16, #tpu.memory_space<vmem>>, vector<1x336x128xbf16>
    %86 = vector.shape_cast %85 : vector<1x336x128xbf16> to vector<336x128xbf16>
    %87 = vector.shape_cast %84 : vector<336x128xbf16> to vector<1x336x128xbf16>
    tpu.vector_store %arg7[%c0_58, %c0_59, %c0_60], %87 {strides = array<i32>} : memref<1x336x128xbf16, #tpu.memory_space<vmem>>, vector<1x336x128xbf16>,
    return
  }
  func.func @transform_0(%arg0: i32) -> (i32, i32) {
    %c0_i32 = arith.constant 0 : i32
    %c0_i32_0 = arith.constant 0 : i32
    %c0_i32_1 = arith.constant 0 : i32
    return %c0_i32, %c0_i32_0 : i32, i32
  }
  func.func @transform_1(%arg0: i32) -> (i32, i32, i32) {
    %c0_i32 = arith.constant 0 : i32
    %c0_i32_0 = arith.constant 0 : i32
    %c0_i32_1 = arith.constant 0 : i32
    return %arg0, %c0_i32, %c0_i32_0 : i32, i32, i32
  }
  func.func @transform_2(%arg0: i32) -> (i32, i32, i32) {
    %c0_i32 = arith.constant 0 : i32
    %c0_i32_0 = arith.constant 0 : i32
    %c0_i32_1 = arith.constant 0 : i32
    %c0_i32_2 = arith.constant 0 : i32
    return %c0_i32, %c0_i32_0, %c0_i32_1 : i32, i32, i32
  }
  func.func @transform_3(%arg0: i32) -> (i32, i32) {
    %c0_i32 = arith.constant 0 : i32
    %c0_i32_0 = arith.constant 0 : i32
    %c0_i32_1 = arith.constant 0 : i32
    return %c0_i32, %c0_i32_0 : i32, i32
  }
  func.func @transform_4(%arg0: i32) -> (i32, i32) {
    %c0_i32 = arith.constant 0 : i32
    %c0_i32_0 = arith.constant 0 : i32
    %c0_i32_1 = arith.constant 0 : i32
    return %c0_i32, %c0_i32_0 : i32, i32
  }
  func.func @transform_5(%arg0: i32) -> (i32, i32) {
    %c0_i32 = arith.constant 0 : i32
    %c0_i32_0 = arith.constant 0 : i32
    %c0_i32_1 = arith.constant 0 : i32
    return %c0_i32, %c0_i32_0 : i32, i32
  }
  func.func @transform_6(%arg0: i32) -> (i32, i32, i32) {
    %c0_i32 = arith.constant 0 : i32
    %c0_i32_0 = arith.constant 0 : i32
    %c0_i32_1 = arith.constant 0 : i32
    return %arg0, %c0_i32, %c0_i32_0 : i32, i32, i32
  }
  func.func @transform_7(%arg0: i32) -> (i32, i32, i32) {
    %c0_i32 = arith.constant 0 : i32
    %c0_i32_0 = arith.constant 0 : i32
    %c0_i32_1 = arith.constant 0 : i32
    return %arg0, %c0_i32, %c0_i32_0 : i32, i32, i32
  }
  func.func @transform_8(%arg0: i32) -> (i32, i32, i32) {
    %c0_i32 = arith.constant 0 : i32
    %c0_i32_0 = arith.constant 0 : i32
    %c0_i32_1 = arith.constant 0 : i32
    return %arg0, %c0_i32, %c0_i32_0 : i32, i32, i32
  }
  func.func @transform_9(%arg0: i32) -> (i32, i32, i32) {
    %c0_i32 = arith.constant 0 : i32
    %c0_i32_0 = arith.constant 0 : i32
    %c0_i32_1 = arith.constant 0 : i32
    return %arg0, %c0_i32, %c0_i32_0 : i32, i32, i32
  }
}

</mosaic_0001>

<llo_original>
// kernel: tpu_custom_call.1
$region0: #{tpu_custom_call.1}
  #allocation0 [shape = 'u32[]', space=smem, size = 0x4, offset = 0x4, fixed_abs, tag = 'smem constant byte address 0x4 - core index']
  #allocation1 [shape = 'u32[72,128]{1,0:T(1,128)}', space=vmem, size = 0x9000, scoped, tag = 'internal scratch']
  %s0 = inlined_call_operand.vmem [shape: f32[288,1], index: 0, kind: input, shape index: {}]
  %s1 = inlined_call_operand.hbm [shape: bf16[2,336,128], index: 1, kind: input, shape index: {}]
  %s2 = inlined_call_operand.hbm [shape: bf16[9,128,128], index: 2, kind: input, shape index: {}]
  %s3 = inlined_call_operand.vmem [shape: f32[1,128], index: 3, kind: input, shape index: {}]
  %s4 = inlined_call_operand.vmem [shape: f32[1,128], index: 4, kind: input, shape index: {}]
  %s5 = inlined_call_operand.vmem [shape: f32[1,128], index: 5, kind: input, shape index: {}]
  %s6 = inlined_call_operand.hbm [shape: bf16[2,336,128], index: 6, kind: output, shape index: {0}]
  %s7 = inlined_call_operand.hbm [shape: f32[2,1,128], index: 7, kind: output, shape index: {1}]
  %s8 = inlined_call_operand.hbm [shape: f32[2,1,128], index: 8, kind: output, shape index: {2}]
  %s9 = inlined_call_operand.hbm [shape: f32[2,1,128], index: 9, kind: output, shape index: {3}]
  %10 = xla_tuple %s6, %s7, %s8, %s9
  %s11 = sld [smem:[#allocation0]]
  $region89: #{tpu_custom_call.1} parent=0
    _
  %s13 = ssub.s32 1, %s11
  %s14 = scalar_select 0, %s13, %s11
  $region1: #{tpu_custom_call.1} parent=0
    #allocation2 [shape = 'u8[172032]{0}', space=vmem, size = 0x2a000, scoped, tag = 'input window, operand 1']
    #allocation3 [shape = 's32[2]{0}', space=sflag, size = 0x8, scoped, tag = 'scoped memory for tpu_custom_call.1']
    #allocation4 [shape = 's32[2]{0}', space=sflag, size = 0x8, scoped, tag = 'scoped memory for tpu_custom_call.1']
    #allocation5 [shape = 'u8[294912]{0}', space=vmem, size = 0x48000, scoped, tag = 'input window, operand 2, single buffered']
    #allocation6 [shape = 's32[1]{0}', space=sflag, size = 0x4, scoped, tag = 'scoped memory for tpu_custom_call.1']
    #allocation7 [shape = 'u8[172032]{0}', space=vmem, size = 0x2a000, scoped, tag = 'output window, operand 0']
    #allocation8 [shape = 'u8[1024]{0}', space=vmem, size = 0x400, scoped, tag = 'output window, operand 1']
    #allocation9 [shape = 's32[2]{0}', space=sflag, size = 0x8, scoped, tag = 'scoped memory for tpu_custom_call.1']
    #allocation10 [shape = 'u8[1024]{0}', space=vmem, size = 0x400, scoped, tag = 'output window, operand 2']
    #allocation11 [shape = 'u8[1024]{0}', space=vmem, size = 0x400, scoped, tag = 'output window, operand 3']
    #allocation12 [shape = 's32[2]{0}', space=sflag, size = 0x8, scoped, tag = 'scoped memory for tpu_custom_call.1']
    %15 = vsyncpa [#allocation3], 0
    %s16 = scalar_lea.sflag [#allocation3], 1
    %17 = vsyncpa %s16, 0
    %18 = vsyncpa [#allocation6], 0
    %19 = vsyncpa [#allocation4], 0
    %s20 = scalar_lea.sflag [#allocation4], 1
    %21 = vsyncpa %s20, 0
    %22 = vsyncpa [#allocation9], 0
    %s23 = scalar_lea.sflag [#allocation9], 1
    %24 = vsyncpa %s23, 0
    %25 = vsyncpa [#allocation12], 0
    %s26 = scalar_lea.sflag [#allocation12], 1
    %27 = vsyncpa %s26, 0
    loop: start=0, step=1, limit=4
    $region2: #{tpu_custom_call.1} parent=1 // loop_pre_header
      _
    $region3: #{tpu_custom_call.1} parent=1 // loop_header
      %s29 = sphi 0, %s33
      %p30 = scmp.ge.s32.totalorder %s29, 4
      %s37 = sphi 0, %s37
      %s39 = sphi 0, %s37
      %s40 = sphi 0, %s39
      %s54 = sphi 0, %s40
      %s60 = sphi 0, %s62
      %s63 = sphi 0, %s60
      %s64 = sphi 0, %s63
      %s80 = sphi 0, %s64
      %s84 = sphi 0, %s84
      %s86 = sphi 0, %s84
      %s87 = sphi 0, %s86
      %s101 = sphi 0, %s87
      %s105 = sphi 0, %s105
      %s107 = sphi 0, %s105
      %s108 = sphi 0, %s107
      %s122 = sphi 0, %s108
      %s126 = sphi 0, %s126
      %s128 = sphi 0, %s126
      %s129 = sphi 0, %s128
      %s143 = sphi 0, %s129
      %s147 = sphi 0, %s147
      %s149 = sphi 0, %s147
      %s150 = sphi 0, %s149
      %s164 = sphi 0, %s150
      %s170 = sphi 0, %s172
      %s173 = sphi 0, %s170
      %s174 = sphi 0, %s173
      %s190 = sphi 0, %s174
      %s196 = sphi 0, %s198
      %s199 = sphi 0, %s196
      %s200 = sphi 0, %s199
      %s216 = sphi 0, %s200
      %s222 = sphi 0, %s224
      %s225 = sphi 0, %s222
      %s226 = sphi 0, %s225
      %s242 = sphi 0, %s226
      %s248 = sphi 0, %s250
      %s251 = sphi 0, %s248
      %s252 = sphi 0, %s251
      %s268 = sphi 0, %s252
    $region4: #{tpu_custom_call.1} parent=1 // loop_header_branch
      %32 = sbr.rel (%p30) target = $region8
    $region5: #{tpu_custom_call.1} parent=1 // loop_body
      %s34 = ssub.s32 %s29, 1
      %s35 = ssub.s32 %s29, 2
      %s36 = sadd.s32 %s29, 1
      %s38 = sadd.s32 %s37, 1
      %p41 = scmp.eq.s32.totalorder %s29, 1
      %p42 = scmp.ne.s32.totalorder %s37, %s39
      %p43 = scmp.eq.s32.totalorder %s29, 0
      %p44 = por %p42, %p43
      %p45 = scmp.ne.s32.totalorder %s37, %s39
      %p46 = scmp.eq.s32.totalorder %s34, 1
      %p47 = por %p45, %p46
      %p48 = scmp.ne.s32.totalorder %s39, %s40
      %p49 = scmp.eq.s32.totalorder %s34, 0
      %p50 = por %p48, %p49
      %p51 = scmp.ne.s32.totalorder %s39, %s40
      %p52 = scmp.eq.s32.totalorder %s35, 1
      %p53 = por %p51, %p52
      %p55 = scmp.ne.s32.totalorder %s40, %s54
      %p56 = scmp.eq.s32.totalorder %s35, 0
      %p57 = por %p55, %p56
      %s58 = ssub.s32 %s29, %s36
      %p59 = scmp.eq.s32.totalorder %s58, 0
      %s61 = sadd.s32 %s60, 1
      %s62 = scalar_select %p59, %s60, %s61
      %p65 = pneg %p59
      %p66 = scmp.eq.s32.totalorder %s29, 1
      %p67 = por %p65, %p66
      %p68 = scmp.ne.s32.totalorder %s60, %s63
      %p69 = scmp.eq.s32.totalorder %s29, 0
      %p70 = por %p68, %p69
      %p71 = scmp.ne.s32.totalorder %s60, %s63
      %p72 = scmp.eq.s32.totalorder %s34, 1
      %p73 = por %p71, %p72
      %p74 = scmp.ne.s32.totalorder %s63, %s64
      %p75 = scmp.eq.s32.totalorder %s34, 0
      %p76 = por %p74, %p75
      %p77 = scmp.ne.s32.totalorder %s63, %s64
      %p78 = scmp.eq.s32.totalorder %s35, 1
      %p79 = por %p77, %p78
      %p81 = scmp.ne.s32.totalorder %s64, %s80
      %p82 = scmp.eq.s32.totalorder %s35, 0
      %p83 = por %p81, %p82
      %s85 = sadd.s32 %s84, 1
      %p88 = scmp.eq.s32.totalorder %s29, 1
      %p89 = scmp.ne.s32.totalorder %s84, %s86
      %p90 = scmp.eq.s32.totalorder %s29, 0
      %p91 = por %p89, %p90
      %p92 = scmp.ne.s32.totalorder %s84, %s86
      %p93 = scmp.eq.s32.totalorder %s34, 1
      %p94 = por %p92, %p93
      %p95 = scmp.ne.s32.totalorder %s86, %s87
      %p96 = scmp.eq.s32.totalorder %s34, 0
      %p97 = por %p95, %p96
      %p98 = scmp.ne.s32.totalorder %s86, %s87
      %p99 = scmp.eq.s32.totalorder %s35, 1
      %p100 = por %p98, %p99
      %p102 = scmp.ne.s32.totalorder %s87, %s101
      %p103 = scmp.eq.s32.totalorder %s35, 0
      %p104 = por %p102, %p103
      %s106 = sadd.s32 %s105, 1
      %p109 = scmp.eq.s32.totalorder %s29, 1
      %p110 = scmp.ne.s32.totalorder %s105, %s107
      %p111 = scmp.eq.s32.totalorder %s29, 0
      %p112 = por %p110, %p111
      %p113 = scmp.ne.s32.totalorder %s105, %s107
      %p114 = scmp.eq.s32.totalorder %s34, 1
      %p115 = por %p113, %p114
      %p116 = scmp.ne.s32.totalorder %s107, %s108
      %p117 = scmp.eq.s32.totalorder %s34, 0
      %p118 = por %p116, %p117
      %p119 = scmp.ne.s32.totalorder %s107, %s108
      %p120 = scmp.eq.s32.totalorder %s35, 1
      %p121 = por %p119, %p120
      %p123 = scmp.ne.s32.totalorder %s108, %s122
      %p124 = scmp.eq.s32.totalorder %s35, 0
      %p125 = por %p123, %p124
      %s127 = sadd.s32 %s126, 1
      %p130 = scmp.eq.s32.totalorder %s29, 1
      %p131 = scmp.ne.s32.totalorder %s126, %s128
      %p132 = scmp.eq.s32.totalorder %s29, 0
      %p133 = por %p131, %p132
      %p134 = scmp.ne.s32.totalorder %s126, %s128
      %p135 = scmp.eq.s32.totalorder %s34, 1
      %p136 = por %p134, %p135
      %p137 = scmp.ne.s32.totalorder %s128, %s129
      %p138 = scmp.eq.s32.totalorder %s34, 0
      %p139 = por %p137, %p138
      %p140 = scmp.ne.s32.totalorder %s128, %s129
      %p141 = scmp.eq.s32.totalorder %s35, 1
      %p142 = por %p140, %p141
      %p144 = scmp.ne.s32.totalorder %s129, %s143
      %p145 = scmp.eq.s32.totalorder %s35, 0
      %p146 = por %p144, %p145
      %s148 = sadd.s32 %s147, 1
      %p151 = scmp.eq.s32.totalorder %s29, 1
      %p152 = scmp.ne.s32.totalorder %s147, %s149
      %p153 = scmp.eq.s32.totalorder %s29, 0
      %p154 = por %p152, %p153
      %p155 = scmp.ne.s32.totalorder %s147, %s149
      %p156 = scmp.eq.s32.totalorder %s34, 1
      %p157 = por %p155, %p156
      %p158 = scmp.ne.s32.totalorder %s149, %s150
      %p159 = scmp.eq.s32.totalorder %s34, 0
      %p160 = por %p158, %p159
      %p161 = scmp.ne.s32.totalorder %s149, %s150
      %p162 = scmp.eq.s32.totalorder %s35, 1
      %p163 = por %p161, %p162
      %p165 = scmp.ne.s32.totalorder %s150, %s164
      %p166 = scmp.eq.s32.totalorder %s35, 0
      %p167 = por %p165, %p166
      %s168 = ssub.s32 %s29, %s36
      %p169 = scmp.eq.s32.totalorder %s168, 0
      %s171 = sadd.s32 %s170, 1
      %s172 = scalar_select %p169, %s170, %s171
      %p175 = pneg %p169
      %p176 = scmp.eq.s32.totalorder %s29, 1
      %p177 = por %p175, %p176
      %p178 = scmp.ne.s32.totalorder %s170, %s173
      %p179 = scmp.eq.s32.totalorder %s29, 0
      %p180 = por %p178, %p179
      %p181 = scmp.ne.s32.totalorder %s170, %s173
      %p182 = scmp.eq.s32.totalorder %s34, 1
      %p183 = por %p181, %p182
      %p184 = scmp.ne.s32.totalorder %s173, %s174
      %p185 = scmp.eq.s32.totalorder %s34, 0
      %p186 = por %p184, %p185
      %p187 = scmp.ne.s32.totalorder %s173, %s174
      %p188 = scmp.eq.s32.totalorder %s35, 1
      %p189 = por %p187, %p188
      %p191 = scmp.ne.s32.totalorder %s174, %s190
      %p192 = scmp.eq.s32.totalorder %s35, 0
      %p193 = por %p191, %p192
      %s194 = ssub.s32 %s29, %s36
      %p195 = scmp.eq.s32.totalorder %s194, 0
      %s197 = sadd.s32 %s196, 1
      %s198 = scalar_select %p195, %s196, %s197
      %p201 = pneg %p195
      %p202 = scmp.eq.s32.totalorder %s29, 1
      %p203 = por %p201, %p202
      %p204 = scmp.ne.s32.totalorder %s196, %s199
      %p205 = scmp.eq.s32.totalorder %s29, 0
      %p206 = por %p204, %p205
      %p207 = scmp.ne.s32.totalorder %s196, %s199
      %p208 = scmp.eq.s32.totalorder %s34, 1
      %p209 = por %p207, %p208
      %p210 = scmp.ne.s32.totalorder %s199, %s200
      %p211 = scmp.eq.s32.totalorder %s34, 0
      %p212 = por %p210, %p211
      %p213 = scmp.ne.s32.totalorder %s199, %s200
      %p214 = scmp.eq.s32.totalorder %s35, 1
      %p215 = por %p213, %p214
      %p217 = scmp.ne.s32.totalorder %s200, %s216
      %p218 = scmp.eq.s32.totalorder %s35, 0
      %p219 = por %p217, %p218
      %s220 = ssub.s32 %s29, %s36
      %p221 = scmp.eq.s32.totalorder %s220, 0
      %s223 = sadd.s32 %s222, 1
      %s224 = scalar_select %p221, %s222, %s223
      %p227 = pneg %p221
      %p228 = scmp.eq.s32.totalorder %s29, 1
      %p229 = por %p227, %p228
      %p230 = scmp.ne.s32.totalorder %s222, %s225
      %p231 = scmp.eq.s32.totalorder %s29, 0
      %p232 = por %p230, %p231
      %p233 = scmp.ne.s32.totalorder %s222, %s225
      %p234 = scmp.eq.s32.totalorder %s34, 1
      %p235 = por %p233, %p234
      %p236 = scmp.ne.s32.totalorder %s225, %s226
      %p237 = scmp.eq.s32.totalorder %s34, 0
      %p238 = por %p236, %p237
      %p239 = scmp.ne.s32.totalorder %s225, %s226
      %p240 = scmp.eq.s32.totalorder %s35, 1
      %p241 = por %p239, %p240
      %p243 = scmp.ne.s32.totalorder %s226, %s242
      %p244 = scmp.eq.s32.totalorder %s35, 0
      %p245 = por %p243, %p244
      %s246 = ssub.s32 %s29, %s36
      %p247 = scmp.eq.s32.totalorder %s246, 0
      %s249 = sadd.s32 %s248, 1
      %s250 = scalar_select %p247, %s248, %s249
      %p253 = pneg %p247
      %p254 = scmp.eq.s32.totalorder %s29, 1
      %p255 = por %p253, %p254
      %p256 = scmp.ne.s32.totalorder %s248, %s251
      %p257 = scmp.eq.s32.totalorder %s29, 0
      %p258 = por %p256, %p257
      %p259 = scmp.ne.s32.totalorder %s248, %s251
      %p260 = scmp.eq.s32.totalorder %s34, 1
      %p261 = por %p259, %p260
      %p262 = scmp.ne.s32.totalorder %s251, %s252
      %p263 = scmp.eq.s32.totalorder %s34, 0
      %p264 = por %p262, %p263
      %p265 = scmp.ne.s32.totalorder %s251, %s252
      %p266 = scmp.eq.s32.totalorder %s35, 1
      %p267 = por %p265, %p266
      %p269 = scmp.ne.s32.totalorder %s252, %s268
      %p270 = scmp.eq.s32.totalorder %s35, 0
      %p271 = por %p269, %p270
      %p272 = scmp.le.s32.totalorder 1, %s29
      %p273 = scmp.lt.s32.totalorder %s29, 3
      %p274 = pnand %p272, %p273
      %p275 = pneg %p274
      // Predicated region
      $region9: #{tpu_custom_call.1} parent=5 // pred_check
        _
      $region10: #{tpu_custom_call.1} parent=5 // pred_check_branch
        %277 = sbr.rel (%p274) target = $region12
      $region11: #{tpu_custom_call.1} parent=5 // pred_region
        %s278 = ssub.s32 %s29, 1
        // Predicated region
        $region13: #{tpu_custom_call.1} parent=11 // pred_check
          %p279 = pneg %p50
        $region14: #{tpu_custom_call.1} parent=11 // pred_check_branch
          %281 = sbr.rel (%p279) target = $region16
        $region15: #{tpu_custom_call.1} parent=11 // pred_region
          _
        $region16: #{tpu_custom_call.1} parent=11 // pred_fallthru
          _
        // Predicated region
        $region17: #{tpu_custom_call.1} parent=11 // pred_check
          %p282 = pneg %p97
        $region18: #{tpu_custom_call.1} parent=11 // pred_check_branch
          %284 = sbr.rel (%p282) target = $region20
        $region19: #{tpu_custom_call.1} parent=11 // pred_region
          %286 = vsyncadd [#allocation6], 0
          %s287 = sshll.u32 %s2, 4
          %s288 = int_to_ptr.hbm [resolvable:$true] %s287
          %s289 = sshll.u32 [#allocation5], 4
          %s290 = int_to_ptr.vmem [resolvable:$true] %s289
          %295 = dma.hbm_to_vmem [thread:$0]  %s288, 9216, %s290, [#allocation6], 64, 64, 4
        $region20: #{tpu_custom_call.1} parent=11 // pred_fallthru
          _
        // Predicated region
        $region21: #{tpu_custom_call.1} parent=11 // pred_check
          %p296 = pneg %p118
        $region22: #{tpu_custom_call.1} parent=11 // pred_check_branch
          %298 = sbr.rel (%p296) target = $region24
        $region23: #{tpu_custom_call.1} parent=11 // pred_region
          _
        $region24: #{tpu_custom_call.1} parent=11 // pred_fallthru
          _
        // Predicated region
        $region25: #{tpu_custom_call.1} parent=11 // pred_check
          %p299 = pneg %p139
        $region26: #{tpu_custom_call.1} parent=11 // pred_check_branch
          %301 = sbr.rel (%p299) target = $region28
        $region27: #{tpu_custom_call.1} parent=11 // pred_region
          _
        $region28: #{tpu_custom_call.1} parent=11 // pred_fallthru
          _
        // Predicated region
        $region29: #{tpu_custom_call.1} parent=11 // pred_check
          %p302 = pneg %p160
        $region30: #{tpu_custom_call.1} parent=11 // pred_check_branch
          %304 = sbr.rel (%p302) target = $region32
        $region31: #{tpu_custom_call.1} parent=11 // pred_region
          _
        $region32: #{tpu_custom_call.1} parent=11 // pred_fallthru
          _
      $region12: #{tpu_custom_call.1} parent=5 // pred_fallthru
        _
      %p305 = scmp.lt.s32.totalorder %s29, 2
      // Predicated region
      $region33: #{tpu_custom_call.1} parent=5 // pred_check
        %p306 = pneg %p305
      $region34: #{tpu_custom_call.1} parent=5 // pred_check_branch
        %308 = sbr.rel (%p306) target = $region36
      $region35: #{tpu_custom_call.1} parent=5 // pred_region
        // Predicated region
        $region37: #{tpu_custom_call.1} parent=35 // pred_check
          %p309 = pneg %p70
        $region38: #{tpu_custom_call.1} parent=35 // pred_check_branch
          %311 = sbr.rel (%p309) target = $region40
        $region39: #{tpu_custom_call.1} parent=35 // pred_region
          %s312 = sand.u32 %s60, 1
          %s313 = scalar_lea.sflag [#allocation3], %s312
          %s314 = sand.u32 %s60, 1
          %s315 = smul.addr %s314, 168
          %s316 = scalar_lea.vmem [#allocation2], %s315
          %318 = vsyncadd %s313, 0
          %s319 = smul.addr %s29, 42
          %s320 = smul.addr %s319, 4
          %s321 = scalar_lea.hbm %s1, %s320
          %s322 = sshll.u32 %s321, 4
          %s323 = int_to_ptr.hbm [resolvable:$true] %s322
          %s324 = sshll.u32 %s316, 4
          %s325 = int_to_ptr.vmem [resolvable:$true] %s324
          %330 = dma.hbm_to_vmem [thread:$0]  %s323, 2688, %s325, %s313, 64, 64, 4
        $region40: #{tpu_custom_call.1} parent=35 // pred_fallthru
          _
      $region36: #{tpu_custom_call.1} parent=5 // pred_fallthru
        _
      %p331 = scmp.le.s32.totalorder 1, %s29
      %p332 = scmp.lt.s32.totalorder %s29, 3
      %p333 = pnand %p331, %p332
      %p334 = pneg %p333
      // Predicated region
      $region41: #{tpu_custom_call.1} parent=5 // pred_check
        _
      $region42: #{tpu_custom_call.1} parent=5 // pred_check_branch
        %336 = sbr.rel (%p333) target = $region44
      $region43: #{tpu_custom_call.1} parent=5 // pred_region
        %s337 = ssub.s32 %s29, 1
        %s338 = sand.u32 %s63, 1
        %s339 = scalar_lea.sflag [#allocation3], %s338
        %s340 = sand.u32 %s63, 1
        %s341 = smul.addr %s340, 168
        %s342 = scalar_lea.vmem [#allocation2], %s341
        // Predicated region
        $region45: #{tpu_custom_call.1} parent=43 // pred_check
          %p343 = pneg %p76
        $region46: #{tpu_custom_call.1} parent=43 // pred_check_branch
          %345 = sbr.rel (%p343) target = $region48
        $region47: #{tpu_custom_call.1} parent=43 // pred_region
          %347 = dma.done %s339, 2688
        $region48: #{tpu_custom_call.1} parent=43 // pred_fallthru
          _
        // Predicated region
        $region49: #{tpu_custom_call.1} parent=43 // pred_check
          %p348 = pneg %p97
        $region50: #{tpu_custom_call.1} parent=43 // pred_check_branch
          %350 = sbr.rel (%p348) target = $region52
        $region51: #{tpu_custom_call.1} parent=43 // pred_region
          %352 = dma.done [#allocation6], 9216
        $region52: #{tpu_custom_call.1} parent=43 // pred_fallthru
          _
        %p353 = pneg %p50
        %p354 = pneg %p47
        %s355 = sand.u32 %s63, 1
        %s356 = scalar_lea.sflag [#allocation3], %s355
        %s357 = sand.u32 %s63, 1
        %s358 = smul.addr %s357, 168
        %s359 = scalar_lea.vmem [#allocation2], %s358
        %p360 = pneg %p76
        %p361 = pneg %p73
        %p362 = pneg %p97
        %p363 = pneg %p94
        %p364 = pneg %p118
        %p365 = pneg %p115
        %p366 = pneg %p139
        %p367 = pneg %p136
        %p368 = pneg %p160
        %p369 = pneg %p157
        %p370 = pneg %p186
        %p371 = pneg %p183
        %s372 = sand.u32 %s173, 1
        %s373 = scalar_lea.sflag [#allocation4], %s372
        %s374 = sand.u32 %s173, 1
        %s375 = smul.addr %s374, 168
        %s376 = scalar_lea.vmem [#allocation7], %s375
        %p377 = pneg %p212
        %p378 = pneg %p209
        %s379 = sand.u32 %s34, 1
        %s380 = scalar_lea.sflag [#allocation9], %s379
        %s381 = sand.u32 %s199, 1
        %s382 = scalar_lea.vmem [#allocation8], %s381
        %p383 = pneg %p238
        %p384 = pneg %p235
        %s385 = sand.u32 %s34, 1
        %s386 = scalar_lea.sflag [#allocation9], %s385
        %s387 = sand.u32 %s225, 1
        %s388 = scalar_lea.vmem [#allocation10], %s387
        %p389 = pneg %p264
        %p390 = pneg %p261
        %s391 = sand.u32 %s251, 1
        %s392 = scalar_lea.sflag [#allocation12], %s391
        %s393 = sand.u32 %s251, 1
        %s394 = scalar_lea.vmem [#allocation11], %s393
        %v395 = vld [vmem:[%s342] sm:$0xf]
        %v396 = vld [vmem:[%s342 + $0x4] sm:$0xf]
        %v397 = vld [vmem:[%s342 + $0x8] sm:$0xf]
        %v398 = vld [vmem:[%s342 + $0xc] sm:$0xf]
        %v399 = vld [vmem:[%s342 + $0x10] sm:$0xf]
        %v400 = vld [vmem:[%s342 + $0x14] sm:$0xf]
        %v401 = vld [vmem:[%s342 + $0x18] sm:$0xf]
        %v402 = vld [vmem:[%s342 + $0x1c] sm:$0xf]
        %v403 = vld [vmem:[%s342 + $0x20] sm:$0xf]
        %v404 = vld [vmem:[%s342 + $0x24] sm:$0xf]
        %v405 = vld [vmem:[%s342 + $0x28] sm:$0xf]
        %v406 = vld [vmem:[%s342 + $0x2c] sm:$0xf]
        %v407 = vld [vmem:[%s342 + $0x30] sm:$0xf]
        %v408 = vld [vmem:[%s342 + $0x34] sm:$0xf]
        %v409 = vld [vmem:[%s342 + $0x38] sm:$0xf]
        %v410 = vld [vmem:[%s342 + $0x3c] sm:$0xf]
        %v411 = vld [vmem:[%s342 + $0x40] sm:$0xf]
        %v412 = vld [vmem:[%s342 + $0x44] sm:$0xf]
        %v413 = vld [vmem:[%s342 + $0x48] sm:$0xf]
        %v414 = vld [vmem:[%s342 + $0x4c] sm:$0xf]
        %v415 = vld [vmem:[%s342 + $0x50] sm:$0xf]
        %v416 = vld [vmem:[%s342 + $0x54] sm:$0xf]
        %v417 = vld [vmem:[%s342 + $0x58] sm:$0xf]
        %v418 = vld [vmem:[%s342 + $0x5c] sm:$0xf]
        %v419 = vld [vmem:[%s342 + $0x60] sm:$0xf]
        %v420 = vld [vmem:[%s342 + $0x64] sm:$0xf]
        %v421 = vld [vmem:[%s342 + $0x68] sm:$0xf]
        %v422 = vld [vmem:[%s342 + $0x6c] sm:$0xf]
        %v423 = vld [vmem:[%s342 + $0x70] sm:$0xf]
        %v424 = vld [vmem:[%s342 + $0x74] sm:$0xf]
        %v425 = vld [vmem:[%s342 + $0x78] sm:$0xf]
        %v426 = vld [vmem:[%s342 + $0x7c] sm:$0xf]
        %v427 = vld [vmem:[%s342 + $0x80] sm:$0xf]
        %v428 = vld [vmem:[%s342 + $0x84] sm:$0xf]
        %v429 = vld [vmem:[%s342 + $0x88] sm:$0xf]
        %v430 = vld [vmem:[%s342 + $0x8c] sm:$0xf]
        %v431 = vld [vmem:[%s342 + $0x90] sm:$0xf]
        %v432 = vld [vmem:[#allocation5] sm:$0xf]
        %v433 = vld [vmem:[#allocation5 + $0x4] sm:$0xf]
        %v434 = vld [vmem:[#allocation5 + $0x8] sm:$0xf]
        %v435 = vld [vmem:[#allocation5 + $0xc] sm:$0xf]
        %v436 = vld [vmem:[#allocation5 + $0x10] sm:$0xf]
        %v437 = vld [vmem:[#allocation5 + $0x14] sm:$0xf]
        %v438 = vld [vmem:[#allocation5 + $0x18] sm:$0xf]
        %v439 = vld [vmem:[#allocation5 + $0x1c] sm:$0xf]
        %v440 = vld [vmem:[#allocation5 + $0x20] sm:$0xf]
        %v441 = vld [vmem:[#allocation5 + $0x24] sm:$0xf]
        %v442 = vld [vmem:[#allocation5 + $0x28] sm:$0xf]
        %v443 = vld [vmem:[#allocation5 + $0x2c] sm:$0xf]
        %v444 = vld [vmem:[#allocation5 + $0x30] sm:$0xf]
        %v445 = vld [vmem:[#allocation5 + $0x34] sm:$0xf]
        %v446 = vld [vmem:[#allocation5 + $0x38] sm:$0xf]
        %v447 = vld [vmem:[#allocation5 + $0x3c] sm:$0xf]
        %v485 = vunpack.c.l.b16 %v395
        %v486 = vunpack.c.l.b16 %v396
        %v487 = vunpack.c.l.b16 %v397
        %v488 = vunpack.c.l.b16 %v398
        %v489 = vunpack.c.l.b16 %v399
        %v490 = vunpack.c.l.b16 %v400
        %v491 = vunpack.c.l.b16 %v401
        %v492 = vunpack.c.l.b16 %v402
        %v493 = vunpack.c.l.b16 %v403
        %v494 = vunpack.c.l.b16 %v404
        %v495 = vunpack.c.l.b16 %v405
        %v496 = vunpack.c.l.b16 %v406
        %v497 = vunpack.c.l.b16 %v407
        %v498 = vunpack.c.l.b16 %v408
        %v499 = vunpack.c.l.b16 %v409
        %v500 = vunpack.c.l.b16 %v410
        %v501 = vunpack.c.l.b16 %v411
        %v502 = vunpack.c.l.b16 %v412
        %v503 = vunpack.c.l.b16 %v413
        %v504 = vunpack.c.l.b16 %v414
        %v505 = vunpack.c.l.b16 %v415
        %v506 = vunpack.c.l.b16 %v416
        %v507 = vunpack.c.l.b16 %v417
        %v508 = vunpack.c.l.b16 %v418
        %v509 = vunpack.c.l.b16 %v419
        %v510 = vunpack.c.l.b16 %v420
        %v511 = vunpack.c.l.b16 %v421
        %v512 = vunpack.c.l.b16 %v422
        %v513 = vunpack.c.l.b16 %v423
        %v514 = vunpack.c.l.b16 %v424
        %v515 = vunpack.c.l.b16 %v425
        %v516 = vunpack.c.l.b16 %v426
        %v517 = vunpack.c.l.b16 %v427
        %v518 = vunpack.c.l.b16 %v428
        %v519 = vunpack.c.l.b16 %v429
        %v520 = vunpack.c.l.b16 %v430
        %v521 = vunpack.c.l.b16 %v431
        %v522 = vpack.c.b16 %v486, %v485
        %v523 = vpack.c.b16 %v488, %v487
        %v524 = vpack.c.b16 %v490, %v489
        %v525 = vpack.c.b16 %v492, %v491
        %v526 = vpack.c.b16 %v494, %v493
        %v527 = vpack.c.b16 %v496, %v495
        %v528 = vpack.c.b16 %v498, %v497
        %v529 = vpack.c.b16 %v500, %v499
        %v530 = vpack.c.b16 %v502, %v501
        %v531 = vpack.c.b16 %v504, %v503
        %v532 = vpack.c.b16 %v506, %v505
        %v533 = vpack.c.b16 %v508, %v507
        %v534 = vpack.c.b16 %v510, %v509
        %v535 = vpack.c.b16 %v512, %v511
        %v536 = vpack.c.b16 %v514, %v513
        %v537 = vpack.c.b16 %v516, %v515
        %v538 = vpack.c.b16 %v518, %v517
        %v539 = vpack.c.b16 %v520, %v519
        %v540 = vpack.c.b16 %v521, %v521
        %v576 = vunpack.c.l.b16 %v432
        %v577 = vunpack.c.l.b16 %v433
        %v578 = vunpack.c.l.b16 %v434
        %v579 = vunpack.c.l.b16 %v435
        %v580 = vunpack.c.l.b16 %v436
        %v581 = vunpack.c.l.b16 %v437
        %v582 = vunpack.c.l.b16 %v438
        %v583 = vunpack.c.l.b16 %v439
        %v584 = vunpack.c.l.b16 %v440
        %v585 = vunpack.c.l.b16 %v441
        %v586 = vunpack.c.l.b16 %v442
        %v587 = vunpack.c.l.b16 %v443
        %v588 = vunpack.c.l.b16 %v444
        %v589 = vunpack.c.l.b16 %v445
        %v590 = vunpack.c.l.b16 %v446
        %v591 = vunpack.c.l.b16 %v447
        %v592 = vpack.c.b16 %v577, %v576
        %v593 = vpack.c.b16 %v579, %v578
        %v594 = vpack.c.b16 %v581, %v580
        %v595 = vpack.c.b16 %v583, %v582
        %v596 = vpack.c.b16 %v585, %v584
        %v597 = vpack.c.b16 %v587, %v586
        %v598 = vpack.c.b16 %v589, %v588
        %v599 = vpack.c.b16 %v591, %v590
        %608 = vmatpush.bf16.msra.mxu0 %v599
        %609 = vmatpush.bf16.msra.mxu0 %v598
        %610 = vmatpush.bf16.msra.mxu0 %v597
        %611 = vmatpush.bf16.msra.mxu0 %v596
        %612 = vmatpush.bf16.msra.mxu0 %v595
        %613 = vmatpush.bf16.msra.mxu0 %v594
        %614 = vmatpush.bf16.msra.mxu0 %v593
        %615 = vmatpush.bf16.msra.mxu0 %v592
        %616 = vmatmul.bf16.gmra.mxu0 %v522
        %v617 = vpop.f32.mrf.mxu0
        %v618 = vadd.f32 0.0, %v617
        %v619 = vpop.f32.mrf.mxu0
        %v620 = vadd.f32 0.0, %v619
        %621 = vmatmul.bf16.gmra.mxu0 %v523
        %v622 = vpop.f32.mrf.mxu0
        %v623 = vadd.f32 0.0, %v622
        %v624 = vpop.f32.mrf.mxu0
        %v625 = vadd.f32 0.0, %v624
        %626 = vmatmul.bf16.gmra.mxu0 %v524
        %v627 = vpop.f32.mrf.mxu0
        %v628 = vadd.f32 0.0, %v627
        %v629 = vpop.f32.mrf.mxu0
        %v630 = vadd.f32 0.0, %v629
        %631 = vmatmul.bf16.gmra.mxu0 %v525
        %v632 = vpop.f32.mrf.mxu0
        %v633 = vadd.f32 0.0, %v632
        %v634 = vpop.f32.mrf.mxu0
        %v635 = vadd.f32 0.0, %v634
        %636 = vmatmul.bf16.gmra.mxu0 %v526
        %v637 = vpop.f32.mrf.mxu0
        %v638 = vadd.f32 0.0, %v637
        %v639 = vpop.f32.mrf.mxu0
        %v640 = vadd.f32 0.0, %v639
        %641 = vmatmul.bf16.gmra.mxu0 %v527
        %v642 = vpop.f32.mrf.mxu0
        %v643 = vadd.f32 0.0, %v642
        %v644 = vpop.f32.mrf.mxu0
        %v645 = vadd.f32 0.0, %v644
        %646 = vmatmul.bf16.gmra.mxu0 %v528
        %v647 = vpop.f32.mrf.mxu0
        %v648 = vadd.f32 0.0, %v647
        %v649 = vpop.f32.mrf.mxu0
        %v650 = vadd.f32 0.0, %v649
        %651 = vmatmul.bf16.gmra.mxu0 %v529
        %v652 = vpop.f32.mrf.mxu0
        %v653 = vadd.f32 0.0, %v652
        %v654 = vpop.f32.mrf.mxu0
        %v655 = vadd.f32 0.0, %v654
        %656 = vmatmul.bf16.gmra.mxu0 %v530
        %v657 = vpop.f32.mrf.mxu0
        %v658 = vadd.f32 0.0, %v657
        %v659 = vpop.f32.mrf.mxu0
        %v660 = vadd.f32 0.0, %v659
        %661 = vmatmul.bf16.gmra.mxu0 %v531
        %v662 = vpop.f32.mrf.mxu0
        %v663 = vadd.f32 0.0, %v662
        %v664 = vpop.f32.mrf.mxu0
        %v665 = vadd.f32 0.0, %v664
        %666 = vmatmul.bf16.gmra.mxu0 %v532
        %v667 = vpop.f32.mrf.mxu0
        %v668 = vadd.f32 0.0, %v667
        %v669 = vpop.f32.mrf.mxu0
        %v670 = vadd.f32 0.0, %v669
        %671 = vmatmul.bf16.gmra.mxu0 %v533
        %v672 = vpop.f32.mrf.mxu0
        %v673 = vadd.f32 0.0, %v672
        %v674 = vpop.f32.mrf.mxu0
        %v675 = vadd.f32 0.0, %v674
        %676 = vmatmul.bf16.gmra.mxu0 %v534
        %v677 = vpop.f32.mrf.mxu0
        %v678 = vadd.f32 0.0, %v677
        %v679 = vpop.f32.mrf.mxu0
        %v680 = vadd.f32 0.0, %v679
        %681 = vmatmul.bf16.gmra.mxu0 %v535
        %v682 = vpop.f32.mrf.mxu0
        %v683 = vadd.f32 0.0, %v682
        %v684 = vpop.f32.mrf.mxu0
        %v685 = vadd.f32 0.0, %v684
        %686 = vmatmul.bf16.gmra.mxu0 %v536
        %v687 = vpop.f32.mrf.mxu0
        %v688 = vadd.f32 0.0, %v687
        %v689 = vpop.f32.mrf.mxu0
        %v690 = vadd.f32 0.0, %v689
        %691 = vmatmul.bf16.gmra.mxu0 %v537
        %v692 = vpop.f32.mrf.mxu0
        %v693 = vadd.f32 0.0, %v692
        %v694 = vpop.f32.mrf.mxu0
        %v695 = vadd.f32 0.0, %v694
        %696 = vmatmul.bf16.gmra.mxu0 %v538
        %v697 = vpop.f32.mrf.mxu0
        %v698 = vadd.f32 0.0, %v697
        %v699 = vpop.f32.mrf.mxu0
        %v700 = vadd.f32 0.0, %v699
        %701 = vmatmul.bf16.gmra.mxu0 %v539
        %v702 = vpop.f32.mrf.mxu0
        %v703 = vadd.f32 0.0, %v702
        %v704 = vpop.f32.mrf.mxu0
        %v705 = vadd.f32 0.0, %v704
        %706 = vmatmul.bf16.gmra.mxu0 %v540
        %v707 = vpop.f32.mrf.mxu0
        %v708 = vpop.f32.mrf.mxu0
        %709 = vdwg.mxu0
        %v710 = vadd.f32 %v618, 0.0
        %v711 = vadd.f32 %v620, 0.0
        %v712 = vadd.f32 %v623, 0.0
        %v713 = vadd.f32 %v625, 0.0
        %v714 = vadd.f32 %v628, 0.0
        %v715 = vadd.f32 %v630, 0.0
        %v716 = vadd.f32 %v633, 0.0
        %v717 = vadd.f32 %v635, 0.0
        %v718 = vadd.f32 %v638, 0.0
        %v719 = vadd.f32 %v640, 0.0
        %v720 = vadd.f32 %v643, 0.0
        %v721 = vadd.f32 %v645, 0.0
        %v722 = vadd.f32 %v648, 0.0
        %v723 = vadd.f32 %v650, 0.0
        %v724 = vadd.f32 %v653, 0.0
        %v725 = vadd.f32 %v655, 0.0
        %v726 = vadd.f32 %v658, 0.0
        %v727 = vadd.f32 %v660, 0.0
        %v728 = vadd.f32 %v663, 0.0
        %v729 = vadd.f32 %v665, 0.0
        %v730 = vadd.f32 %v668, 0.0
        %v731 = vadd.f32 %v670, 0.0
        %v732 = vadd.f32 %v673, 0.0
        %v733 = vadd.f32 %v675, 0.0
        %v734 = vadd.f32 %v678, 0.0
        %v735 = vadd.f32 %v680, 0.0
        %v736 = vadd.f32 %v683, 0.0
        %v737 = vadd.f32 %v685, 0.0
        %v738 = vadd.f32 %v688, 0.0
        %v739 = vadd.f32 %v690, 0.0
        %v740 = vadd.f32 %v693, 0.0
        %v741 = vadd.f32 %v695, 0.0
        %v742 = vadd.f32 %v698, 0.0
        %v743 = vadd.f32 %v700, 0.0
        %v744 = vadd.f32 %v703, 0.0
        %v745 = vadd.f32 %v705, 0.0
        %s746 = scalar_lea.vmem [#allocation5], 64
        %v747 = vld [vmem:[%s746] sm:$0xf]
        %v748 = vld [vmem:[%s746 + $0x4] sm:$0xf]
        %v749 = vld [vmem:[%s746 + $0x8] sm:$0xf]
        %v750 = vld [vmem:[%s746 + $0xc] sm:$0xf]
        %v751 = vld [vmem:[%s746 + $0x10] sm:$0xf]
        %v752 = vld [vmem:[%s746 + $0x14] sm:$0xf]
        %v753 = vld [vmem:[%s746 + $0x18] sm:$0xf]
        %v754 = vld [vmem:[%s746 + $0x1c] sm:$0xf]
        %v755 = vld [vmem:[%s746 + $0x20] sm:$0xf]
        %v756 = vld [vmem:[%s746 + $0x24] sm:$0xf]
        %v757 = vld [vmem:[%s746 + $0x28] sm:$0xf]
        %v758 = vld [vmem:[%s746 + $0x2c] sm:$0xf]
        %v759 = vld [vmem:[%s746 + $0x30] sm:$0xf]
        %v760 = vld [vmem:[%s746 + $0x34] sm:$0xf]
        %v761 = vld [vmem:[%s746 + $0x38] sm:$0xf]
        %v762 = vld [vmem:[%s746 + $0x3c] sm:$0xf]
        %v779 = vunpack.c.l.b16 %v747
        %v780 = vunpack.c.l.b16 %v748
        %v781 = vunpack.c.l.b16 %v749
        %v782 = vunpack.c.l.b16 %v750
        %v783 = vunpack.c.l.b16 %v751
        %v784 = vunpack.c.l.b16 %v752
        %v785 = vunpack.c.l.b16 %v753
        %v786 = vunpack.c.l.b16 %v754
        %v787 = vunpack.c.l.b16 %v755
        %v788 = vunpack.c.l.b16 %v756
        %v789 = vunpack.c.l.b16 %v757
        %v790 = vunpack.c.l.b16 %v758
        %v791 = vunpack.c.l.b16 %v759
        %v792 = vunpack.c.l.b16 %v760
        %v793 = vunpack.c.l.b16 %v761
        %v794 = vunpack.c.l.b16 %v762
        %v795 = vpack.c.b16 %v780, %v779
        %v796 = vpack.c.b16 %v782, %v781
        %v797 = vpack.c.b16 %v784, %v783
        %v798 = vpack.c.b16 %v786, %v785
        %v799 = vpack.c.b16 %v788, %v787
        %v800 = vpack.c.b16 %v790, %v789
        %v801 = vpack.c.b16 %v792, %v791
        %v802 = vpack.c.b16 %v794, %v793
        %811 = vmatpush.bf16.msra.mxu0 %v802
        %812 = vmatpush.bf16.msra.mxu0 %v801
        %813 = vmatpush.bf16.msra.mxu0 %v800
        %814 = vmatpush.bf16.msra.mxu0 %v799
        %815 = vmatpush.bf16.msra.mxu0 %v798
        %816 = vmatpush.bf16.msra.mxu0 %v797
        %817 = vmatpush.bf16.msra.mxu0 %v796
        %818 = vmatpush.bf16.msra.mxu0 %v795
        %819 = vmatmul.bf16.gmra.mxu0 %v522
        %v820 = vpop.f32.mrf.mxu0
        %v821 = vadd.f32 0.0, %v820
        %v822 = vpop.f32.mrf.mxu0
        %v823 = vadd.f32 0.0, %v822
        %824 = vmatmul.bf16.gmra.mxu0 %v523
        %v825 = vpop.f32.mrf.mxu0
        %v826 = vadd.f32 0.0, %v825
        %v827 = vpop.f32.mrf.mxu0
        %v828 = vadd.f32 0.0, %v827
        %829 = vmatmul.bf16.gmra.mxu0 %v524
        %v830 = vpop.f32.mrf.mxu0
        %v831 = vadd.f32 0.0, %v830
        %v832 = vpop.f32.mrf.mxu0
        %v833 = vadd.f32 0.0, %v832
        %834 = vmatmul.bf16.gmra.mxu0 %v525
        %v835 = vpop.f32.mrf.mxu0
        %v836 = vadd.f32 0.0, %v835
        %v837 = vpop.f32.mrf.mxu0
        %v838 = vadd.f32 0.0, %v837
        %839 = vmatmul.bf16.gmra.mxu0 %v526
        %v840 = vpop.f32.mrf.mxu0
        %v841 = vadd.f32 0.0, %v840
        %v842 = vpop.f32.mrf.mxu0
        %v843 = vadd.f32 0.0, %v842
        %844 = vmatmul.bf16.gmra.mxu0 %v527
        %v845 = vpop.f32.mrf.mxu0
        %v846 = vadd.f32 0.0, %v845
        %v847 = vpop.f32.mrf.mxu0
        %v848 = vadd.f32 0.0, %v847
        %849 = vmatmul.bf16.gmra.mxu0 %v528
        %v850 = vpop.f32.mrf.mxu0
        %v851 = vadd.f32 0.0, %v850
        %v852 = vpop.f32.mrf.mxu0
        %v853 = vadd.f32 0.0, %v852
        %854 = vmatmul.bf16.gmra.mxu0 %v529
        %v855 = vpop.f32.mrf.mxu0
        %v856 = vadd.f32 0.0, %v855
        %v857 = vpop.f32.mrf.mxu0
        %v858 = vadd.f32 0.0, %v857
        %859 = vmatmul.bf16.gmra.mxu0 %v530
        %v860 = vpop.f32.mrf.mxu0
        %v861 = vadd.f32 0.0, %v860
        %v862 = vpop.f32.mrf.mxu0
        %v863 = vadd.f32 0.0, %v862
        %864 = vmatmul.bf16.gmra.mxu0 %v531
        %v865 = vpop.f32.mrf.mxu0
        %v866 = vadd.f32 0.0, %v865
        %v867 = vpop.f32.mrf.mxu0
        %v868 = vadd.f32 0.0, %v867
        %869 = vmatmul.bf16.gmra.mxu0 %v532
        %v870 = vpop.f32.mrf.mxu0
        %v871 = vadd.f32 0.0, %v870
        %v872 = vpop.f32.mrf.mxu0
        %v873 = vadd.f32 0.0, %v872
        %874 = vmatmul.bf16.gmra.mxu0 %v533
        %v875 = vpop.f32.mrf.mxu0
        %v876 = vadd.f32 0.0, %v875
        %v877 = vpop.f32.mrf.mxu0
        %v878 = vadd.f32 0.0, %v877
        %879 = vmatmul.bf16.gmra.mxu0 %v534
        %v880 = vpop.f32.mrf.mxu0
        %v881 = vadd.f32 0.0, %v880
        %v882 = vpop.f32.mrf.mxu0
        %v883 = vadd.f32 0.0, %v882
        %884 = vmatmul.bf16.gmra.mxu0 %v535
        %v885 = vpop.f32.mrf.mxu0
        %v886 = vadd.f32 0.0, %v885
        %v887 = vpop.f32.mrf.mxu0
        %v888 = vadd.f32 0.0, %v887
        %889 = vmatmul.bf16.gmra.mxu0 %v536
        %v890 = vpop.f32.mrf.mxu0
        %v891 = vadd.f32 0.0, %v890
        %v892 = vpop.f32.mrf.mxu0
        %v893 = vadd.f32 0.0, %v892
        %894 = vmatmul.bf16.gmra.mxu0 %v537
        %v895 = vpop.f32.mrf.mxu0
        %v896 = vadd.f32 0.0, %v895
        %v897 = vpop.f32.mrf.mxu0
        %v898 = vadd.f32 0.0, %v897
        %899 = vmatmul.bf16.gmra.mxu0 %v538
        %v900 = vpop.f32.mrf.mxu0
        %v901 = vadd.f32 0.0, %v900
        %v902 = vpop.f32.mrf.mxu0
        %v903 = vadd.f32 0.0, %v902
        %904 = vmatmul.bf16.gmra.mxu0 %v539
        %v905 = vpop.f32.mrf.mxu0
        %v906 = vadd.f32 0.0, %v905
        %v907 = vpop.f32.mrf.mxu0
        %v908 = vadd.f32 0.0, %v907
        %909 = vmatmul.bf16.gmra.mxu0 %v540
        %v910 = vpop.f32.mrf.mxu0
        %v911 = vadd.f32 0.0, %v910
        %v912 = vpop.f32.mrf.mxu0
        %913 = vdwg.mxu0
        %vm951 = vcmask 1046528
        %v952 = vrot.slane %v821, 1
        %v953 = vrot.slane %v823, 1
        %v954 = vsel %vm951, %v952, %v953
        %v955 = vrot.slane %v826, 1
        %v956 = vsel %vm951, %v953, %v955
        %v957 = vrot.slane %v828, 1
        %v958 = vsel %vm951, %v955, %v957
        %v959 = vrot.slane %v831, 1
        %v960 = vsel %vm951, %v957, %v959
        %v961 = vrot.slane %v833, 1
        %v962 = vsel %vm951, %v959, %v961
        %v963 = vrot.slane %v836, 1
        %v964 = vsel %vm951, %v961, %v963
        %v965 = vrot.slane %v838, 1
        %v966 = vsel %vm951, %v963, %v965
        %v967 = vrot.slane %v841, 1
        %v968 = vsel %vm951, %v965, %v967
        %v969 = vrot.slane %v843, 1
        %v970 = vsel %vm951, %v967, %v969
        %v971 = vrot.slane %v846, 1
        %v972 = vsel %vm951, %v969, %v971
        %v973 = vrot.slane %v848, 1
        %v974 = vsel %vm951, %v971, %v973
        %v975 = vrot.slane %v851, 1
        %v976 = vsel %vm951, %v973, %v975
        %v977 = vrot.slane %v853, 1
        %v978 = vsel %vm951, %v975, %v977
        %v979 = vrot.slane %v856, 1
        %v980 = vsel %vm951, %v977, %v979
        %v981 = vrot.slane %v858, 1
        %v982 = vsel %vm951, %v979, %v981
        %v983 = vrot.slane %v861, 1
        %v984 = vsel %vm951, %v981, %v983
        %v985 = vrot.slane %v863, 1
        %v986 = vsel %vm951, %v983, %v985
        %v987 = vrot.slane %v866, 1
        %v988 = vsel %vm951, %v985, %v987
        %v989 = vrot.slane %v868, 1
        %v990 = vsel %vm951, %v987, %v989
        %v991 = vrot.slane %v871, 1
        %v992 = vsel %vm951, %v989, %v991
        %v993 = vrot.slane %v873, 1
        %v994 = vsel %vm951, %v991, %v993
        %v995 = vrot.slane %v876, 1
        %v996 = vsel %vm951, %v993, %v995
        %v997 = vrot.slane %v878, 1
        %v998 = vsel %vm951, %v995, %v997
        %v999 = vrot.slane %v881, 1
        %v1000 = vsel %vm951, %v997, %v999
        %v1001 = vrot.slane %v883, 1
        %v1002 = vsel %vm951, %v999, %v1001
        %v1003 = vrot.slane %v886, 1
        %v1004 = vsel %vm951, %v1001, %v1003
        %v1005 = vrot.slane %v888, 1
        %v1006 = vsel %vm951, %v1003, %v1005
        %v1007 = vrot.slane %v891, 1
        %v1008 = vsel %vm951, %v1005, %v1007
        %v1009 = vrot.slane %v893, 1
        %v1010 = vsel %vm951, %v1007, %v1009
        %v1011 = vrot.slane %v896, 1
        %v1012 = vsel %vm951, %v1009, %v1011
        %v1013 = vrot.slane %v898, 1
        %v1014 = vsel %vm951, %v1011, %v1013
        %v1015 = vrot.slane %v901, 1
        %v1016 = vsel %vm951, %v1013, %v1015
        %v1017 = vrot.slane %v903, 1
        %v1018 = vsel %vm951, %v1015, %v1017
        %v1019 = vrot.slane %v906, 1
        %v1020 = vsel %vm951, %v1017, %v1019
        %v1021 = vrot.slane %v908, 1
        %v1022 = vsel %vm951, %v1019, %v1021
        %v1023 = vrot.slane %v911, 1
        %v1024 = vsel %vm951, %v1021, %v1023
        %v1061 = vadd.f32 %v710, %v954
        %v1062 = vadd.f32 %v711, %v956
        %v1063 = vadd.f32 %v712, %v958
        %v1064 = vadd.f32 %v713, %v960
        %v1065 = vadd.f32 %v714, %v962
        %v1066 = vadd.f32 %v715, %v964
        %v1067 = vadd.f32 %v716, %v966
        %v1068 = vadd.f32 %v717, %v968
        %v1069 = vadd.f32 %v718, %v970
        %v1070 = vadd.f32 %v719, %v972
        %v1071 = vadd.f32 %v720, %v974
        %v1072 = vadd.f32 %v721, %v976
        %v1073 = vadd.f32 %v722, %v978
        %v1074 = vadd.f32 %v723, %v980
        %v1075 = vadd.f32 %v724, %v982
        %v1076 = vadd.f32 %v725, %v984
        %v1077 = vadd.f32 %v726, %v986
        %v1078 = vadd.f32 %v727, %v988
        %v1079 = vadd.f32 %v728, %v990
        %v1080 = vadd.f32 %v729, %v992
        %v1081 = vadd.f32 %v730, %v994
        %v1082 = vadd.f32 %v731, %v996
        %v1083 = vadd.f32 %v732, %v998
        %v1084 = vadd.f32 %v733, %v1000
        %v1085 = vadd.f32 %v734, %v1002
        %v1086 = vadd.f32 %v735, %v1004
        %v1087 = vadd.f32 %v736, %v1006
        %v1088 = vadd.f32 %v737, %v1008
        %v1089 = vadd.f32 %v738, %v1010
        %v1090 = vadd.f32 %v739, %v1012
        %v1091 = vadd.f32 %v740, %v1014
        %v1092 = vadd.f32 %v741, %v1016
        %v1093 = vadd.f32 %v742, %v1018
        %v1094 = vadd.f32 %v743, %v1020
        %v1095 = vadd.f32 %v744, %v1022
        %v1096 = vadd.f32 %v745, %v1024
        %s1097 = scalar_lea.vmem [#allocation5], 128
        %v1098 = vld [vmem:[%s1097] sm:$0xf]
        %v1099 = vld [vmem:[%s1097 + $0x4] sm:$0xf]
        %v1100 = vld [vmem:[%s1097 + $0x8] sm:$0xf]
        %v1101 = vld [vmem:[%s1097 + $0xc] sm:$0xf]
        %v1102 = vld [vmem:[%s1097 + $0x10] sm:$0xf]
        %v1103 = vld [vmem:[%s1097 + $0x14] sm:$0xf]
        %v1104 = vld [vmem:[%s1097 + $0x18] sm:$0xf]
        %v1105 = vld [vmem:[%s1097 + $0x1c] sm:$0xf]
        %v1106 = vld [vmem:[%s1097 + $0x20] sm:$0xf]
        %v1107 = vld [vmem:[%s1097 + $0x24] sm:$0xf]
        %v1108 = vld [vmem:[%s1097 + $0x28] sm:$0xf]
        %v1109 = vld [vmem:[%s1097 + $0x2c] sm:$0xf]
        %v1110 = vld [vmem:[%s1097 + $0x30] sm:$0xf]
        %v1111 = vld [vmem:[%s1097 + $0x34] sm:$0xf]
        %v1112 = vld [vmem:[%s1097 + $0x38] sm:$0xf]
        %v1113 = vld [vmem:[%s1097 + $0x3c] sm:$0xf]
        %v1130 = vunpack.c.l.b16 %v1098
        %v1131 = vunpack.c.l.b16 %v1099
        %v1132 = vunpack.c.l.b16 %v1100
        %v1133 = vunpack.c.l.b16 %v1101
        %v1134 = vunpack.c.l.b16 %v1102
        %v1135 = vunpack.c.l.b16 %v1103
        %v1136 = vunpack.c.l.b16 %v1104
        %v1137 = vunpack.c.l.b16 %v1105
        %v1138 = vunpack.c.l.b16 %v1106
        %v1139 = vunpack.c.l.b16 %v1107
        %v1140 = vunpack.c.l.b16 %v1108
        %v1141 = vunpack.c.l.b16 %v1109
        %v1142 = vunpack.c.l.b16 %v1110
        %v1143 = vunpack.c.l.b16 %v1111
        %v1144 = vunpack.c.l.b16 %v1112
        %v1145 = vunpack.c.l.b16 %v1113
        %v1146 = vpack.c.b16 %v1131, %v1130
        %v1147 = vpack.c.b16 %v1133, %v1132
        %v1148 = vpack.c.b16 %v1135, %v1134
        %v1149 = vpack.c.b16 %v1137, %v1136
        %v1150 = vpack.c.b16 %v1139, %v1138
        %v1151 = vpack.c.b16 %v1141, %v1140
        %v1152 = vpack.c.b16 %v1143, %v1142
        %v1153 = vpack.c.b16 %v1145, %v1144
        %1162 = vmatpush.bf16.msra.mxu0 %v1153
        %1163 = vmatpush.bf16.msra.mxu0 %v1152
        %1164 = vmatpush.bf16.msra.mxu0 %v1151
        %1165 = vmatpush.bf16.msra.mxu0 %v1150
        %1166 = vmatpush.bf16.msra.mxu0 %v1149
        %1167 = vmatpush.bf16.msra.mxu0 %v1148
        %1168 = vmatpush.bf16.msra.mxu0 %v1147
        %1169 = vmatpush.bf16.msra.mxu0 %v1146
        %1170 = vmatmul.bf16.gmra.mxu0 %v522
        %v1171 = vpop.f32.mrf.mxu0
        %v1172 = vadd.f32 0.0, %v1171
        %v1173 = vpop.f32.mrf.mxu0
        %v1174 = vadd.f32 0.0, %v1173
        %1175 = vmatmul.bf16.gmra.mxu0 %v523
        %v1176 = vpop.f32.mrf.mxu0
        %v1177 = vadd.f32 0.0, %v1176
        %v1178 = vpop.f32.mrf.mxu0
        %v1179 = vadd.f32 0.0, %v1178
        %1180 = vmatmul.bf16.gmra.mxu0 %v524
        %v1181 = vpop.f32.mrf.mxu0
        %v1182 = vadd.f32 0.0, %v1181
        %v1183 = vpop.f32.mrf.mxu0
        %v1184 = vadd.f32 0.0, %v1183
        %1185 = vmatmul.bf16.gmra.mxu0 %v525
        %v1186 = vpop.f32.mrf.mxu0
        %v1187 = vadd.f32 0.0, %v1186
        %v1188 = vpop.f32.mrf.mxu0
        %v1189 = vadd.f32 0.0, %v1188
        %1190 = vmatmul.bf16.gmra.mxu0 %v526
        %v1191 = vpop.f32.mrf.mxu0
        %v1192 = vadd.f32 0.0, %v1191
        %v1193 = vpop.f32.mrf.mxu0
        %v1194 = vadd.f32 0.0, %v1193
        %1195 = vmatmul.bf16.gmra.mxu0 %v527
        %v1196 = vpop.f32.mrf.mxu0
        %v1197 = vadd.f32 0.0, %v1196
        %v1198 = vpop.f32.mrf.mxu0
        %v1199 = vadd.f32 0.0, %v1198
        %1200 = vmatmul.bf16.gmra.mxu0 %v528
        %v1201 = vpop.f32.mrf.mxu0
        %v1202 = vadd.f32 0.0, %v1201
        %v1203 = vpop.f32.mrf.mxu0
        %v1204 = vadd.f32 0.0, %v1203
        %1205 = vmatmul.bf16.gmra.mxu0 %v529
        %v1206 = vpop.f32.mrf.mxu0
        %v1207 = vadd.f32 0.0, %v1206
        %v1208 = vpop.f32.mrf.mxu0
        %v1209 = vadd.f32 0.0, %v1208
        %1210 = vmatmul.bf16.gmra.mxu0 %v530
        %v1211 = vpop.f32.mrf.mxu0
        %v1212 = vadd.f32 0.0, %v1211
        %v1213 = vpop.f32.mrf.mxu0
        %v1214 = vadd.f32 0.0, %v1213
        %1215 = vmatmul.bf16.gmra.mxu0 %v531
        %v1216 = vpop.f32.mrf.mxu0
        %v1217 = vadd.f32 0.0, %v1216
        %v1218 = vpop.f32.mrf.mxu0
        %v1219 = vadd.f32 0.0, %v1218
        %1220 = vmatmul.bf16.gmra.mxu0 %v532
        %v1221 = vpop.f32.mrf.mxu0
        %v1222 = vadd.f32 0.0, %v1221
        %v1223 = vpop.f32.mrf.mxu0
        %v1224 = vadd.f32 0.0, %v1223
        %1225 = vmatmul.bf16.gmra.mxu0 %v533
        %v1226 = vpop.f32.mrf.mxu0
        %v1227 = vadd.f32 0.0, %v1226
        %v1228 = vpop.f32.mrf.mxu0
        %v1229 = vadd.f32 0.0, %v1228
        %1230 = vmatmul.bf16.gmra.mxu0 %v534
        %v1231 = vpop.f32.mrf.mxu0
        %v1232 = vadd.f32 0.0, %v1231
        %v1233 = vpop.f32.mrf.mxu0
        %v1234 = vadd.f32 0.0, %v1233
        %1235 = vmatmul.bf16.gmra.mxu0 %v535
        %v1236 = vpop.f32.mrf.mxu0
        %v1237 = vadd.f32 0.0, %v1236
        %v1238 = vpop.f32.mrf.mxu0
        %v1239 = vadd.f32 0.0, %v1238
        %1240 = vmatmul.bf16.gmra.mxu0 %v536
        %v1241 = vpop.f32.mrf.mxu0
        %v1242 = vadd.f32 0.0, %v1241
        %v1243 = vpop.f32.mrf.mxu0
        %v1244 = vadd.f32 0.0, %v1243
        %1245 = vmatmul.bf16.gmra.mxu0 %v537
        %v1246 = vpop.f32.mrf.mxu0
        %v1247 = vadd.f32 0.0, %v1246
        %v1248 = vpop.f32.mrf.mxu0
        %v1249 = vadd.f32 0.0, %v1248
        %1250 = vmatmul.bf16.gmra.mxu0 %v538
        %v1251 = vpop.f32.mrf.mxu0
        %v1252 = vadd.f32 0.0, %v1251
        %v1253 = vpop.f32.mrf.mxu0
        %v1254 = vadd.f32 0.0, %v1253
        %1255 = vmatmul.bf16.gmra.mxu0 %v539
        %v1256 = vpop.f32.mrf.mxu0
        %v1257 = vadd.f32 0.0, %v1256
        %v1258 = vpop.f32.mrf.mxu0
        %v1259 = vadd.f32 0.0, %v1258
        %1260 = vmatmul.bf16.gmra.mxu0 %v540
        %v1261 = vpop.f32.mrf.mxu0
        %v1262 = vadd.f32 0.0, %v1261
        %v1263 = vpop.f32.mrf.mxu0
        %1264 = vdwg.mxu0
        %vm1302 = vcmask 1045504
        %v1303 = vrot.slane %v1172, 2
        %v1304 = vrot.slane %v1174, 2
        %v1305 = vsel %vm1302, %v1303, %v1304
        %v1306 = vrot.slane %v1177, 2
        %v1307 = vsel %vm1302, %v1304, %v1306
        %v1308 = vrot.slane %v1179, 2
        %v1309 = vsel %vm1302, %v1306, %v1308
        %v1310 = vrot.slane %v1182, 2
        %v1311 = vsel %vm1302, %v1308, %v1310
        %v1312 = vrot.slane %v1184, 2
        %v1313 = vsel %vm1302, %v1310, %v1312
        %v1314 = vrot.slane %v1187, 2
        %v1315 = vsel %vm1302, %v1312, %v1314
        %v1316 = vrot.slane %v1189, 2
        %v1317 = vsel %vm1302, %v1314, %v1316
        %v1318 = vrot.slane %v1192, 2
        %v1319 = vsel %vm1302, %v1316, %v1318
        %v1320 = vrot.slane %v1194, 2
        %v1321 = vsel %vm1302, %v1318, %v1320
        %v1322 = vrot.slane %v1197, 2
        %v1323 = vsel %vm1302, %v1320, %v1322
        %v1324 = vrot.slane %v1199, 2
        %v1325 = vsel %vm1302, %v1322, %v1324
        %v1326 = vrot.slane %v1202, 2
        %v1327 = vsel %vm1302, %v1324, %v1326
        %v1328 = vrot.slane %v1204, 2
        %v1329 = vsel %vm1302, %v1326, %v1328
        %v1330 = vrot.slane %v1207, 2
        %v1331 = vsel %vm1302, %v1328, %v1330
        %v1332 = vrot.slane %v1209, 2
        %v1333 = vsel %vm1302, %v1330, %v1332
        %v1334 = vrot.slane %v1212, 2
        %v1335 = vsel %vm1302, %v1332, %v1334
        %v1336 = vrot.slane %v1214, 2
        %v1337 = vsel %vm1302, %v1334, %v1336
        %v1338 = vrot.slane %v1217, 2
        %v1339 = vsel %vm1302, %v1336, %v1338
        %v1340 = vrot.slane %v1219, 2
        %v1341 = vsel %vm1302, %v1338, %v1340
        %v1342 = vrot.slane %v1222, 2
        %v1343 = vsel %vm1302, %v1340, %v1342
        %v1344 = vrot.slane %v1224, 2
        %v1345 = vsel %vm1302, %v1342, %v1344
        %v1346 = vrot.slane %v1227, 2
        %v1347 = vsel %vm1302, %v1344, %v1346
        %v1348 = vrot.slane %v1229, 2
        %v1349 = vsel %vm1302, %v1346, %v1348
        %v1350 = vrot.slane %v1232, 2
        %v1351 = vsel %vm1302, %v1348, %v1350
        %v1352 = vrot.slane %v1234, 2
        %v1353 = vsel %vm1302, %v1350, %v1352
        %v1354 = vrot.slane %v1237, 2
        %v1355 = vsel %vm1302, %v1352, %v1354
        %v1356 = vrot.slane %v1239, 2
        %v1357 = vsel %vm1302, %v1354, %v1356
        %v1358 = vrot.slane %v1242, 2
        %v1359 = vsel %vm1302, %v1356, %v1358
        %v1360 = vrot.slane %v1244, 2
        %v1361 = vsel %vm1302, %v1358, %v1360
        %v1362 = vrot.slane %v1247, 2
        %v1363 = vsel %vm1302, %v1360, %v1362
        %v1364 = vrot.slane %v1249, 2
        %v1365 = vsel %vm1302, %v1362, %v1364
        %v1366 = vrot.slane %v1252, 2
        %v1367 = vsel %vm1302, %v1364, %v1366
        %v1368 = vrot.slane %v1254, 2
        %v1369 = vsel %vm1302, %v1366, %v1368
        %v1370 = vrot.slane %v1257, 2
        %v1371 = vsel %vm1302, %v1368, %v1370
        %v1372 = vrot.slane %v1259, 2
        %v1373 = vsel %vm1302, %v1370, %v1372
        %v1374 = vrot.slane %v1262, 2
        %v1375 = vsel %vm1302, %v1372, %v1374
        %v1412 = vadd.f32 %v1061, %v1305
        %v1413 = vadd.f32 %v1062, %v1307
        %v1414 = vadd.f32 %v1063, %v1309
        %v1415 = vadd.f32 %v1064, %v1311
        %v1416 = vadd.f32 %v1065, %v1313
        %v1417 = vadd.f32 %v1066, %v1315
        %v1418 = vadd.f32 %v1067, %v1317
        %v1419 = vadd.f32 %v1068, %v1319
        %v1420 = vadd.f32 %v1069, %v1321
        %v1421 = vadd.f32 %v1070, %v1323
        %v1422 = vadd.f32 %v1071, %v1325
        %v1423 = vadd.f32 %v1072, %v1327
        %v1424 = vadd.f32 %v1073, %v1329
        %v1425 = vadd.f32 %v1074, %v1331
        %v1426 = vadd.f32 %v1075, %v1333
        %v1427 = vadd.f32 %v1076, %v1335
        %v1428 = vadd.f32 %v1077, %v1337
        %v1429 = vadd.f32 %v1078, %v1339
        %v1430 = vadd.f32 %v1079, %v1341
        %v1431 = vadd.f32 %v1080, %v1343
        %v1432 = vadd.f32 %v1081, %v1345
        %v1433 = vadd.f32 %v1082, %v1347
        %v1434 = vadd.f32 %v1083, %v1349
        %v1435 = vadd.f32 %v1084, %v1351
        %v1436 = vadd.f32 %v1085, %v1353
        %v1437 = vadd.f32 %v1086, %v1355
        %v1438 = vadd.f32 %v1087, %v1357
        %v1439 = vadd.f32 %v1088, %v1359
        %v1440 = vadd.f32 %v1089, %v1361
        %v1441 = vadd.f32 %v1090, %v1363
        %v1442 = vadd.f32 %v1091, %v1365
        %v1443 = vadd.f32 %v1092, %v1367
        %v1444 = vadd.f32 %v1093, %v1369
        %v1445 = vadd.f32 %v1094, %v1371
        %v1446 = vadd.f32 %v1095, %v1373
        %v1447 = vadd.f32 %v1096, %v1375
        %v1448 = vld [vmem:[%s342 + $0x8] sm:$0xe]
        %v1449 = vld [vmem:[%s342 + $0xc] sm:$0xf]
        %v1450 = vld [vmem:[%s342 + $0x10] sm:$0xf]
        %v1451 = vld [vmem:[%s342 + $0x14] sm:$0xf]
        %v1452 = vld [vmem:[%s342 + $0x18] sm:$0xf]
        %v1453 = vld [vmem:[%s342 + $0x1c] sm:$0xf]
        %v1454 = vld [vmem:[%s342 + $0x20] sm:$0xf]
        %v1455 = vld [vmem:[%s342 + $0x24] sm:$0xf]
        %v1456 = vld [vmem:[%s342 + $0x28] sm:$0xf]
        %v1457 = vld [vmem:[%s342 + $0x2c] sm:$0xf]
        %v1458 = vld [vmem:[%s342 + $0x30] sm:$0xf]
        %v1459 = vld [vmem:[%s342 + $0x34] sm:$0xf]
        %v1460 = vld [vmem:[%s342 + $0x38] sm:$0xf]
        %v1461 = vld [vmem:[%s342 + $0x3c] sm:$0xf]
        %v1462 = vld [vmem:[%s342 + $0x40] sm:$0xf]
        %v1463 = vld [vmem:[%s342 + $0x44] sm:$0xf]
        %v1464 = vld [vmem:[%s342 + $0x48] sm:$0xf]
        %v1465 = vld [vmem:[%s342 + $0x4c] sm:$0xf]
        %v1466 = vld [vmem:[%s342 + $0x50] sm:$0xf]
        %v1467 = vld [vmem:[%s342 + $0x54] sm:$0xf]
        %v1468 = vld [vmem:[%s342 + $0x58] sm:$0xf]
        %v1469 = vld [vmem:[%s342 + $0x5c] sm:$0xf]
        %v1470 = vld [vmem:[%s342 + $0x60] sm:$0xf]
        %v1471 = vld [vmem:[%s342 + $0x64] sm:$0xf]
        %v1472 = vld [vmem:[%s342 + $0x68] sm:$0xf]
        %v1473 = vld [vmem:[%s342 + $0x6c] sm:$0xf]
        %v1474 = vld [vmem:[%s342 + $0x70] sm:$0xf]
        %v1475 = vld [vmem:[%s342 + $0x74] sm:$0xf]
        %v1476 = vld [vmem:[%s342 + $0x78] sm:$0xf]
        %v1477 = vld [vmem:[%s342 + $0x7c] sm:$0xf]
        %v1478 = vld [vmem:[%s342 + $0x80] sm:$0xf]
        %v1479 = vld [vmem:[%s342 + $0x84] sm:$0xf]
        %v1480 = vld [vmem:[%s342 + $0x88] sm:$0xf]
        %v1481 = vld [vmem:[%s342 + $0x8c] sm:$0xf]
        %v1482 = vld [vmem:[%s342 + $0x90] sm:$0xf]
        %v1483 = vld [vmem:[%s342 + $0x94] sm:$0xf]
        %v1484 = vld [vmem:[%s342 + $0x98] sm:$0xf]
        %v1485 = vld [vmem:[%s342 + $0x9c] sm:$0x1]
        %s1486 = scalar_lea.vmem [#allocation5], 192
        %v1487 = vld [vmem:[%s1486] sm:$0xf]
        %v1488 = vld [vmem:[%s1486 + $0x4] sm:$0xf]
        %v1489 = vld [vmem:[%s1486 + $0x8] sm:$0xf]
        %v1490 = vld [vmem:[%s1486 + $0xc] sm:$0xf]
        %v1491 = vld [vmem:[%s1486 + $0x10] sm:$0xf]
        %v1492 = vld [vmem:[%s1486 + $0x14] sm:$0xf]
        %v1493 = vld [vmem:[%s1486 + $0x18] sm:$0xf]
        %v1494 = vld [vmem:[%s1486 + $0x1c] sm:$0xf]
        %v1495 = vld [vmem:[%s1486 + $0x20] sm:$0xf]
        %v1496 = vld [vmem:[%s1486 + $0x24] sm:$0xf]
        %v1497 = vld [vmem:[%s1486 + $0x28] sm:$0xf]
        %v1498 = vld [vmem:[%s1486 + $0x2c] sm:$0xf]
        %v1499 = vld [vmem:[%s1486 + $0x30] sm:$0xf]
        %v1500 = vld [vmem:[%s1486 + $0x34] sm:$0xf]
        %v1501 = vld [vmem:[%s1486 + $0x38] sm:$0xf]
        %v1502 = vld [vmem:[%s1486 + $0x3c] sm:$0xf]
        %v1541 = vunpack.c.l.b16 %v1448
        %v1542 = vunpack.c.l.b16 %v1449
        %v1543 = vunpack.c.l.b16 %v1450
        %v1544 = vunpack.c.l.b16 %v1451
        %v1545 = vunpack.c.l.b16 %v1452
        %v1546 = vunpack.c.l.b16 %v1453
        %v1547 = vunpack.c.l.b16 %v1454
        %v1548 = vunpack.c.l.b16 %v1455
        %v1549 = vunpack.c.l.b16 %v1456
        %v1550 = vunpack.c.l.b16 %v1457
        %v1551 = vunpack.c.l.b16 %v1458
        %v1552 = vunpack.c.l.b16 %v1459
        %v1553 = vunpack.c.l.b16 %v1460
        %v1554 = vunpack.c.l.b16 %v1461
        %v1555 = vunpack.c.l.b16 %v1462
        %v1556 = vunpack.c.l.b16 %v1463
        %v1557 = vunpack.c.l.b16 %v1464
        %v1558 = vunpack.c.l.b16 %v1465
        %v1559 = vunpack.c.l.b16 %v1466
        %v1560 = vunpack.c.l.b16 %v1467
        %v1561 = vunpack.c.l.b16 %v1468
        %v1562 = vunpack.c.l.b16 %v1469
        %v1563 = vunpack.c.l.b16 %v1470
        %v1564 = vunpack.c.l.b16 %v1471
        %v1565 = vunpack.c.l.b16 %v1472
        %v1566 = vunpack.c.l.b16 %v1473
        %v1567 = vunpack.c.l.b16 %v1474
        %v1568 = vunpack.c.l.b16 %v1475
        %v1569 = vunpack.c.l.b16 %v1476
        %v1570 = vunpack.c.l.b16 %v1477
        %v1571 = vunpack.c.l.b16 %v1478
        %v1572 = vunpack.c.l.b16 %v1479
        %v1573 = vunpack.c.l.b16 %v1480
        %v1574 = vunpack.c.l.b16 %v1481
        %v1575 = vunpack.c.l.b16 %v1482
        %v1576 = vunpack.c.l.b16 %v1483
        %v1577 = vunpack.c.l.b16 %v1484
        %v1578 = vunpack.c.l.b16 %v1485
        %v1579 = vpack.c.b16 %v1542, %v1541
        %v1580 = vpack.c.b16 %v1544, %v1543
        %v1581 = vpack.c.b16 %v1546, %v1545
        %v1582 = vpack.c.b16 %v1548, %v1547
        %v1583 = vpack.c.b16 %v1550, %v1549
        %v1584 = vpack.c.b16 %v1552, %v1551
        %v1585 = vpack.c.b16 %v1554, %v1553
        %v1586 = vpack.c.b16 %v1556, %v1555
        %v1587 = vpack.c.b16 %v1558, %v1557
        %v1588 = vpack.c.b16 %v1560, %v1559
        %v1589 = vpack.c.b16 %v1562, %v1561
        %v1590 = vpack.c.b16 %v1564, %v1563
        %v1591 = vpack.c.b16 %v1566, %v1565
        %v1592 = vpack.c.b16 %v1568, %v1567
        %v1593 = vpack.c.b16 %v1570, %v1569
        %v1594 = vpack.c.b16 %v1572, %v1571
        %v1595 = vpack.c.b16 %v1574, %v1573
        %v1596 = vpack.c.b16 %v1576, %v1575
        %v1597 = vpack.c.b16 %v1578, %v1577
        %vm1598 = vcmask 1046528
        %v1599 = vrot.slane %v1579, 1
        %v1600 = vrot.slane %v1580, 1
        %v1601 = vsel %vm1598, %v1599, %v1600
        %v1602 = vrot.slane %v1581, 1
        %v1603 = vsel %vm1598, %v1600, %v1602
        %v1604 = vrot.slane %v1582, 1
        %v1605 = vsel %vm1598, %v1602, %v1604
        %v1606 = vrot.slane %v1583, 1
        %v1607 = vsel %vm1598, %v1604, %v1606
        %v1608 = vrot.slane %v1584, 1
        %v1609 = vsel %vm1598, %v1606, %v1608
        %v1610 = vrot.slane %v1585, 1
        %v1611 = vsel %vm1598, %v1608, %v1610
        %v1612 = vrot.slane %v1586, 1
        %v1613 = vsel %vm1598, %v1610, %v1612
        %v1614 = vrot.slane %v1587, 1
        %v1615 = vsel %vm1598, %v1612, %v1614
        %v1616 = vrot.slane %v1588, 1
        %v1617 = vsel %vm1598, %v1614, %v1616
        %v1618 = vrot.slane %v1589, 1
        %v1619 = vsel %vm1598, %v1616, %v1618
        %v1620 = vrot.slane %v1590, 1
        %v1621 = vsel %vm1598, %v1618, %v1620
        %v1622 = vrot.slane %v1591, 1
        %v1623 = vsel %vm1598, %v1620, %v1622
        %v1624 = vrot.slane %v1592, 1
        %v1625 = vsel %vm1598, %v1622, %v1624
        %v1626 = vrot.slane %v1593, 1
        %v1627 = vsel %vm1598, %v1624, %v1626
        %v1628 = vrot.slane %v1594, 1
        %v1629 = vsel %vm1598, %v1626, %v1628
        %v1630 = vrot.slane %v1595, 1
        %v1631 = vsel %vm1598, %v1628, %v1630
        %v1632 = vrot.slane %v1596, 1
        %v1633 = vsel %vm1598, %v1630, %v1632
        %v1634 = vrot.slane %v1597, 1
        %v1635 = vsel %vm1598, %v1632, %v1634
        %v1671 = vunpack.c.l.b16 %v1487
        %v1672 = vunpack.c.l.b16 %v1488
        %v1673 = vunpack.c.l.b16 %v1489
        %v1674 = vunpack.c.l.b16 %v1490
        %v1675 = vunpack.c.l.b16 %v1491
        %v1676 = vunpack.c.l.b16 %v1492
        %v1677 = vunpack.c.l.b16 %v1493
        %v1678 = vunpack.c.l.b16 %v1494
        %v1679 = vunpack.c.l.b16 %v1495
        %v1680 = vunpack.c.l.b16 %v1496
        %v1681 = vunpack.c.l.b16 %v1497
        %v1682 = vunpack.c.l.b16 %v1498
        %v1683 = vunpack.c.l.b16 %v1499
        %v1684 = vunpack.c.l.b16 %v1500
        %v1685 = vunpack.c.l.b16 %v1501
        %v1686 = vunpack.c.l.b16 %v1502
        %v1687 = vpack.c.b16 %v1672, %v1671
        %v1688 = vpack.c.b16 %v1674, %v1673
        %v1689 = vpack.c.b16 %v1676, %v1675
        %v1690 = vpack.c.b16 %v1678, %v1677
        %v1691 = vpack.c.b16 %v1680, %v1679
        %v1692 = vpack.c.b16 %v1682, %v1681
        %v1693 = vpack.c.b16 %v1684, %v1683
        %v1694 = vpack.c.b16 %v1686, %v1685
        %1703 = vmatpush.bf16.msra.mxu0 %v1694
        %1704 = vmatpush.bf16.msra.mxu0 %v1693
        %1705 = vmatpush.bf16.msra.mxu0 %v1692
        %1706 = vmatpush.bf16.msra.mxu0 %v1691
        %1707 = vmatpush.bf16.msra.mxu0 %v1690
        %1708 = vmatpush.bf16.msra.mxu0 %v1689
        %1709 = vmatpush.bf16.msra.mxu0 %v1688
        %1710 = vmatpush.bf16.msra.mxu0 %v1687
        %1711 = vmatmul.bf16.gmra.mxu0 %v1601
        %v1712 = vpop.f32.mrf.mxu0
        %v1713 = vadd.f32 0.0, %v1712
        %v1714 = vpop.f32.mrf.mxu0
        %v1715 = vadd.f32 0.0, %v1714
        %1716 = vmatmul.bf16.gmra.mxu0 %v1603
        %v1717 = vpop.f32.mrf.mxu0
        %v1718 = vadd.f32 0.0, %v1717
        %v1719 = vpop.f32.mrf.mxu0
        %v1720 = vadd.f32 0.0, %v1719
        %1721 = vmatmul.bf16.gmra.mxu0 %v1605
        %v1722 = vpop.f32.mrf.mxu0
        %v1723 = vadd.f32 0.0, %v1722
        %v1724 = vpop.f32.mrf.mxu0
        %v1725 = vadd.f32 0.0, %v1724
        %1726 = vmatmul.bf16.gmra.mxu0 %v1607
        %v1727 = vpop.f32.mrf.mxu0
        %v1728 = vadd.f32 0.0, %v1727
        %v1729 = vpop.f32.mrf.mxu0
        %v1730 = vadd.f32 0.0, %v1729
        %1731 = vmatmul.bf16.gmra.mxu0 %v1609
        %v1732 = vpop.f32.mrf.mxu0
        %v1733 = vadd.f32 0.0, %v1732
        %v1734 = vpop.f32.mrf.mxu0
        %v1735 = vadd.f32 0.0, %v1734
        %1736 = vmatmul.bf16.gmra.mxu0 %v1611
        %v1737 = vpop.f32.mrf.mxu0
        %v1738 = vadd.f32 0.0, %v1737
        %v1739 = vpop.f32.mrf.mxu0
        %v1740 = vadd.f32 0.0, %v1739
        %1741 = vmatmul.bf16.gmra.mxu0 %v1613
        %v1742 = vpop.f32.mrf.mxu0
        %v1743 = vadd.f32 0.0, %v1742
        %v1744 = vpop.f32.mrf.mxu0
        %v1745 = vadd.f32 0.0, %v1744
        %1746 = vmatmul.bf16.gmra.mxu0 %v1615
        %v1747 = vpop.f32.mrf.mxu0
        %v1748 = vadd.f32 0.0, %v1747
        %v1749 = vpop.f32.mrf.mxu0
        %v1750 = vadd.f32 0.0, %v1749
        %1751 = vmatmul.bf16.gmra.mxu0 %v1617
        %v1752 = vpop.f32.mrf.mxu0
        %v1753 = vadd.f32 0.0, %v1752
        %v1754 = vpop.f32.mrf.mxu0
        %v1755 = vadd.f32 0.0, %v1754
        %1756 = vmatmul.bf16.gmra.mxu0 %v1619
        %v1757 = vpop.f32.mrf.mxu0
        %v1758 = vadd.f32 0.0, %v1757
        %v1759 = vpop.f32.mrf.mxu0
        %v1760 = vadd.f32 0.0, %v1759
        %1761 = vmatmul.bf16.gmra.mxu0 %v1621
        %v1762 = vpop.f32.mrf.mxu0
        %v1763 = vadd.f32 0.0, %v1762
        %v1764 = vpop.f32.mrf.mxu0
        %v1765 = vadd.f32 0.0, %v1764
        %1766 = vmatmul.bf16.gmra.mxu0 %v1623
        %v1767 = vpop.f32.mrf.mxu0
        %v1768 = vadd.f32 0.0, %v1767
        %v1769 = vpop.f32.mrf.mxu0
        %v1770 = vadd.f32 0.0, %v1769
        %1771 = vmatmul.bf16.gmra.mxu0 %v1625
        %v1772 = vpop.f32.mrf.mxu0
        %v1773 = vadd.f32 0.0, %v1772
        %v1774 = vpop.f32.mrf.mxu0
        %v1775 = vadd.f32 0.0, %v1774
        %1776 = vmatmul.bf16.gmra.mxu0 %v1627
        %v1777 = vpop.f32.mrf.mxu0
        %v1778 = vadd.f32 0.0, %v1777
        %v1779 = vpop.f32.mrf.mxu0
        %v1780 = vadd.f32 0.0, %v1779
        %1781 = vmatmul.bf16.gmra.mxu0 %v1629
        %v1782 = vpop.f32.mrf.mxu0
        %v1783 = vadd.f32 0.0, %v1782
        %v1784 = vpop.f32.mrf.mxu0
        %v1785 = vadd.f32 0.0, %v1784
        %1786 = vmatmul.bf16.gmra.mxu0 %v1631
        %v1787 = vpop.f32.mrf.mxu0
        %v1788 = vadd.f32 0.0, %v1787
        %v1789 = vpop.f32.mrf.mxu0
        %v1790 = vadd.f32 0.0, %v1789
        %1791 = vmatmul.bf16.gmra.mxu0 %v1633
        %v1792 = vpop.f32.mrf.mxu0
        %v1793 = vadd.f32 0.0, %v1792
        %v1794 = vpop.f32.mrf.mxu0
        %v1795 = vadd.f32 0.0, %v1794
        %1796 = vmatmul.bf16.gmra.mxu0 %v1635
        %v1797 = vpop.f32.mrf.mxu0
        %v1798 = vadd.f32 0.0, %v1797
        %v1799 = vpop.f32.mrf.mxu0
        %v1800 = vadd.f32 0.0, %v1799
        %1801 = vmatmul.bf16.gmra.mxu0 %v1634
        %v1802 = vpop.f32.mrf.mxu0
        %v1803 = vpop.f32.mrf.mxu0
        %1804 = vdwg.mxu0
        %v1805 = vadd.f32 %v1412, %v1713
        %v1806 = vadd.f32 %v1413, %v1715
        %v1807 = vadd.f32 %v1414, %v1718
        %v1808 = vadd.f32 %v1415, %v1720
        %v1809 = vadd.f32 %v1416, %v1723
        %v1810 = vadd.f32 %v1417, %v1725
        %v1811 = vadd.f32 %v1418, %v1728
        %v1812 = vadd.f32 %v1419, %v1730
        %v1813 = vadd.f32 %v1420, %v1733
        %v1814 = vadd.f32 %v1421, %v1735
        %v1815 = vadd.f32 %v1422, %v1738
        %v1816 = vadd.f32 %v1423, %v1740
        %v1817 = vadd.f32 %v1424, %v1743
        %v1818 = vadd.f32 %v1425, %v1745
        %v1819 = vadd.f32 %v1426, %v1748
        %v1820 = vadd.f32 %v1427, %v1750
        %v1821 = vadd.f32 %v1428, %v1753
        %v1822 = vadd.f32 %v1429, %v1755
        %v1823 = vadd.f32 %v1430, %v1758
        %v1824 = vadd.f32 %v1431, %v1760
        %v1825 = vadd.f32 %v1432, %v1763
        %v1826 = vadd.f32 %v1433, %v1765
        %v1827 = vadd.f32 %v1434, %v1768
        %v1828 = vadd.f32 %v1435, %v1770
        %v1829 = vadd.f32 %v1436, %v1773
        %v1830 = vadd.f32 %v1437, %v1775
        %v1831 = vadd.f32 %v1438, %v1778
        %v1832 = vadd.f32 %v1439, %v1780
        %v1833 = vadd.f32 %v1440, %v1783
        %v1834 = vadd.f32 %v1441, %v1785
        %v1835 = vadd.f32 %v1442, %v1788
        %v1836 = vadd.f32 %v1443, %v1790
        %v1837 = vadd.f32 %v1444, %v1793
        %v1838 = vadd.f32 %v1445, %v1795
        %v1839 = vadd.f32 %v1446, %v1798
        %v1840 = vadd.f32 %v1447, %v1800
        %s1841 = scalar_lea.vmem [#allocation5], 256
        %v1842 = vld [vmem:[%s1841] sm:$0xf]
        %v1843 = vld [vmem:[%s1841 + $0x4] sm:$0xf]
        %v1844 = vld [vmem:[%s1841 + $0x8] sm:$0xf]
        %v1845 = vld [vmem:[%s1841 + $0xc] sm:$0xf]
        %v1846 = vld [vmem:[%s1841 + $0x10] sm:$0xf]
        %v1847 = vld [vmem:[%s1841 + $0x14] sm:$0xf]
        %v1848 = vld [vmem:[%s1841 + $0x18] sm:$0xf]
        %v1849 = vld [vmem:[%s1841 + $0x1c] sm:$0xf]
        %v1850 = vld [vmem:[%s1841 + $0x20] sm:$0xf]
        %v1851 = vld [vmem:[%s1841 + $0x24] sm:$0xf]
        %v1852 = vld [vmem:[%s1841 + $0x28] sm:$0xf]
        %v1853 = vld [vmem:[%s1841 + $0x2c] sm:$0xf]
        %v1854 = vld [vmem:[%s1841 + $0x30] sm:$0xf]
        %v1855 = vld [vmem:[%s1841 + $0x34] sm:$0xf]
        %v1856 = vld [vmem:[%s1841 + $0x38] sm:$0xf]
        %v1857 = vld [vmem:[%s1841 + $0x3c] sm:$0xf]
        %v1874 = vunpack.c.l.b16 %v1842
        %v1875 = vunpack.c.l.b16 %v1843
        %v1876 = vunpack.c.l.b16 %v1844
        %v1877 = vunpack.c.l.b16 %v1845
        %v1878 = vunpack.c.l.b16 %v1846
        %v1879 = vunpack.c.l.b16 %v1847
        %v1880 = vunpack.c.l.b16 %v1848
        %v1881 = vunpack.c.l.b16 %v1849
        %v1882 = vunpack.c.l.b16 %v1850
        %v1883 = vunpack.c.l.b16 %v1851
        %v1884 = vunpack.c.l.b16 %v1852
        %v1885 = vunpack.c.l.b16 %v1853
        %v1886 = vunpack.c.l.b16 %v1854
        %v1887 = vunpack.c.l.b16 %v1855
        %v1888 = vunpack.c.l.b16 %v1856
        %v1889 = vunpack.c.l.b16 %v1857
        %v1890 = vpack.c.b16 %v1875, %v1874
        %v1891 = vpack.c.b16 %v1877, %v1876
        %v1892 = vpack.c.b16 %v1879, %v1878
        %v1893 = vpack.c.b16 %v1881, %v1880
        %v1894 = vpack.c.b16 %v1883, %v1882
        %v1895 = vpack.c.b16 %v1885, %v1884
        %v1896 = vpack.c.b16 %v1887, %v1886
        %v1897 = vpack.c.b16 %v1889, %v1888
        %1906 = vmatpush.bf16.msra.mxu0 %v1897
        %1907 = vmatpush.bf16.msra.mxu0 %v1896
        %1908 = vmatpush.bf16.msra.mxu0 %v1895
        %1909 = vmatpush.bf16.msra.mxu0 %v1894
        %1910 = vmatpush.bf16.msra.mxu0 %v1893
        %1911 = vmatpush.bf16.msra.mxu0 %v1892
        %1912 = vmatpush.bf16.msra.mxu0 %v1891
        %1913 = vmatpush.bf16.msra.mxu0 %v1890
        %1914 = vmatmul.bf16.gmra.mxu0 %v1601
        %v1915 = vpop.f32.mrf.mxu0
        %v1916 = vadd.f32 0.0, %v1915
        %v1917 = vpop.f32.mrf.mxu0
        %v1918 = vadd.f32 0.0, %v1917
        %1919 = vmatmul.bf16.gmra.mxu0 %v1603
        %v1920 = vpop.f32.mrf.mxu0
        %v1921 = vadd.f32 0.0, %v1920
        %v1922 = vpop.f32.mrf.mxu0
        %v1923 = vadd.f32 0.0, %v1922
        %1924 = vmatmul.bf16.gmra.mxu0 %v1605
        %v1925 = vpop.f32.mrf.mxu0
        %v1926 = vadd.f32 0.0, %v1925
        %v1927 = vpop.f32.mrf.mxu0
        %v1928 = vadd.f32 0.0, %v1927
        %1929 = vmatmul.bf16.gmra.mxu0 %v1607
        %v1930 = vpop.f32.mrf.mxu0
        %v1931 = vadd.f32 0.0, %v1930
        %v1932 = vpop.f32.mrf.mxu0
        %v1933 = vadd.f32 0.0, %v1932
        %1934 = vmatmul.bf16.gmra.mxu0 %v1609
        %v1935 = vpop.f32.mrf.mxu0
        %v1936 = vadd.f32 0.0, %v1935
        %v1937 = vpop.f32.mrf.mxu0
        %v1938 = vadd.f32 0.0, %v1937
        %1939 = vmatmul.bf16.gmra.mxu0 %v1611
        %v1940 = vpop.f32.mrf.mxu0
        %v1941 = vadd.f32 0.0, %v1940
        %v1942 = vpop.f32.mrf.mxu0
        %v1943 = vadd.f32 0.0, %v1942
        %1944 = vmatmul.bf16.gmra.mxu0 %v1613
        %v1945 = vpop.f32.mrf.mxu0
        %v1946 = vadd.f32 0.0, %v1945
        %v1947 = vpop.f32.mrf.mxu0
        %v1948 = vadd.f32 0.0, %v1947
        %1949 = vmatmul.bf16.gmra.mxu0 %v1615
        %v1950 = vpop.f32.mrf.mxu0
        %v1951 = vadd.f32 0.0, %v1950
        %v1952 = vpop.f32.mrf.mxu0
        %v1953 = vadd.f32 0.0, %v1952
        %1954 = vmatmul.bf16.gmra.mxu0 %v1617
        %v1955 = vpop.f32.mrf.mxu0
        %v1956 = vadd.f32 0.0, %v1955
        %v1957 = vpop.f32.mrf.mxu0
        %v1958 = vadd.f32 0.0, %v1957
        %1959 = vmatmul.bf16.gmra.mxu0 %v1619
        %v1960 = vpop.f32.mrf.mxu0
        %v1961 = vadd.f32 0.0, %v1960
        %v1962 = vpop.f32.mrf.mxu0
        %v1963 = vadd.f32 0.0, %v1962
        %1964 = vmatmul.bf16.gmra.mxu0 %v1621
        %v1965 = vpop.f32.mrf.mxu0
        %v1966 = vadd.f32 0.0, %v1965
        %v1967 = vpop.f32.mrf.mxu0
        %v1968 = vadd.f32 0.0, %v1967
        %1969 = vmatmul.bf16.gmra.mxu0 %v1623
        %v1970 = vpop.f32.mrf.mxu0
        %v1971 = vadd.f32 0.0, %v1970
        %v1972 = vpop.f32.mrf.mxu0
        %v1973 = vadd.f32 0.0, %v1972
        %1974 = vmatmul.bf16.gmra.mxu0 %v1625
        %v1975 = vpop.f32.mrf.mxu0
        %v1976 = vadd.f32 0.0, %v1975
        %v1977 = vpop.f32.mrf.mxu0
        %v1978 = vadd.f32 0.0, %v1977
        %1979 = vmatmul.bf16.gmra.mxu0 %v1627
        %v1980 = vpop.f32.mrf.mxu0
        %v1981 = vadd.f32 0.0, %v1980
        %v1982 = vpop.f32.mrf.mxu0
        %v1983 = vadd.f32 0.0, %v1982
        %1984 = vmatmul.bf16.gmra.mxu0 %v1629
        %v1985 = vpop.f32.mrf.mxu0
        %v1986 = vadd.f32 0.0, %v1985
        %v1987 = vpop.f32.mrf.mxu0
        %v1988 = vadd.f32 0.0, %v1987
        %1989 = vmatmul.bf16.gmra.mxu0 %v1631
        %v1990 = vpop.f32.mrf.mxu0
        %v1991 = vadd.f32 0.0, %v1990
        %v1992 = vpop.f32.mrf.mxu0
        %v1993 = vadd.f32 0.0, %v1992
        %1994 = vmatmul.bf16.gmra.mxu0 %v1633
        %v1995 = vpop.f32.mrf.mxu0
        %v1996 = vadd.f32 0.0, %v1995
        %v1997 = vpop.f32.mrf.mxu0
        %v1998 = vadd.f32 0.0, %v1997
        %1999 = vmatmul.bf16.gmra.mxu0 %v1635
        %v2000 = vpop.f32.mrf.mxu0
        %v2001 = vadd.f32 0.0, %v2000
        %v2002 = vpop.f32.mrf.mxu0
        %v2003 = vadd.f32 0.0, %v2002
        %2004 = vmatmul.bf16.gmra.mxu0 %v1634
        %v2005 = vpop.f32.mrf.mxu0
        %v2006 = vadd.f32 0.0, %v2005
        %v2007 = vpop.f32.mrf.mxu0
        %2008 = vdwg.mxu0
        %v2046 = vrot.slane %v1916, 1
        %v2047 = vrot.slane %v1918, 1
        %v2048 = vsel %vm951, %v2046, %v2047
        %v2049 = vrot.slane %v1921, 1
        %v2050 = vsel %vm951, %v2047, %v2049
        %v2051 = vrot.slane %v1923, 1
        %v2052 = vsel %vm951, %v2049, %v2051
        %v2053 = vrot.slane %v1926, 1
        %v2054 = vsel %vm951, %v2051, %v2053
        %v2055 = vrot.slane %v1928, 1
        %v2056 = vsel %vm951, %v2053, %v2055
        %v2057 = vrot.slane %v1931, 1
        %v2058 = vsel %vm951, %v2055, %v2057
        %v2059 = vrot.slane %v1933, 1
        %v2060 = vsel %vm951, %v2057, %v2059
        %v2061 = vrot.slane %v1936, 1
        %v2062 = vsel %vm951, %v2059, %v2061
        %v2063 = vrot.slane %v1938, 1
        %v2064 = vsel %vm951, %v2061, %v2063
        %v2065 = vrot.slane %v1941, 1
        %v2066 = vsel %vm951, %v2063, %v2065
        %v2067 = vrot.slane %v1943, 1
        %v2068 = vsel %vm951, %v2065, %v2067
        %v2069 = vrot.slane %v1946, 1
        %v2070 = vsel %vm951, %v2067, %v2069
        %v2071 = vrot.slane %v1948, 1
        %v2072 = vsel %vm951, %v2069, %v2071
        %v2073 = vrot.slane %v1951, 1
        %v2074 = vsel %vm951, %v2071, %v2073
        %v2075 = vrot.slane %v1953, 1
        %v2076 = vsel %vm951, %v2073, %v2075
        %v2077 = vrot.slane %v1956, 1
        %v2078 = vsel %vm951, %v2075, %v2077
        %v2079 = vrot.slane %v1958, 1
        %v2080 = vsel %vm951, %v2077, %v2079
        %v2081 = vrot.slane %v1961, 1
        %v2082 = vsel %vm951, %v2079, %v2081
        %v2083 = vrot.slane %v1963, 1
        %v2084 = vsel %vm951, %v2081, %v2083
        %v2085 = vrot.slane %v1966, 1
        %v2086 = vsel %vm951, %v2083, %v2085
        %v2087 = vrot.slane %v1968, 1
        %v2088 = vsel %vm951, %v2085, %v2087
        %v2089 = vrot.slane %v1971, 1
        %v2090 = vsel %vm951, %v2087, %v2089
        %v2091 = vrot.slane %v1973, 1
        %v2092 = vsel %vm951, %v2089, %v2091
        %v2093 = vrot.slane %v1976, 1
        %v2094 = vsel %vm951, %v2091, %v2093
        %v2095 = vrot.slane %v1978, 1
        %v2096 = vsel %vm951, %v2093, %v2095
        %v2097 = vrot.slane %v1981, 1
        %v2098 = vsel %vm951, %v2095, %v2097
        %v2099 = vrot.slane %v1983, 1
        %v2100 = vsel %vm951, %v2097, %v2099
        %v2101 = vrot.slane %v1986, 1
        %v2102 = vsel %vm951, %v2099, %v2101
        %v2103 = vrot.slane %v1988, 1
        %v2104 = vsel %vm951, %v2101, %v2103
        %v2105 = vrot.slane %v1991, 1
        %v2106 = vsel %vm951, %v2103, %v2105
        %v2107 = vrot.slane %v1993, 1
        %v2108 = vsel %vm951, %v2105, %v2107
        %v2109 = vrot.slane %v1996, 1
        %v2110 = vsel %vm951, %v2107, %v2109
        %v2111 = vrot.slane %v1998, 1
        %v2112 = vsel %vm951, %v2109, %v2111
        %v2113 = vrot.slane %v2001, 1
        %v2114 = vsel %vm951, %v2111, %v2113
        %v2115 = vrot.slane %v2003, 1
        %v2116 = vsel %vm951, %v2113, %v2115
        %v2117 = vrot.slane %v2006, 1
        %v2118 = vsel %vm951, %v2115, %v2117
        %v2155 = vadd.f32 %v1805, %v2048
        %v2156 = vadd.f32 %v1806, %v2050
        %v2157 = vadd.f32 %v1807, %v2052
        %v2158 = vadd.f32 %v1808, %v2054
        %v2159 = vadd.f32 %v1809, %v2056
        %v2160 = vadd.f32 %v1810, %v2058
        %v2161 = vadd.f32 %v1811, %v2060
        %v2162 = vadd.f32 %v1812, %v2062
        %v2163 = vadd.f32 %v1813, %v2064
        %v2164 = vadd.f32 %v1814, %v2066
        %v2165 = vadd.f32 %v1815, %v2068
        %v2166 = vadd.f32 %v1816, %v2070
        %v2167 = vadd.f32 %v1817, %v2072
        %v2168 = vadd.f32 %v1818, %v2074
        %v2169 = vadd.f32 %v1819, %v2076
        %v2170 = vadd.f32 %v1820, %v2078
        %v2171 = vadd.f32 %v1821, %v2080
        %v2172 = vadd.f32 %v1822, %v2082
        %v2173 = vadd.f32 %v1823, %v2084
        %v2174 = vadd.f32 %v1824, %v2086
        %v2175 = vadd.f32 %v1825, %v2088
        %v2176 = vadd.f32 %v1826, %v2090
        %v2177 = vadd.f32 %v1827, %v2092
        %v2178 = vadd.f32 %v1828, %v2094
        %v2179 = vadd.f32 %v1829, %v2096
        %v2180 = vadd.f32 %v1830, %v2098
        %v2181 = vadd.f32 %v1831, %v2100
        %v2182 = vadd.f32 %v1832, %v2102
        %v2183 = vadd.f32 %v1833, %v2104
        %v2184 = vadd.f32 %v1834, %v2106
        %v2185 = vadd.f32 %v1835, %v2108
        %v2186 = vadd.f32 %v1836, %v2110
        %v2187 = vadd.f32 %v1837, %v2112
        %v2188 = vadd.f32 %v1838, %v2114
        %v2189 = vadd.f32 %v1839, %v2116
        %v2190 = vadd.f32 %v1840, %v2118
        %s2191 = scalar_lea.vmem [#allocation5], 320
        %v2192 = vld [vmem:[%s2191] sm:$0xf]
        %v2193 = vld [vmem:[%s2191 + $0x4] sm:$0xf]
        %v2194 = vld [vmem:[%s2191 + $0x8] sm:$0xf]
        %v2195 = vld [vmem:[%s2191 + $0xc] sm:$0xf]
        %v2196 = vld [vmem:[%s2191 + $0x10] sm:$0xf]
        %v2197 = vld [vmem:[%s2191 + $0x14] sm:$0xf]
        %v2198 = vld [vmem:[%s2191 + $0x18] sm:$0xf]
        %v2199 = vld [vmem:[%s2191 + $0x1c] sm:$0xf]
        %v2200 = vld [vmem:[%s2191 + $0x20] sm:$0xf]
        %v2201 = vld [vmem:[%s2191 + $0x24] sm:$0xf]
        %v2202 = vld [vmem:[%s2191 + $0x28] sm:$0xf]
        %v2203 = vld [vmem:[%s2191 + $0x2c] sm:$0xf]
        %v2204 = vld [vmem:[%s2191 + $0x30] sm:$0xf]
        %v2205 = vld [vmem:[%s2191 + $0x34] sm:$0xf]
        %v2206 = vld [vmem:[%s2191 + $0x38] sm:$0xf]
        %v2207 = vld [vmem:[%s2191 + $0x3c] sm:$0xf]
        %v2224 = vunpack.c.l.b16 %v2192
        %v2225 = vunpack.c.l.b16 %v2193
        %v2226 = vunpack.c.l.b16 %v2194
        %v2227 = vunpack.c.l.b16 %v2195
        %v2228 = vunpack.c.l.b16 %v2196
        %v2229 = vunpack.c.l.b16 %v2197
        %v2230 = vunpack.c.l.b16 %v2198
        %v2231 = vunpack.c.l.b16 %v2199
        %v2232 = vunpack.c.l.b16 %v2200
        %v2233 = vunpack.c.l.b16 %v2201
        %v2234 = vunpack.c.l.b16 %v2202
        %v2235 = vunpack.c.l.b16 %v2203
        %v2236 = vunpack.c.l.b16 %v2204
        %v2237 = vunpack.c.l.b16 %v2205
        %v2238 = vunpack.c.l.b16 %v2206
        %v2239 = vunpack.c.l.b16 %v2207
        %v2240 = vpack.c.b16 %v2225, %v2224
        %v2241 = vpack.c.b16 %v2227, %v2226
        %v2242 = vpack.c.b16 %v2229, %v2228
        %v2243 = vpack.c.b16 %v2231, %v2230
        %v2244 = vpack.c.b16 %v2233, %v2232
        %v2245 = vpack.c.b16 %v2235, %v2234
        %v2246 = vpack.c.b16 %v2237, %v2236
        %v2247 = vpack.c.b16 %v2239, %v2238
        %2256 = vmatpush.bf16.msra.mxu0 %v2247
        %2257 = vmatpush.bf16.msra.mxu0 %v2246
        %2258 = vmatpush.bf16.msra.mxu0 %v2245
        %2259 = vmatpush.bf16.msra.mxu0 %v2244
        %2260 = vmatpush.bf16.msra.mxu0 %v2243
        %2261 = vmatpush.bf16.msra.mxu0 %v2242
        %2262 = vmatpush.bf16.msra.mxu0 %v2241
        %2263 = vmatpush.bf16.msra.mxu0 %v2240
        %2264 = vmatmul.bf16.gmra.mxu0 %v1601
        %v2265 = vpop.f32.mrf.mxu0
        %v2266 = vadd.f32 0.0, %v2265
        %v2267 = vpop.f32.mrf.mxu0
        %v2268 = vadd.f32 0.0, %v2267
        %2269 = vmatmul.bf16.gmra.mxu0 %v1603
        %v2270 = vpop.f32.mrf.mxu0
        %v2271 = vadd.f32 0.0, %v2270
        %v2272 = vpop.f32.mrf.mxu0
        %v2273 = vadd.f32 0.0, %v2272
        %2274 = vmatmul.bf16.gmra.mxu0 %v1605
        %v2275 = vpop.f32.mrf.mxu0
        %v2276 = vadd.f32 0.0, %v2275
        %v2277 = vpop.f32.mrf.mxu0
        %v2278 = vadd.f32 0.0, %v2277
        %2279 = vmatmul.bf16.gmra.mxu0 %v1607
        %v2280 = vpop.f32.mrf.mxu0
        %v2281 = vadd.f32 0.0, %v2280
        %v2282 = vpop.f32.mrf.mxu0
        %v2283 = vadd.f32 0.0, %v2282
        %2284 = vmatmul.bf16.gmra.mxu0 %v1609
        %v2285 = vpop.f32.mrf.mxu0
        %v2286 = vadd.f32 0.0, %v2285
        %v2287 = vpop.f32.mrf.mxu0
        %v2288 = vadd.f32 0.0, %v2287
        %2289 = vmatmul.bf16.gmra.mxu0 %v1611
        %v2290 = vpop.f32.mrf.mxu0
        %v2291 = vadd.f32 0.0, %v2290
        %v2292 = vpop.f32.mrf.mxu0
        %v2293 = vadd.f32 0.0, %v2292
        %2294 = vmatmul.bf16.gmra.mxu0 %v1613
        %v2295 = vpop.f32.mrf.mxu0
        %v2296 = vadd.f32 0.0, %v2295
        %v2297 = vpop.f32.mrf.mxu0
        %v2298 = vadd.f32 0.0, %v2297
        %2299 = vmatmul.bf16.gmra.mxu0 %v1615
        %v2300 = vpop.f32.mrf.mxu0
        %v2301 = vadd.f32 0.0, %v2300
        %v2302 = vpop.f32.mrf.mxu0
        %v2303 = vadd.f32 0.0, %v2302
        %2304 = vmatmul.bf16.gmra.mxu0 %v1617
        %v2305 = vpop.f32.mrf.mxu0
        %v2306 = vadd.f32 0.0, %v2305
        %v2307 = vpop.f32.mrf.mxu0
        %v2308 = vadd.f32 0.0, %v2307
        %2309 = vmatmul.bf16.gmra.mxu0 %v1619
        %v2310 = vpop.f32.mrf.mxu0
        %v2311 = vadd.f32 0.0, %v2310
        %v2312 = vpop.f32.mrf.mxu0
        %v2313 = vadd.f32 0.0, %v2312
        %2314 = vmatmul.bf16.gmra.mxu0 %v1621
        %v2315 = vpop.f32.mrf.mxu0
        %v2316 = vadd.f32 0.0, %v2315
        %v2317 = vpop.f32.mrf.mxu0
        %v2318 = vadd.f32 0.0, %v2317
        %2319 = vmatmul.bf16.gmra.mxu0 %v1623
        %v2320 = vpop.f32.mrf.mxu0
        %v2321 = vadd.f32 0.0, %v2320
        %v2322 = vpop.f32.mrf.mxu0
        %v2323 = vadd.f32 0.0, %v2322
        %2324 = vmatmul.bf16.gmra.mxu0 %v1625
        %v2325 = vpop.f32.mrf.mxu0
        %v2326 = vadd.f32 0.0, %v2325
        %v2327 = vpop.f32.mrf.mxu0
        %v2328 = vadd.f32 0.0, %v2327
        %2329 = vmatmul.bf16.gmra.mxu0 %v1627
        %v2330 = vpop.f32.mrf.mxu0
        %v2331 = vadd.f32 0.0, %v2330
        %v2332 = vpop.f32.mrf.mxu0
        %v2333 = vadd.f32 0.0, %v2332
        %2334 = vmatmul.bf16.gmra.mxu0 %v1629
        %v2335 = vpop.f32.mrf.mxu0
        %v2336 = vadd.f32 0.0, %v2335
        %v2337 = vpop.f32.mrf.mxu0
        %v2338 = vadd.f32 0.0, %v2337
        %2339 = vmatmul.bf16.gmra.mxu0 %v1631
        %v2340 = vpop.f32.mrf.mxu0
        %v2341 = vadd.f32 0.0, %v2340
        %v2342 = vpop.f32.mrf.mxu0
        %v2343 = vadd.f32 0.0, %v2342
        %2344 = vmatmul.bf16.gmra.mxu0 %v1633
        %v2345 = vpop.f32.mrf.mxu0
        %v2346 = vadd.f32 0.0, %v2345
        %v2347 = vpop.f32.mrf.mxu0
        %v2348 = vadd.f32 0.0, %v2347
        %2349 = vmatmul.bf16.gmra.mxu0 %v1635
        %v2350 = vpop.f32.mrf.mxu0
        %v2351 = vadd.f32 0.0, %v2350
        %v2352 = vpop.f32.mrf.mxu0
        %v2353 = vadd.f32 0.0, %v2352
        %2354 = vmatmul.bf16.gmra.mxu0 %v1634
        %v2355 = vpop.f32.mrf.mxu0
        %v2356 = vadd.f32 0.0, %v2355
        %v2357 = vpop.f32.mrf.mxu0
        %2358 = vdwg.mxu0
        %v2396 = vrot.slane %v2266, 2
        %v2397 = vrot.slane %v2268, 2
        %v2398 = vsel %vm1302, %v2396, %v2397
        %v2399 = vrot.slane %v2271, 2
        %v2400 = vsel %vm1302, %v2397, %v2399
        %v2401 = vrot.slane %v2273, 2
        %v2402 = vsel %vm1302, %v2399, %v2401
        %v2403 = vrot.slane %v2276, 2
        %v2404 = vsel %vm1302, %v2401, %v2403
        %v2405 = vrot.slane %v2278, 2
        %v2406 = vsel %vm1302, %v2403, %v2405
        %v2407 = vrot.slane %v2281, 2
        %v2408 = vsel %vm1302, %v2405, %v2407
        %v2409 = vrot.slane %v2283, 2
        %v2410 = vsel %vm1302, %v2407, %v2409
        %v2411 = vrot.slane %v2286, 2
        %v2412 = vsel %vm1302, %v2409, %v2411
        %v2413 = vrot.slane %v2288, 2
        %v2414 = vsel %vm1302, %v2411, %v2413
        %v2415 = vrot.slane %v2291, 2
        %v2416 = vsel %vm1302, %v2413, %v2415
        %v2417 = vrot.slane %v2293, 2
        %v2418 = vsel %vm1302, %v2415, %v2417
        %v2419 = vrot.slane %v2296, 2
        %v2420 = vsel %vm1302, %v2417, %v2419
        %v2421 = vrot.slane %v2298, 2
        %v2422 = vsel %vm1302, %v2419, %v2421
        %v2423 = vrot.slane %v2301, 2
        %v2424 = vsel %vm1302, %v2421, %v2423
        %v2425 = vrot.slane %v2303, 2
        %v2426 = vsel %vm1302, %v2423, %v2425
        %v2427 = vrot.slane %v2306, 2
        %v2428 = vsel %vm1302, %v2425, %v2427
        %v2429 = vrot.slane %v2308, 2
        %v2430 = vsel %vm1302, %v2427, %v2429
        %v2431 = vrot.slane %v2311, 2
        %v2432 = vsel %vm1302, %v2429, %v2431
        %v2433 = vrot.slane %v2313, 2
        %v2434 = vsel %vm1302, %v2431, %v2433
        %v2435 = vrot.slane %v2316, 2
        %v2436 = vsel %vm1302, %v2433, %v2435
        %v2437 = vrot.slane %v2318, 2
        %v2438 = vsel %vm1302, %v2435, %v2437
        %v2439 = vrot.slane %v2321, 2
        %v2440 = vsel %vm1302, %v2437, %v2439
        %v2441 = vrot.slane %v2323, 2
        %v2442 = vsel %vm1302, %v2439, %v2441
        %v2443 = vrot.slane %v2326, 2
        %v2444 = vsel %vm1302, %v2441, %v2443
        %v2445 = vrot.slane %v2328, 2
        %v2446 = vsel %vm1302, %v2443, %v2445
        %v2447 = vrot.slane %v2331, 2
        %v2448 = vsel %vm1302, %v2445, %v2447
        %v2449 = vrot.slane %v2333, 2
        %v2450 = vsel %vm1302, %v2447, %v2449
        %v2451 = vrot.slane %v2336, 2
        %v2452 = vsel %vm1302, %v2449, %v2451
        %v2453 = vrot.slane %v2338, 2
        %v2454 = vsel %vm1302, %v2451, %v2453
        %v2455 = vrot.slane %v2341, 2
        %v2456 = vsel %vm1302, %v2453, %v2455
        %v2457 = vrot.slane %v2343, 2
        %v2458 = vsel %vm1302, %v2455, %v2457
        %v2459 = vrot.slane %v2346, 2
        %v2460 = vsel %vm1302, %v2457, %v2459
        %v2461 = vrot.slane %v2348, 2
        %v2462 = vsel %vm1302, %v2459, %v2461
        %v2463 = vrot.slane %v2351, 2
        %v2464 = vsel %vm1302, %v2461, %v2463
        %v2465 = vrot.slane %v2353, 2
        %v2466 = vsel %vm1302, %v2463, %v2465
        %v2467 = vrot.slane %v2356, 2
        %v2468 = vsel %vm1302, %v2465, %v2467
        %v2505 = vadd.f32 %v2155, %v2398
        %v2506 = vadd.f32 %v2156, %v2400
        %v2507 = vadd.f32 %v2157, %v2402
        %v2508 = vadd.f32 %v2158, %v2404
        %v2509 = vadd.f32 %v2159, %v2406
        %v2510 = vadd.f32 %v2160, %v2408
        %v2511 = vadd.f32 %v2161, %v2410
        %v2512 = vadd.f32 %v2162, %v2412
        %v2513 = vadd.f32 %v2163, %v2414
        %v2514 = vadd.f32 %v2164, %v2416
        %v2515 = vadd.f32 %v2165, %v2418
        %v2516 = vadd.f32 %v2166, %v2420
        %v2517 = vadd.f32 %v2167, %v2422
        %v2518 = vadd.f32 %v2168, %v2424
        %v2519 = vadd.f32 %v2169, %v2426
        %v2520 = vadd.f32 %v2170, %v2428
        %v2521 = vadd.f32 %v2171, %v2430
        %v2522 = vadd.f32 %v2172, %v2432
        %v2523 = vadd.f32 %v2173, %v2434
        %v2524 = vadd.f32 %v2174, %v2436
        %v2525 = vadd.f32 %v2175, %v2438
        %v2526 = vadd.f32 %v2176, %v2440
        %v2527 = vadd.f32 %v2177, %v2442
        %v2528 = vadd.f32 %v2178, %v2444
        %v2529 = vadd.f32 %v2179, %v2446
        %v2530 = vadd.f32 %v2180, %v2448
        %v2531 = vadd.f32 %v2181, %v2450
        %v2532 = vadd.f32 %v2182, %v2452
        %v2533 = vadd.f32 %v2183, %v2454
        %v2534 = vadd.f32 %v2184, %v2456
        %v2535 = vadd.f32 %v2185, %v2458
        %v2536 = vadd.f32 %v2186, %v2460
        %v2537 = vadd.f32 %v2187, %v2462
        %v2538 = vadd.f32 %v2188, %v2464
        %v2539 = vadd.f32 %v2189, %v2466
        %v2540 = vadd.f32 %v2190, %v2468
        %v2541 = vld [vmem:[%s342 + $0x10] sm:$0xc]
        %v2542 = vld [vmem:[%s342 + $0x14] sm:$0xf]
        %v2543 = vld [vmem:[%s342 + $0x18] sm:$0xf]
        %v2544 = vld [vmem:[%s342 + $0x1c] sm:$0xf]
        %v2545 = vld [vmem:[%s342 + $0x20] sm:$0xf]
        %v2546 = vld [vmem:[%s342 + $0x24] sm:$0xf]
        %v2547 = vld [vmem:[%s342 + $0x28] sm:$0xf]
        %v2548 = vld [vmem:[%s342 + $0x2c] sm:$0xf]
        %v2549 = vld [vmem:[%s342 + $0x30] sm:$0xf]
        %v2550 = vld [vmem:[%s342 + $0x34] sm:$0xf]
        %v2551 = vld [vmem:[%s342 + $0x38] sm:$0xf]
        %v2552 = vld [vmem:[%s342 + $0x3c] sm:$0xf]
        %v2553 = vld [vmem:[%s342 + $0x40] sm:$0xf]
        %v2554 = vld [vmem:[%s342 + $0x44] sm:$0xf]
        %v2555 = vld [vmem:[%s342 + $0x48] sm:$0xf]
        %v2556 = vld [vmem:[%s342 + $0x4c] sm:$0xf]
        %v2557 = vld [vmem:[%s342 + $0x50] sm:$0xf]
        %v2558 = vld [vmem:[%s342 + $0x54] sm:$0xf]
        %v2559 = vld [vmem:[%s342 + $0x58] sm:$0xf]
        %v2560 = vld [vmem:[%s342 + $0x5c] sm:$0xf]
        %v2561 = vld [vmem:[%s342 + $0x60] sm:$0xf]
        %v2562 = vld [vmem:[%s342 + $0x64] sm:$0xf]
        %v2563 = vld [vmem:[%s342 + $0x68] sm:$0xf]
        %v2564 = vld [vmem:[%s342 + $0x6c] sm:$0xf]
        %v2565 = vld [vmem:[%s342 + $0x70] sm:$0xf]
        %v2566 = vld [vmem:[%s342 + $0x74] sm:$0xf]
        %v2567 = vld [vmem:[%s342 + $0x78] sm:$0xf]
        %v2568 = vld [vmem:[%s342 + $0x7c] sm:$0xf]
        %v2569 = vld [vmem:[%s342 + $0x80] sm:$0xf]
        %v2570 = vld [vmem:[%s342 + $0x84] sm:$0xf]
        %v2571 = vld [vmem:[%s342 + $0x88] sm:$0xf]
        %v2572 = vld [vmem:[%s342 + $0x8c] sm:$0xf]
        %v2573 = vld [vmem:[%s342 + $0x90] sm:$0xf]
        %v2574 = vld [vmem:[%s342 + $0x94] sm:$0xf]
        %v2575 = vld [vmem:[%s342 + $0x98] sm:$0xf]
        %v2576 = vld [vmem:[%s342 + $0x9c] sm:$0xf]
        %v2577 = vld [vmem:[%s342 + $0xa0] sm:$0xf]
        %v2578 = vld [vmem:[%s342 + $0xa4] sm:$0x3]
        %s2579 = scalar_lea.vmem [#allocation5], 384
        %v2580 = vld [vmem:[%s2579] sm:$0xf]
        %v2581 = vld [vmem:[%s2579 + $0x4] sm:$0xf]
        %v2582 = vld [vmem:[%s2579 + $0x8] sm:$0xf]
        %v2583 = vld [vmem:[%s2579 + $0xc] sm:$0xf]
        %v2584 = vld [vmem:[%s2579 + $0x10] sm:$0xf]
        %v2585 = vld [vmem:[%s2579 + $0x14] sm:$0xf]
        %v2586 = vld [vmem:[%s2579 + $0x18] sm:$0xf]
        %v2587 = vld [vmem:[%s2579 + $0x1c] sm:$0xf]
        %v2588 = vld [vmem:[%s2579 + $0x20] sm:$0xf]
        %v2589 = vld [vmem:[%s2579 + $0x24] sm:$0xf]
        %v2590 = vld [vmem:[%s2579 + $0x28] sm:$0xf]
        %v2591 = vld [vmem:[%s2579 + $0x2c] sm:$0xf]
        %v2592 = vld [vmem:[%s2579 + $0x30] sm:$0xf]
        %v2593 = vld [vmem:[%s2579 + $0x34] sm:$0xf]
        %v2594 = vld [vmem:[%s2579 + $0x38] sm:$0xf]
        %v2595 = vld [vmem:[%s2579 + $0x3c] sm:$0xf]
        %v2634 = vunpack.c.l.b16 %v2541
        %v2635 = vunpack.c.l.b16 %v2542
        %v2636 = vunpack.c.l.b16 %v2543
        %v2637 = vunpack.c.l.b16 %v2544
        %v2638 = vunpack.c.l.b16 %v2545
        %v2639 = vunpack.c.l.b16 %v2546
        %v2640 = vunpack.c.l.b16 %v2547
        %v2641 = vunpack.c.l.b16 %v2548
        %v2642 = vunpack.c.l.b16 %v2549
        %v2643 = vunpack.c.l.b16 %v2550
        %v2644 = vunpack.c.l.b16 %v2551
        %v2645 = vunpack.c.l.b16 %v2552
        %v2646 = vunpack.c.l.b16 %v2553
        %v2647 = vunpack.c.l.b16 %v2554
        %v2648 = vunpack.c.l.b16 %v2555
        %v2649 = vunpack.c.l.b16 %v2556
        %v2650 = vunpack.c.l.b16 %v2557
        %v2651 = vunpack.c.l.b16 %v2558
        %v2652 = vunpack.c.l.b16 %v2559
        %v2653 = vunpack.c.l.b16 %v2560
        %v2654 = vunpack.c.l.b16 %v2561
        %v2655 = vunpack.c.l.b16 %v2562
        %v2656 = vunpack.c.l.b16 %v2563
        %v2657 = vunpack.c.l.b16 %v2564
        %v2658 = vunpack.c.l.b16 %v2565
        %v2659 = vunpack.c.l.b16 %v2566
        %v2660 = vunpack.c.l.b16 %v2567
        %v2661 = vunpack.c.l.b16 %v2568
        %v2662 = vunpack.c.l.b16 %v2569
        %v2663 = vunpack.c.l.b16 %v2570
        %v2664 = vunpack.c.l.b16 %v2571
        %v2665 = vunpack.c.l.b16 %v2572
        %v2666 = vunpack.c.l.b16 %v2573
        %v2667 = vunpack.c.l.b16 %v2574
        %v2668 = vunpack.c.l.b16 %v2575
        %v2669 = vunpack.c.l.b16 %v2576
        %v2670 = vunpack.c.l.b16 %v2577
        %v2671 = vunpack.c.l.b16 %v2578
        %v2672 = vpack.c.b16 %v2635, %v2634
        %v2673 = vpack.c.b16 %v2637, %v2636
        %v2674 = vpack.c.b16 %v2639, %v2638
        %v2675 = vpack.c.b16 %v2641, %v2640
        %v2676 = vpack.c.b16 %v2643, %v2642
        %v2677 = vpack.c.b16 %v2645, %v2644
        %v2678 = vpack.c.b16 %v2647, %v2646
        %v2679 = vpack.c.b16 %v2649, %v2648
        %v2680 = vpack.c.b16 %v2651, %v2650
        %v2681 = vpack.c.b16 %v2653, %v2652
        %v2682 = vpack.c.b16 %v2655, %v2654
        %v2683 = vpack.c.b16 %v2657, %v2656
        %v2684 = vpack.c.b16 %v2659, %v2658
        %v2685 = vpack.c.b16 %v2661, %v2660
        %v2686 = vpack.c.b16 %v2663, %v2662
        %v2687 = vpack.c.b16 %v2665, %v2664
        %v2688 = vpack.c.b16 %v2667, %v2666
        %v2689 = vpack.c.b16 %v2669, %v2668
        %v2690 = vpack.c.b16 %v2671, %v2670
        %vm2691 = vcmask 1045504
        %v2692 = vrot.slane %v2672, 2
        %v2693 = vrot.slane %v2673, 2
        %v2694 = vsel %vm2691, %v2692, %v2693
        %v2695 = vrot.slane %v2674, 2
        %v2696 = vsel %vm2691, %v2693, %v2695
        %v2697 = vrot.slane %v2675, 2
        %v2698 = vsel %vm2691, %v2695, %v2697
        %v2699 = vrot.slane %v2676, 2
        %v2700 = vsel %vm2691, %v2697, %v2699
        %v2701 = vrot.slane %v2677, 2
        %v2702 = vsel %vm2691, %v2699, %v2701
        %v2703 = vrot.slane %v2678, 2
        %v2704 = vsel %vm2691, %v2701, %v2703
        %v2705 = vrot.slane %v2679, 2
        %v2706 = vsel %vm2691, %v2703, %v2705
        %v2707 = vrot.slane %v2680, 2
        %v2708 = vsel %vm2691, %v2705, %v2707
        %v2709 = vrot.slane %v2681, 2
        %v2710 = vsel %vm2691, %v2707, %v2709
        %v2711 = vrot.slane %v2682, 2
        %v2712 = vsel %vm2691, %v2709, %v2711
        %v2713 = vrot.slane %v2683, 2
        %v2714 = vsel %vm2691, %v2711, %v2713
        %v2715 = vrot.slane %v2684, 2
        %v2716 = vsel %vm2691, %v2713, %v2715
        %v2717 = vrot.slane %v2685, 2
        %v2718 = vsel %vm2691, %v2715, %v2717
        %v2719 = vrot.slane %v2686, 2
        %v2720 = vsel %vm2691, %v2717, %v2719
        %v2721 = vrot.slane %v2687, 2
        %v2722 = vsel %vm2691, %v2719, %v2721
        %v2723 = vrot.slane %v2688, 2
        %v2724 = vsel %vm2691, %v2721, %v2723
        %v2725 = vrot.slane %v2689, 2
        %v2726 = vsel %vm2691, %v2723, %v2725
        %v2727 = vrot.slane %v2690, 2
        %v2728 = vsel %vm2691, %v2725, %v2727
        %v2764 = vunpack.c.l.b16 %v2580
        %v2765 = vunpack.c.l.b16 %v2581
        %v2766 = vunpack.c.l.b16 %v2582
        %v2767 = vunpack.c.l.b16 %v2583
        %v2768 = vunpack.c.l.b16 %v2584
        %v2769 = vunpack.c.l.b16 %v2585
        %v2770 = vunpack.c.l.b16 %v2586
        %v2771 = vunpack.c.l.b16 %v2587
        %v2772 = vunpack.c.l.b16 %v2588
        %v2773 = vunpack.c.l.b16 %v2589
        %v2774 = vunpack.c.l.b16 %v2590
        %v2775 = vunpack.c.l.b16 %v2591
        %v2776 = vunpack.c.l.b16 %v2592
        %v2777 = vunpack.c.l.b16 %v2593
        %v2778 = vunpack.c.l.b16 %v2594
        %v2779 = vunpack.c.l.b16 %v2595
        %v2780 = vpack.c.b16 %v2765, %v2764
        %v2781 = vpack.c.b16 %v2767, %v2766
        %v2782 = vpack.c.b16 %v2769, %v2768
        %v2783 = vpack.c.b16 %v2771, %v2770
        %v2784 = vpack.c.b16 %v2773, %v2772
        %v2785 = vpack.c.b16 %v2775, %v2774
        %v2786 = vpack.c.b16 %v2777, %v2776
        %v2787 = vpack.c.b16 %v2779, %v2778
        %2796 = vmatpush.bf16.msra.mxu0 %v2787
        %2797 = vmatpush.bf16.msra.mxu0 %v2786
        %2798 = vmatpush.bf16.msra.mxu0 %v2785
        %2799 = vmatpush.bf16.msra.mxu0 %v2784
        %2800 = vmatpush.bf16.msra.mxu0 %v2783
        %2801 = vmatpush.bf16.msra.mxu0 %v2782
        %2802 = vmatpush.bf16.msra.mxu0 %v2781
        %2803 = vmatpush.bf16.msra.mxu0 %v2780
        %2804 = vmatmul.bf16.gmra.mxu0 %v2694
        %v2805 = vpop.f32.mrf.mxu0
        %v2806 = vadd.f32 0.0, %v2805
        %v2807 = vpop.f32.mrf.mxu0
        %v2808 = vadd.f32 0.0, %v2807
        %2809 = vmatmul.bf16.gmra.mxu0 %v2696
        %v2810 = vpop.f32.mrf.mxu0
        %v2811 = vadd.f32 0.0, %v2810
        %v2812 = vpop.f32.mrf.mxu0
        %v2813 = vadd.f32 0.0, %v2812
        %2814 = vmatmul.bf16.gmra.mxu0 %v2698
        %v2815 = vpop.f32.mrf.mxu0
        %v2816 = vadd.f32 0.0, %v2815
        %v2817 = vpop.f32.mrf.mxu0
        %v2818 = vadd.f32 0.0, %v2817
        %2819 = vmatmul.bf16.gmra.mxu0 %v2700
        %v2820 = vpop.f32.mrf.mxu0
        %v2821 = vadd.f32 0.0, %v2820
        %v2822 = vpop.f32.mrf.mxu0
        %v2823 = vadd.f32 0.0, %v2822
        %2824 = vmatmul.bf16.gmra.mxu0 %v2702
        %v2825 = vpop.f32.mrf.mxu0
        %v2826 = vadd.f32 0.0, %v2825
        %v2827 = vpop.f32.mrf.mxu0
        %v2828 = vadd.f32 0.0, %v2827
        %2829 = vmatmul.bf16.gmra.mxu0 %v2704
        %v2830 = vpop.f32.mrf.mxu0
        %v2831 = vadd.f32 0.0, %v2830
        %v2832 = vpop.f32.mrf.mxu0
        %v2833 = vadd.f32 0.0, %v2832
        %2834 = vmatmul.bf16.gmra.mxu0 %v2706
        %v2835 = vpop.f32.mrf.mxu0
        %v2836 = vadd.f32 0.0, %v2835
        %v2837 = vpop.f32.mrf.mxu0
        %v2838 = vadd.f32 0.0, %v2837
        %2839 = vmatmul.bf16.gmra.mxu0 %v2708
        %v2840 = vpop.f32.mrf.mxu0
        %v2841 = vadd.f32 0.0, %v2840
        %v2842 = vpop.f32.mrf.mxu0
        %v2843 = vadd.f32 0.0, %v2842
        %2844 = vmatmul.bf16.gmra.mxu0 %v2710
        %v2845 = vpop.f32.mrf.mxu0
        %v2846 = vadd.f32 0.0, %v2845
        %v2847 = vpop.f32.mrf.mxu0
        %v2848 = vadd.f32 0.0, %v2847
        %2849 = vmatmul.bf16.gmra.mxu0 %v2712
        %v2850 = vpop.f32.mrf.mxu0
        %v2851 = vadd.f32 0.0, %v2850
        %v2852 = vpop.f32.mrf.mxu0
        %v2853 = vadd.f32 0.0, %v2852
        %2854 = vmatmul.bf16.gmra.mxu0 %v2714
        %v2855 = vpop.f32.mrf.mxu0
        %v2856 = vadd.f32 0.0, %v2855
        %v2857 = vpop.f32.mrf.mxu0
        %v2858 = vadd.f32 0.0, %v2857
        %2859 = vmatmul.bf16.gmra.mxu0 %v2716
        %v2860 = vpop.f32.mrf.mxu0
        %v2861 = vadd.f32 0.0, %v2860
        %v2862 = vpop.f32.mrf.mxu0
        %v2863 = vadd.f32 0.0, %v2862
        %2864 = vmatmul.bf16.gmra.mxu0 %v2718
        %v2865 = vpop.f32.mrf.mxu0
        %v2866 = vadd.f32 0.0, %v2865
        %v2867 = vpop.f32.mrf.mxu0
        %v2868 = vadd.f32 0.0, %v2867
        %2869 = vmatmul.bf16.gmra.mxu0 %v2720
        %v2870 = vpop.f32.mrf.mxu0
        %v2871 = vadd.f32 0.0, %v2870
        %v2872 = vpop.f32.mrf.mxu0
        %v2873 = vadd.f32 0.0, %v2872
        %2874 = vmatmul.bf16.gmra.mxu0 %v2722
        %v2875 = vpop.f32.mrf.mxu0
        %v2876 = vadd.f32 0.0, %v2875
        %v2877 = vpop.f32.mrf.mxu0
        %v2878 = vadd.f32 0.0, %v2877
        %2879 = vmatmul.bf16.gmra.mxu0 %v2724
        %v2880 = vpop.f32.mrf.mxu0
        %v2881 = vadd.f32 0.0, %v2880
        %v2882 = vpop.f32.mrf.mxu0
        %v2883 = vadd.f32 0.0, %v2882
        %2884 = vmatmul.bf16.gmra.mxu0 %v2726
        %v2885 = vpop.f32.mrf.mxu0
        %v2886 = vadd.f32 0.0, %v2885
        %v2887 = vpop.f32.mrf.mxu0
        %v2888 = vadd.f32 0.0, %v2887
        %2889 = vmatmul.bf16.gmra.mxu0 %v2728
        %v2890 = vpop.f32.mrf.mxu0
        %v2891 = vadd.f32 0.0, %v2890
        %v2892 = vpop.f32.mrf.mxu0
        %v2893 = vadd.f32 0.0, %v2892
        %2894 = vmatmul.bf16.gmra.mxu0 %v2727
        %v2895 = vpop.f32.mrf.mxu0
        %v2896 = vpop.f32.mrf.mxu0
        %2897 = vdwg.mxu0
        %v2898 = vadd.f32 %v2505, %v2806
        %v2899 = vadd.f32 %v2506, %v2808
        %v2900 = vadd.f32 %v2507, %v2811
        %v2901 = vadd.f32 %v2508, %v2813
        %v2902 = vadd.f32 %v2509, %v2816
        %v2903 = vadd.f32 %v2510, %v2818
        %v2904 = vadd.f32 %v2511, %v2821
        %v2905 = vadd.f32 %v2512, %v2823
        %v2906 = vadd.f32 %v2513, %v2826
        %v2907 = vadd.f32 %v2514, %v2828
        %v2908 = vadd.f32 %v2515, %v2831
        %v2909 = vadd.f32 %v2516, %v2833
        %v2910 = vadd.f32 %v2517, %v2836
        %v2911 = vadd.f32 %v2518, %v2838
        %v2912 = vadd.f32 %v2519, %v2841
        %v2913 = vadd.f32 %v2520, %v2843
        %v2914 = vadd.f32 %v2521, %v2846
        %v2915 = vadd.f32 %v2522, %v2848
        %v2916 = vadd.f32 %v2523, %v2851
        %v2917 = vadd.f32 %v2524, %v2853
        %v2918 = vadd.f32 %v2525, %v2856
        %v2919 = vadd.f32 %v2526, %v2858
        %v2920 = vadd.f32 %v2527, %v2861
        %v2921 = vadd.f32 %v2528, %v2863
        %v2922 = vadd.f32 %v2529, %v2866
        %v2923 = vadd.f32 %v2530, %v2868
        %v2924 = vadd.f32 %v2531, %v2871
        %v2925 = vadd.f32 %v2532, %v2873
        %v2926 = vadd.f32 %v2533, %v2876
        %v2927 = vadd.f32 %v2534, %v2878
        %v2928 = vadd.f32 %v2535, %v2881
        %v2929 = vadd.f32 %v2536, %v2883
        %v2930 = vadd.f32 %v2537, %v2886
        %v2931 = vadd.f32 %v2538, %v2888
        %v2932 = vadd.f32 %v2539, %v2891
        %v2933 = vadd.f32 %v2540, %v2893
        %s2934 = scalar_lea.vmem [#allocation5], 448
        %v2935 = vld [vmem:[%s2934] sm:$0xf]
        %v2936 = vld [vmem:[%s2934 + $0x4] sm:$0xf]
        %v2937 = vld [vmem:[%s2934 + $0x8] sm:$0xf]
        %v2938 = vld [vmem:[%s2934 + $0xc] sm:$0xf]
        %v2939 = vld [vmem:[%s2934 + $0x10] sm:$0xf]
        %v2940 = vld [vmem:[%s2934 + $0x14] sm:$0xf]
        %v2941 = vld [vmem:[%s2934 + $0x18] sm:$0xf]
        %v2942 = vld [vmem:[%s2934 + $0x1c] sm:$0xf]
        %v2943 = vld [vmem:[%s2934 + $0x20] sm:$0xf]
        %v2944 = vld [vmem:[%s2934 + $0x24] sm:$0xf]
        %v2945 = vld [vmem:[%s2934 + $0x28] sm:$0xf]
        %v2946 = vld [vmem:[%s2934 + $0x2c] sm:$0xf]
        %v2947 = vld [vmem:[%s2934 + $0x30] sm:$0xf]
        %v2948 = vld [vmem:[%s2934 + $0x34] sm:$0xf]
        %v2949 = vld [vmem:[%s2934 + $0x38] sm:$0xf]
        %v2950 = vld [vmem:[%s2934 + $0x3c] sm:$0xf]
        %v2967 = vunpack.c.l.b16 %v2935
        %v2968 = vunpack.c.l.b16 %v2936
        %v2969 = vunpack.c.l.b16 %v2937
        %v2970 = vunpack.c.l.b16 %v2938
        %v2971 = vunpack.c.l.b16 %v2939
        %v2972 = vunpack.c.l.b16 %v2940
        %v2973 = vunpack.c.l.b16 %v2941
        %v2974 = vunpack.c.l.b16 %v2942
        %v2975 = vunpack.c.l.b16 %v2943
        %v2976 = vunpack.c.l.b16 %v2944
        %v2977 = vunpack.c.l.b16 %v2945
        %v2978 = vunpack.c.l.b16 %v2946
        %v2979 = vunpack.c.l.b16 %v2947
        %v2980 = vunpack.c.l.b16 %v2948
        %v2981 = vunpack.c.l.b16 %v2949
        %v2982 = vunpack.c.l.b16 %v2950
        %v2983 = vpack.c.b16 %v2968, %v2967
        %v2984 = vpack.c.b16 %v2970, %v2969
        %v2985 = vpack.c.b16 %v2972, %v2971
        %v2986 = vpack.c.b16 %v2974, %v2973
        %v2987 = vpack.c.b16 %v2976, %v2975
        %v2988 = vpack.c.b16 %v2978, %v2977
        %v2989 = vpack.c.b16 %v2980, %v2979
        %v2990 = vpack.c.b16 %v2982, %v2981
        %2999 = vmatpush.bf16.msra.mxu0 %v2990
        %3000 = vmatpush.bf16.msra.mxu0 %v2989
        %3001 = vmatpush.bf16.msra.mxu0 %v2988
        %3002 = vmatpush.bf16.msra.mxu0 %v2987
        %3003 = vmatpush.bf16.msra.mxu0 %v2986
        %3004 = vmatpush.bf16.msra.mxu0 %v2985
        %3005 = vmatpush.bf16.msra.mxu0 %v2984
        %3006 = vmatpush.bf16.msra.mxu0 %v2983
        %3007 = vmatmul.bf16.gmra.mxu0 %v2694
        %v3008 = vpop.f32.mrf.mxu0
        %v3009 = vadd.f32 0.0, %v3008
        %v3010 = vpop.f32.mrf.mxu0
        %v3011 = vadd.f32 0.0, %v3010
        %3012 = vmatmul.bf16.gmra.mxu0 %v2696
        %v3013 = vpop.f32.mrf.mxu0
        %v3014 = vadd.f32 0.0, %v3013
        %v3015 = vpop.f32.mrf.mxu0
        %v3016 = vadd.f32 0.0, %v3015
        %3017 = vmatmul.bf16.gmra.mxu0 %v2698
        %v3018 = vpop.f32.mrf.mxu0
        %v3019 = vadd.f32 0.0, %v3018
        %v3020 = vpop.f32.mrf.mxu0
        %v3021 = vadd.f32 0.0, %v3020
        %3022 = vmatmul.bf16.gmra.mxu0 %v2700
        %v3023 = vpop.f32.mrf.mxu0
        %v3024 = vadd.f32 0.0, %v3023
        %v3025 = vpop.f32.mrf.mxu0
        %v3026 = vadd.f32 0.0, %v3025
        %3027 = vmatmul.bf16.gmra.mxu0 %v2702
        %v3028 = vpop.f32.mrf.mxu0
        %v3029 = vadd.f32 0.0, %v3028
        %v3030 = vpop.f32.mrf.mxu0
        %v3031 = vadd.f32 0.0, %v3030
        %3032 = vmatmul.bf16.gmra.mxu0 %v2704
        %v3033 = vpop.f32.mrf.mxu0
        %v3034 = vadd.f32 0.0, %v3033
        %v3035 = vpop.f32.mrf.mxu0
        %v3036 = vadd.f32 0.0, %v3035
        %3037 = vmatmul.bf16.gmra.mxu0 %v2706
        %v3038 = vpop.f32.mrf.mxu0
        %v3039 = vadd.f32 0.0, %v3038
        %v3040 = vpop.f32.mrf.mxu0
        %v3041 = vadd.f32 0.0, %v3040
        %3042 = vmatmul.bf16.gmra.mxu0 %v2708
        %v3043 = vpop.f32.mrf.mxu0
        %v3044 = vadd.f32 0.0, %v3043
        %v3045 = vpop.f32.mrf.mxu0
        %v3046 = vadd.f32 0.0, %v3045
        %3047 = vmatmul.bf16.gmra.mxu0 %v2710
        %v3048 = vpop.f32.mrf.mxu0
        %v3049 = vadd.f32 0.0, %v3048
        %v3050 = vpop.f32.mrf.mxu0
        %v3051 = vadd.f32 0.0, %v3050
        %3052 = vmatmul.bf16.gmra.mxu0 %v2712
        %v3053 = vpop.f32.mrf.mxu0
        %v3054 = vadd.f32 0.0, %v3053
        %v3055 = vpop.f32.mrf.mxu0
        %v3056 = vadd.f32 0.0, %v3055
        %3057 = vmatmul.bf16.gmra.mxu0 %v2714
        %v3058 = vpop.f32.mrf.mxu0
        %v3059 = vadd.f32 0.0, %v3058
        %v3060 = vpop.f32.mrf.mxu0
        %v3061 = vadd.f32 0.0, %v3060
        %3062 = vmatmul.bf16.gmra.mxu0 %v2716
        %v3063 = vpop.f32.mrf.mxu0
        %v3064 = vadd.f32 0.0, %v3063
        %v3065 = vpop.f32.mrf.mxu0
        %v3066 = vadd.f32 0.0, %v3065
        %3067 = vmatmul.bf16.gmra.mxu0 %v2718
        %v3068 = vpop.f32.mrf.mxu0
        %v3069 = vadd.f32 0.0, %v3068
        %v3070 = vpop.f32.mrf.mxu0
        %v3071 = vadd.f32 0.0, %v3070
        %3072 = vmatmul.bf16.gmra.mxu0 %v2720
        %v3073 = vpop.f32.mrf.mxu0
        %v3074 = vadd.f32 0.0, %v3073
        %v3075 = vpop.f32.mrf.mxu0
        %v3076 = vadd.f32 0.0, %v3075
        %3077 = vmatmul.bf16.gmra.mxu0 %v2722
        %v3078 = vpop.f32.mrf.mxu0
        %v3079 = vadd.f32 0.0, %v3078
        %v3080 = vpop.f32.mrf.mxu0
        %v3081 = vadd.f32 0.0, %v3080
        %3082 = vmatmul.bf16.gmra.mxu0 %v2724
        %v3083 = vpop.f32.mrf.mxu0
        %v3084 = vadd.f32 0.0, %v3083
        %v3085 = vpop.f32.mrf.mxu0
        %v3086 = vadd.f32 0.0, %v3085
        %3087 = vmatmul.bf16.gmra.mxu0 %v2726
        %v3088 = vpop.f32.mrf.mxu0
        %v3089 = vadd.f32 0.0, %v3088
        %v3090 = vpop.f32.mrf.mxu0
        %v3091 = vadd.f32 0.0, %v3090
        %3092 = vmatmul.bf16.gmra.mxu0 %v2728
        %v3093 = vpop.f32.mrf.mxu0
        %v3094 = vadd.f32 0.0, %v3093
        %v3095 = vpop.f32.mrf.mxu0
        %v3096 = vadd.f32 0.0, %v3095
        %3097 = vmatmul.bf16.gmra.mxu0 %v2727
        %v3098 = vpop.f32.mrf.mxu0
        %v3099 = vadd.f32 0.0, %v3098
        %v3100 = vpop.f32.mrf.mxu0
        %3101 = vdwg.mxu0
        %v3139 = vrot.slane %v3009, 1
        %v3140 = vrot.slane %v3011, 1
        %v3141 = vsel %vm951, %v3139, %v3140
        %v3142 = vrot.slane %v3014, 1
        %v3143 = vsel %vm951, %v3140, %v3142
        %v3144 = vrot.slane %v3016, 1
        %v3145 = vsel %vm951, %v3142, %v3144
        %v3146 = vrot.slane %v3019, 1
        %v3147 = vsel %vm951, %v3144, %v3146
        %v3148 = vrot.slane %v3021, 1
        %v3149 = vsel %vm951, %v3146, %v3148
        %v3150 = vrot.slane %v3024, 1
        %v3151 = vsel %vm951, %v3148, %v3150
        %v3152 = vrot.slane %v3026, 1
        %v3153 = vsel %vm951, %v3150, %v3152
        %v3154 = vrot.slane %v3029, 1
        %v3155 = vsel %vm951, %v3152, %v3154
        %v3156 = vrot.slane %v3031, 1
        %v3157 = vsel %vm951, %v3154, %v3156
        %v3158 = vrot.slane %v3034, 1
        %v3159 = vsel %vm951, %v3156, %v3158
        %v3160 = vrot.slane %v3036, 1
        %v3161 = vsel %vm951, %v3158, %v3160
        %v3162 = vrot.slane %v3039, 1
        %v3163 = vsel %vm951, %v3160, %v3162
        %v3164 = vrot.slane %v3041, 1
        %v3165 = vsel %vm951, %v3162, %v3164
        %v3166 = vrot.slane %v3044, 1
        %v3167 = vsel %vm951, %v3164, %v3166
        %v3168 = vrot.slane %v3046, 1
        %v3169 = vsel %vm951, %v3166, %v3168
        %v3170 = vrot.slane %v3049, 1
        %v3171 = vsel %vm951, %v3168, %v3170
        %v3172 = vrot.slane %v3051, 1
        %v3173 = vsel %vm951, %v3170, %v3172
        %v3174 = vrot.slane %v3054, 1
        %v3175 = vsel %vm951, %v3172, %v3174
        %v3176 = vrot.slane %v3056, 1
        %v3177 = vsel %vm951, %v3174, %v3176
        %v3178 = vrot.slane %v3059, 1
        %v3179 = vsel %vm951, %v3176, %v3178
        %v3180 = vrot.slane %v3061, 1
        %v3181 = vsel %vm951, %v3178, %v3180
        %v3182 = vrot.slane %v3064, 1
        %v3183 = vsel %vm951, %v3180, %v3182
        %v3184 = vrot.slane %v3066, 1
        %v3185 = vsel %vm951, %v3182, %v3184
        %v3186 = vrot.slane %v3069, 1
        %v3187 = vsel %vm951, %v3184, %v3186
        %v3188 = vrot.slane %v3071, 1
        %v3189 = vsel %vm951, %v3186, %v3188
        %v3190 = vrot.slane %v3074, 1
        %v3191 = vsel %vm951, %v3188, %v3190
        %v3192 = vrot.slane %v3076, 1
        %v3193 = vsel %vm951, %v3190, %v3192
        %v3194 = vrot.slane %v3079, 1
        %v3195 = vsel %vm951, %v3192, %v3194
        %v3196 = vrot.slane %v3081, 1
        %v3197 = vsel %vm951, %v3194, %v3196
        %v3198 = vrot.slane %v3084, 1
        %v3199 = vsel %vm951, %v3196, %v3198
        %v3200 = vrot.slane %v3086, 1
        %v3201 = vsel %vm951, %v3198, %v3200
        %v3202 = vrot.slane %v3089, 1
        %v3203 = vsel %vm951, %v3200, %v3202
        %v3204 = vrot.slane %v3091, 1
        %v3205 = vsel %vm951, %v3202, %v3204
        %v3206 = vrot.slane %v3094, 1
        %v3207 = vsel %vm951, %v3204, %v3206
        %v3208 = vrot.slane %v3096, 1
        %v3209 = vsel %vm951, %v3206, %v3208
        %v3210 = vrot.slane %v3099, 1
        %v3211 = vsel %vm951, %v3208, %v3210
        %v3248 = vadd.f32 %v2898, %v3141
        %v3249 = vadd.f32 %v2899, %v3143
        %v3250 = vadd.f32 %v2900, %v3145
        %v3251 = vadd.f32 %v2901, %v3147
        %v3252 = vadd.f32 %v2902, %v3149
        %v3253 = vadd.f32 %v2903, %v3151
        %v3254 = vadd.f32 %v2904, %v3153
        %v3255 = vadd.f32 %v2905, %v3155
        %v3256 = vadd.f32 %v2906, %v3157
        %v3257 = vadd.f32 %v2907, %v3159
        %v3258 = vadd.f32 %v2908, %v3161
        %v3259 = vadd.f32 %v2909, %v3163
        %v3260 = vadd.f32 %v2910, %v3165
        %v3261 = vadd.f32 %v2911, %v3167
        %v3262 = vadd.f32 %v2912, %v3169
        %v3263 = vadd.f32 %v2913, %v3171
        %v3264 = vadd.f32 %v2914, %v3173
        %v3265 = vadd.f32 %v2915, %v3175
        %v3266 = vadd.f32 %v2916, %v3177
        %v3267 = vadd.f32 %v2917, %v3179
        %v3268 = vadd.f32 %v2918, %v3181
        %v3269 = vadd.f32 %v2919, %v3183
        %v3270 = vadd.f32 %v2920, %v3185
        %v3271 = vadd.f32 %v2921, %v3187
        %v3272 = vadd.f32 %v2922, %v3189
        %v3273 = vadd.f32 %v2923, %v3191
        %v3274 = vadd.f32 %v2924, %v3193
        %v3275 = vadd.f32 %v2925, %v3195
        %v3276 = vadd.f32 %v2926, %v3197
        %v3277 = vadd.f32 %v2927, %v3199
        %v3278 = vadd.f32 %v2928, %v3201
        %v3279 = vadd.f32 %v2929, %v3203
        %v3280 = vadd.f32 %v2930, %v3205
        %v3281 = vadd.f32 %v2931, %v3207
        %v3282 = vadd.f32 %v2932, %v3209
        %v3283 = vadd.f32 %v2933, %v3211
        %s3284 = scalar_lea.vmem [#allocation5], 512
        %v3285 = vld [vmem:[%s3284] sm:$0xf]
        %v3286 = vld [vmem:[%s3284 + $0x4] sm:$0xf]
        %v3287 = vld [vmem:[%s3284 + $0x8] sm:$0xf]
        %v3288 = vld [vmem:[%s3284 + $0xc] sm:$0xf]
        %v3289 = vld [vmem:[%s3284 + $0x10] sm:$0xf]
        %v3290 = vld [vmem:[%s3284 + $0x14] sm:$0xf]
        %v3291 = vld [vmem:[%s3284 + $0x18] sm:$0xf]
        %v3292 = vld [vmem:[%s3284 + $0x1c] sm:$0xf]
        %v3293 = vld [vmem:[%s3284 + $0x20] sm:$0xf]
        %v3294 = vld [vmem:[%s3284 + $0x24] sm:$0xf]
        %v3295 = vld [vmem:[%s3284 + $0x28] sm:$0xf]
        %v3296 = vld [vmem:[%s3284 + $0x2c] sm:$0xf]
        %v3297 = vld [vmem:[%s3284 + $0x30] sm:$0xf]
        %v3298 = vld [vmem:[%s3284 + $0x34] sm:$0xf]
        %v3299 = vld [vmem:[%s3284 + $0x38] sm:$0xf]
        %v3300 = vld [vmem:[%s3284 + $0x3c] sm:$0xf]
        %v3317 = vunpack.c.l.b16 %v3285
        %v3318 = vunpack.c.l.b16 %v3286
        %v3319 = vunpack.c.l.b16 %v3287
        %v3320 = vunpack.c.l.b16 %v3288
        %v3321 = vunpack.c.l.b16 %v3289
        %v3322 = vunpack.c.l.b16 %v3290
        %v3323 = vunpack.c.l.b16 %v3291
        %v3324 = vunpack.c.l.b16 %v3292
        %v3325 = vunpack.c.l.b16 %v3293
        %v3326 = vunpack.c.l.b16 %v3294
        %v3327 = vunpack.c.l.b16 %v3295
        %v3328 = vunpack.c.l.b16 %v3296
        %v3329 = vunpack.c.l.b16 %v3297
        %v3330 = vunpack.c.l.b16 %v3298
        %v3331 = vunpack.c.l.b16 %v3299
        %v3332 = vunpack.c.l.b16 %v3300
        %v3333 = vpack.c.b16 %v3318, %v3317
        %v3334 = vpack.c.b16 %v3320, %v3319
        %v3335 = vpack.c.b16 %v3322, %v3321
        %v3336 = vpack.c.b16 %v3324, %v3323
        %v3337 = vpack.c.b16 %v3326, %v3325
        %v3338 = vpack.c.b16 %v3328, %v3327
        %v3339 = vpack.c.b16 %v3330, %v3329
        %v3340 = vpack.c.b16 %v3332, %v3331
        %3349 = vmatpush.bf16.msra.mxu0 %v3340
        %3350 = vmatpush.bf16.msra.mxu0 %v3339
        %3351 = vmatpush.bf16.msra.mxu0 %v3338
        %3352 = vmatpush.bf16.msra.mxu0 %v3337
        %3353 = vmatpush.bf16.msra.mxu0 %v3336
        %3354 = vmatpush.bf16.msra.mxu0 %v3335
        %3355 = vmatpush.bf16.msra.mxu0 %v3334
        %3356 = vmatpush.bf16.msra.mxu0 %v3333
        %3357 = vmatmul.bf16.gmra.mxu0 %v2694
        %v3358 = vpop.f32.mrf.mxu0
        %v3359 = vadd.f32 0.0, %v3358
        %v3360 = vpop.f32.mrf.mxu0
        %v3361 = vadd.f32 0.0, %v3360
        %3362 = vmatmul.bf16.gmra.mxu0 %v2696
        %v3363 = vpop.f32.mrf.mxu0
        %v3364 = vadd.f32 0.0, %v3363
        %v3365 = vpop.f32.mrf.mxu0
        %v3366 = vadd.f32 0.0, %v3365
        %3367 = vmatmul.bf16.gmra.mxu0 %v2698
        %v3368 = vpop.f32.mrf.mxu0
        %v3369 = vadd.f32 0.0, %v3368
        %v3370 = vpop.f32.mrf.mxu0
        %v3371 = vadd.f32 0.0, %v3370
        %3372 = vmatmul.bf16.gmra.mxu0 %v2700
        %v3373 = vpop.f32.mrf.mxu0
        %v3374 = vadd.f32 0.0, %v3373
        %v3375 = vpop.f32.mrf.mxu0
        %v3376 = vadd.f32 0.0, %v3375
        %3377 = vmatmul.bf16.gmra.mxu0 %v2702
        %v3378 = vpop.f32.mrf.mxu0
        %v3379 = vadd.f32 0.0, %v3378
        %v3380 = vpop.f32.mrf.mxu0
        %v3381 = vadd.f32 0.0, %v3380
        %3382 = vmatmul.bf16.gmra.mxu0 %v2704
        %v3383 = vpop.f32.mrf.mxu0
        %v3384 = vadd.f32 0.0, %v3383
        %v3385 = vpop.f32.mrf.mxu0
        %v3386 = vadd.f32 0.0, %v3385
        %3387 = vmatmul.bf16.gmra.mxu0 %v2706
        %v3388 = vpop.f32.mrf.mxu0
        %v3389 = vadd.f32 0.0, %v3388
        %v3390 = vpop.f32.mrf.mxu0
        %v3391 = vadd.f32 0.0, %v3390
        %3392 = vmatmul.bf16.gmra.mxu0 %v2708
        %v3393 = vpop.f32.mrf.mxu0
        %v3394 = vadd.f32 0.0, %v3393
        %v3395 = vpop.f32.mrf.mxu0
        %v3396 = vadd.f32 0.0, %v3395
        %3397 = vmatmul.bf16.gmra.mxu0 %v2710
        %v3398 = vpop.f32.mrf.mxu0
        %v3399 = vadd.f32 0.0, %v3398
        %v3400 = vpop.f32.mrf.mxu0
        %v3401 = vadd.f32 0.0, %v3400
        %3402 = vmatmul.bf16.gmra.mxu0 %v2712
        %v3403 = vpop.f32.mrf.mxu0
        %v3404 = vadd.f32 0.0, %v3403
        %v3405 = vpop.f32.mrf.mxu0
        %v3406 = vadd.f32 0.0, %v3405
        %3407 = vmatmul.bf16.gmra.mxu0 %v2714
        %v3408 = vpop.f32.mrf.mxu0
        %v3409 = vadd.f32 0.0, %v3408
        %v3410 = vpop.f32.mrf.mxu0
        %v3411 = vadd.f32 0.0, %v3410
        %3412 = vmatmul.bf16.gmra.mxu0 %v2716
        %v3413 = vpop.f32.mrf.mxu0
        %v3414 = vadd.f32 0.0, %v3413
        %v3415 = vpop.f32.mrf.mxu0
        %v3416 = vadd.f32 0.0, %v3415
        %3417 = vmatmul.bf16.gmra.mxu0 %v2718
        %v3418 = vpop.f32.mrf.mxu0
        %v3419 = vadd.f32 0.0, %v3418
        %v3420 = vpop.f32.mrf.mxu0
        %v3421 = vadd.f32 0.0, %v3420
        %3422 = vmatmul.bf16.gmra.mxu0 %v2720
        %v3423 = vpop.f32.mrf.mxu0
        %v3424 = vadd.f32 0.0, %v3423
        %v3425 = vpop.f32.mrf.mxu0
        %v3426 = vadd.f32 0.0, %v3425
        %3427 = vmatmul.bf16.gmra.mxu0 %v2722
        %v3428 = vpop.f32.mrf.mxu0
        %v3429 = vadd.f32 0.0, %v3428
        %v3430 = vpop.f32.mrf.mxu0
        %v3431 = vadd.f32 0.0, %v3430
        %3432 = vmatmul.bf16.gmra.mxu0 %v2724
        %v3433 = vpop.f32.mrf.mxu0
        %v3434 = vadd.f32 0.0, %v3433
        %v3435 = vpop.f32.mrf.mxu0
        %v3436 = vadd.f32 0.0, %v3435
        %3437 = vmatmul.bf16.gmra.mxu0 %v2726
        %v3438 = vpop.f32.mrf.mxu0
        %v3439 = vadd.f32 0.0, %v3438
        %v3440 = vpop.f32.mrf.mxu0
        %v3441 = vadd.f32 0.0, %v3440
        %3442 = vmatmul.bf16.gmra.mxu0 %v2728
        %v3443 = vpop.f32.mrf.mxu0
        %v3444 = vadd.f32 0.0, %v3443
        %v3445 = vpop.f32.mrf.mxu0
        %v3446 = vadd.f32 0.0, %v3445
        %3447 = vmatmul.bf16.gmra.mxu0 %v2727
        %v3448 = vpop.f32.mrf.mxu0
        %v3449 = vadd.f32 0.0, %v3448
        %v3450 = vpop.f32.mrf.mxu0
        %3451 = vdwg.mxu0
        %v3489 = vrot.slane %v3359, 2
        %v3490 = vrot.slane %v3361, 2
        %v3491 = vsel %vm1302, %v3489, %v3490
        %v3492 = vrot.slane %v3364, 2
        %v3493 = vsel %vm1302, %v3490, %v3492
        %v3494 = vrot.slane %v3366, 2
        %v3495 = vsel %vm1302, %v3492, %v3494
        %v3496 = vrot.slane %v3369, 2
        %v3497 = vsel %vm1302, %v3494, %v3496
        %v3498 = vrot.slane %v3371, 2
        %v3499 = vsel %vm1302, %v3496, %v3498
        %v3500 = vrot.slane %v3374, 2
        %v3501 = vsel %vm1302, %v3498, %v3500
        %v3502 = vrot.slane %v3376, 2
        %v3503 = vsel %vm1302, %v3500, %v3502
        %v3504 = vrot.slane %v3379, 2
        %v3505 = vsel %vm1302, %v3502, %v3504
        %v3506 = vrot.slane %v3381, 2
        %v3507 = vsel %vm1302, %v3504, %v3506
        %v3508 = vrot.slane %v3384, 2
        %v3509 = vsel %vm1302, %v3506, %v3508
        %v3510 = vrot.slane %v3386, 2
        %v3511 = vsel %vm1302, %v3508, %v3510
        %v3512 = vrot.slane %v3389, 2
        %v3513 = vsel %vm1302, %v3510, %v3512
        %v3514 = vrot.slane %v3391, 2
        %v3515 = vsel %vm1302, %v3512, %v3514
        %v3516 = vrot.slane %v3394, 2
        %v3517 = vsel %vm1302, %v3514, %v3516
        %v3518 = vrot.slane %v3396, 2
        %v3519 = vsel %vm1302, %v3516, %v3518
        %v3520 = vrot.slane %v3399, 2
        %v3521 = vsel %vm1302, %v3518, %v3520
        %v3522 = vrot.slane %v3401, 2
        %v3523 = vsel %vm1302, %v3520, %v3522
        %v3524 = vrot.slane %v3404, 2
        %v3525 = vsel %vm1302, %v3522, %v3524
        %v3526 = vrot.slane %v3406, 2
        %v3527 = vsel %vm1302, %v3524, %v3526
        %v3528 = vrot.slane %v3409, 2
        %v3529 = vsel %vm1302, %v3526, %v3528
        %v3530 = vrot.slane %v3411, 2
        %v3531 = vsel %vm1302, %v3528, %v3530
        %v3532 = vrot.slane %v3414, 2
        %v3533 = vsel %vm1302, %v3530, %v3532
        %v3534 = vrot.slane %v3416, 2
        %v3535 = vsel %vm1302, %v3532, %v3534
        %v3536 = vrot.slane %v3419, 2
        %v3537 = vsel %vm1302, %v3534, %v3536
        %v3538 = vrot.slane %v3421, 2
        %v3539 = vsel %vm1302, %v3536, %v3538
        %v3540 = vrot.slane %v3424, 2
        %v3541 = vsel %vm1302, %v3538, %v3540
        %v3542 = vrot.slane %v3426, 2
        %v3543 = vsel %vm1302, %v3540, %v3542
        %v3544 = vrot.slane %v3429, 2
        %v3545 = vsel %vm1302, %v3542, %v3544
        %v3546 = vrot.slane %v3431, 2
        %v3547 = vsel %vm1302, %v3544, %v3546
        %v3548 = vrot.slane %v3434, 2
        %v3549 = vsel %vm1302, %v3546, %v3548
        %v3550 = vrot.slane %v3436, 2
        %v3551 = vsel %vm1302, %v3548, %v3550
        %v3552 = vrot.slane %v3439, 2
        %v3553 = vsel %vm1302, %v3550, %v3552
        %v3554 = vrot.slane %v3441, 2
        %v3555 = vsel %vm1302, %v3552, %v3554
        %v3556 = vrot.slane %v3444, 2
        %v3557 = vsel %vm1302, %v3554, %v3556
        %v3558 = vrot.slane %v3446, 2
        %v3559 = vsel %vm1302, %v3556, %v3558
        %v3560 = vrot.slane %v3449, 2
        %v3561 = vsel %vm1302, %v3558, %v3560
        %v3598 = vadd.f32 %v3248, %v3491
        %v3599 = vadd.f32 %v3249, %v3493
        %v3600 = vadd.f32 %v3250, %v3495
        %v3601 = vadd.f32 %v3251, %v3497
        %v3602 = vadd.f32 %v3252, %v3499
        %v3603 = vadd.f32 %v3253, %v3501
        %v3604 = vadd.f32 %v3254, %v3503
        %v3605 = vadd.f32 %v3255, %v3505
        %v3606 = vadd.f32 %v3256, %v3507
        %v3607 = vadd.f32 %v3257, %v3509
        %v3608 = vadd.f32 %v3258, %v3511
        %v3609 = vadd.f32 %v3259, %v3513
        %v3610 = vadd.f32 %v3260, %v3515
        %v3611 = vadd.f32 %v3261, %v3517
        %v3612 = vadd.f32 %v3262, %v3519
        %v3613 = vadd.f32 %v3263, %v3521
        %v3614 = vadd.f32 %v3264, %v3523
        %v3615 = vadd.f32 %v3265, %v3525
        %v3616 = vadd.f32 %v3266, %v3527
        %v3617 = vadd.f32 %v3267, %v3529
        %v3618 = vadd.f32 %v3268, %v3531
        %v3619 = vadd.f32 %v3269, %v3533
        %v3620 = vadd.f32 %v3270, %v3535
        %v3621 = vadd.f32 %v3271, %v3537
        %v3622 = vadd.f32 %v3272, %v3539
        %v3623 = vadd.f32 %v3273, %v3541
        %v3624 = vadd.f32 %v3274, %v3543
        %v3625 = vadd.f32 %v3275, %v3545
        %v3626 = vadd.f32 %v3276, %v3547
        %v3627 = vadd.f32 %v3277, %v3549
        %v3628 = vadd.f32 %v3278, %v3551
        %v3629 = vadd.f32 %v3279, %v3553
        %v3630 = vadd.f32 %v3280, %v3555
        %v3631 = vadd.f32 %v3281, %v3557
        %v3632 = vadd.f32 %v3282, %v3559
        %v3633 = vadd.f32 %v3283, %v3561
        %v3634 = vld [vmem:[%s3] sm:$0x1]
        %v3636 = vperm.slane %v3634, 0
        %v3638 = vadd.f32 %v3598, %v3636
        %v3639 = vadd.f32 %v3599, %v3636
        %v3640 = vadd.f32 %v3600, %v3636
        %v3641 = vadd.f32 %v3601, %v3636
        %v3642 = vadd.f32 %v3602, %v3636
        %v3643 = vadd.f32 %v3603, %v3636
        %v3644 = vadd.f32 %v3604, %v3636
        %v3645 = vadd.f32 %v3605, %v3636
        %v3646 = vadd.f32 %v3606, %v3636
        %v3647 = vadd.f32 %v3607, %v3636
        %v3648 = vadd.f32 %v3608, %v3636
        %v3649 = vadd.f32 %v3609, %v3636
        %v3650 = vadd.f32 %v3610, %v3636
        %v3651 = vadd.f32 %v3611, %v3636
        %v3652 = vadd.f32 %v3612, %v3636
        %v3653 = vadd.f32 %v3613, %v3636
        %v3654 = vadd.f32 %v3614, %v3636
        %v3655 = vadd.f32 %v3615, %v3636
        %v3656 = vadd.f32 %v3616, %v3636
        %v3657 = vadd.f32 %v3617, %v3636
        %v3658 = vadd.f32 %v3618, %v3636
        %v3659 = vadd.f32 %v3619, %v3636
        %v3660 = vadd.f32 %v3620, %v3636
        %v3661 = vadd.f32 %v3621, %v3636
        %v3662 = vadd.f32 %v3622, %v3636
        %v3663 = vadd.f32 %v3623, %v3636
        %v3664 = vadd.f32 %v3624, %v3636
        %v3665 = vadd.f32 %v3625, %v3636
        %v3666 = vadd.f32 %v3626, %v3636
        %v3667 = vadd.f32 %v3627, %v3636
        %v3668 = vadd.f32 %v3628, %v3636
        %v3669 = vadd.f32 %v3629, %v3636
        %v3670 = vadd.f32 %v3630, %v3636
        %v3671 = vadd.f32 %v3631, %v3636
        %v3672 = vadd.f32 %v3632, %v3636
        %v3673 = vadd.f32 %v3633, %v3636
        %v3674 = vld [vmem:[%s0] sm:$0xff]
        %v3675 = vld [vmem:[%s0 + $0x8] sm:$0xff]
        %v3676 = vld [vmem:[%s0 + $0x10] sm:$0xff]
        %v3677 = vld [vmem:[%s0 + $0x18] sm:$0xff]
        %v3678 = vld [vmem:[%s0 + $0x20] sm:$0xff]
        %v3679 = vld [vmem:[%s0 + $0x28] sm:$0xff]
        %v3680 = vld [vmem:[%s0 + $0x30] sm:$0xff]
        %v3681 = vld [vmem:[%s0 + $0x38] sm:$0xff]
        %v3682 = vld [vmem:[%s0 + $0x40] sm:$0xff]
        %v3683 = vld [vmem:[%s0 + $0x48] sm:$0xff]
        %v3684 = vld [vmem:[%s0 + $0x50] sm:$0xff]
        %v3685 = vld [vmem:[%s0 + $0x58] sm:$0xff]
        %v3686 = vld [vmem:[%s0 + $0x60] sm:$0xff]
        %v3687 = vld [vmem:[%s0 + $0x68] sm:$0xff]
        %v3688 = vld [vmem:[%s0 + $0x70] sm:$0xff]
        %v3689 = vld [vmem:[%s0 + $0x78] sm:$0xff]
        %v3690 = vld [vmem:[%s0 + $0x80] sm:$0xff]
        %v3691 = vld [vmem:[%s0 + $0x88] sm:$0xff]
        %v3692 = vld [vmem:[%s0 + $0x90] sm:$0xff]
        %v3693 = vld [vmem:[%s0 + $0x98] sm:$0xff]
        %v3694 = vld [vmem:[%s0 + $0xa0] sm:$0xff]
        %v3695 = vld [vmem:[%s0 + $0xa8] sm:$0xff]
        %v3696 = vld [vmem:[%s0 + $0xb0] sm:$0xff]
        %v3697 = vld [vmem:[%s0 + $0xb8] sm:$0xff]
        %v3698 = vld [vmem:[%s0 + $0xc0] sm:$0xff]
        %v3699 = vld [vmem:[%s0 + $0xc8] sm:$0xff]
        %v3700 = vld [vmem:[%s0 + $0xd0] sm:$0xff]
        %v3701 = vld [vmem:[%s0 + $0xd8] sm:$0xff]
        %v3702 = vld [vmem:[%s0 + $0xe0] sm:$0xff]
        %v3703 = vld [vmem:[%s0 + $0xe8] sm:$0xff]
        %v3704 = vld [vmem:[%s0 + $0xf0] sm:$0xff]
        %v3705 = vld [vmem:[%s0 + $0xf8] sm:$0xff]
        %v3706 = vld [vmem:[%s0 + $0x100] sm:$0xff]
        %v3707 = vld [vmem:[%s0 + $0x108] sm:$0xff]
        %v3708 = vld [vmem:[%s0 + $0x110] sm:$0xff]
        %v3709 = vld [vmem:[%s0 + $0x118] sm:$0xff]
        %3711 = vset.pattern.permute.xlu0 0
        %3712 = vperm.xlu0 %3711, %v3674
        %v3713 = vpop.permute.xlu0 %3712
        %3716 = vset.pattern.permute.xlu0 0
        %3717 = vperm.xlu0 %3716, %v3675
        %v3718 = vpop.permute.xlu0 %3717
        %3721 = vset.pattern.permute.xlu0 0
        %3722 = vperm.xlu0 %3721, %v3676
        %v3723 = vpop.permute.xlu0 %3722
        %3726 = vset.pattern.permute.xlu0 0
        %3727 = vperm.xlu0 %3726, %v3677
        %v3728 = vpop.permute.xlu0 %3727
        %3731 = vset.pattern.permute.xlu0 0
        %3732 = vperm.xlu0 %3731, %v3678
        %v3733 = vpop.permute.xlu0 %3732
        %3736 = vset.pattern.permute.xlu0 0
        %3737 = vperm.xlu0 %3736, %v3679
        %v3738 = vpop.permute.xlu0 %3737
        %3741 = vset.pattern.permute.xlu0 0
        %3742 = vperm.xlu0 %3741, %v3680
        %v3743 = vpop.permute.xlu0 %3742
        %3746 = vset.pattern.permute.xlu0 0
        %3747 = vperm.xlu0 %3746, %v3681
        %v3748 = vpop.permute.xlu0 %3747
        %3751 = vset.pattern.permute.xlu0 0
        %3752 = vperm.xlu0 %3751, %v3682
        %v3753 = vpop.permute.xlu0 %3752
        %3756 = vset.pattern.permute.xlu0 0
        %3757 = vperm.xlu0 %3756, %v3683
        %v3758 = vpop.permute.xlu0 %3757
        %3761 = vset.pattern.permute.xlu0 0
        %3762 = vperm.xlu0 %3761, %v3684
        %v3763 = vpop.permute.xlu0 %3762
        %3766 = vset.pattern.permute.xlu0 0
        %3767 = vperm.xlu0 %3766, %v3685
        %v3768 = vpop.permute.xlu0 %3767
        %3771 = vset.pattern.permute.xlu0 0
        %3772 = vperm.xlu0 %3771, %v3686
        %v3773 = vpop.permute.xlu0 %3772
        %3776 = vset.pattern.permute.xlu0 0
        %3777 = vperm.xlu0 %3776, %v3687
        %v3778 = vpop.permute.xlu0 %3777
        %3781 = vset.pattern.permute.xlu0 0
        %3782 = vperm.xlu0 %3781, %v3688
        %v3783 = vpop.permute.xlu0 %3782
        %3786 = vset.pattern.permute.xlu0 0
        %3787 = vperm.xlu0 %3786, %v3689
        %v3788 = vpop.permute.xlu0 %3787
        %3791 = vset.pattern.permute.xlu0 0
        %3792 = vperm.xlu0 %3791, %v3690
        %v3793 = vpop.permute.xlu0 %3792
        %3796 = vset.pattern.permute.xlu0 0
        %3797 = vperm.xlu0 %3796, %v3691
        %v3798 = vpop.permute.xlu0 %3797
        %3801 = vset.pattern.permute.xlu0 0
        %3802 = vperm.xlu0 %3801, %v3692
        %v3803 = vpop.permute.xlu0 %3802
        %3806 = vset.pattern.permute.xlu0 0
        %3807 = vperm.xlu0 %3806, %v3693
        %v3808 = vpop.permute.xlu0 %3807
        %3811 = vset.pattern.permute.xlu0 0
        %3812 = vperm.xlu0 %3811, %v3694
        %v3813 = vpop.permute.xlu0 %3812
        %3816 = vset.pattern.permute.xlu0 0
        %3817 = vperm.xlu0 %3816, %v3695
        %v3818 = vpop.permute.xlu0 %3817
        %3821 = vset.pattern.permute.xlu0 0
        %3822 = vperm.xlu0 %3821, %v3696
        %v3823 = vpop.permute.xlu0 %3822
        %3826 = vset.pattern.permute.xlu0 0
        %3827 = vperm.xlu0 %3826, %v3697
        %v3828 = vpop.permute.xlu0 %3827
        %3831 = vset.pattern.permute.xlu0 0
        %3832 = vperm.xlu0 %3831, %v3698
        %v3833 = vpop.permute.xlu0 %3832
        %3836 = vset.pattern.permute.xlu0 0
        %3837 = vperm.xlu0 %3836, %v3699
        %v3838 = vpop.permute.xlu0 %3837
        %3841 = vset.pattern.permute.xlu0 0
        %3842 = vperm.xlu0 %3841, %v3700
        %v3843 = vpop.permute.xlu0 %3842
        %3846 = vset.pattern.permute.xlu0 0
        %3847 = vperm.xlu0 %3846, %v3701
        %v3848 = vpop.permute.xlu0 %3847
        %3851 = vset.pattern.permute.xlu0 0
        %3852 = vperm.xlu0 %3851, %v3702
        %v3853 = vpop.permute.xlu0 %3852
        %3856 = vset.pattern.permute.xlu0 0
        %3857 = vperm.xlu0 %3856, %v3703
        %v3858 = vpop.permute.xlu0 %3857
        %3861 = vset.pattern.permute.xlu0 0
        %3862 = vperm.xlu0 %3861, %v3704
        %v3863 = vpop.permute.xlu0 %3862
        %3866 = vset.pattern.permute.xlu0 0
        %3867 = vperm.xlu0 %3866, %v3705
        %v3868 = vpop.permute.xlu0 %3867
        %3871 = vset.pattern.permute.xlu0 0
        %3872 = vperm.xlu0 %3871, %v3706
        %v3873 = vpop.permute.xlu0 %3872
        %3876 = vset.pattern.permute.xlu0 0
        %3877 = vperm.xlu0 %3876, %v3707
        %v3878 = vpop.permute.xlu0 %3877
        %3881 = vset.pattern.permute.xlu0 0
        %3882 = vperm.xlu0 %3881, %v3708
        %v3883 = vpop.permute.xlu0 %3882
        %3886 = vset.pattern.permute.xlu0 0
        %3887 = vperm.xlu0 %3886, %v3709
        %v3888 = vpop.permute.xlu0 %3887
        %v3890 = vmul.f32 %v3638, %v3713
        %v3891 = vmul.f32 %v3639, %v3718
        %v3892 = vmul.f32 %v3640, %v3723
        %v3893 = vmul.f32 %v3641, %v3728
        %v3894 = vmul.f32 %v3642, %v3733
        %v3895 = vmul.f32 %v3643, %v3738
        %v3896 = vmul.f32 %v3644, %v3743
        %v3897 = vmul.f32 %v3645, %v3748
        %v3898 = vmul.f32 %v3646, %v3753
        %v3899 = vmul.f32 %v3647, %v3758
        %v3900 = vmul.f32 %v3648, %v3763
        %v3901 = vmul.f32 %v3649, %v3768
        %v3902 = vmul.f32 %v3650, %v3773
        %v3903 = vmul.f32 %v3651, %v3778
        %v3904 = vmul.f32 %v3652, %v3783
        %v3905 = vmul.f32 %v3653, %v3788
        %v3906 = vmul.f32 %v3654, %v3793
        %v3907 = vmul.f32 %v3655, %v3798
        %v3908 = vmul.f32 %v3656, %v3803
        %v3909 = vmul.f32 %v3657, %v3808
        %v3910 = vmul.f32 %v3658, %v3813
        %v3911 = vmul.f32 %v3659, %v3818
        %v3912 = vmul.f32 %v3660, %v3823
        %v3913 = vmul.f32 %v3661, %v3828
        %v3914 = vmul.f32 %v3662, %v3833
        %v3915 = vmul.f32 %v3663, %v3838
        %v3916 = vmul.f32 %v3664, %v3843
        %v3917 = vmul.f32 %v3665, %v3848
        %v3918 = vmul.f32 %v3666, %v3853
        %v3919 = vmul.f32 %v3667, %v3858
        %v3920 = vmul.f32 %v3668, %v3863
        %v3921 = vmul.f32 %v3669, %v3868
        %v3922 = vmul.f32 %v3670, %v3873
        %v3923 = vmul.f32 %v3671, %v3878
        %v3924 = vmul.f32 %v3672, %v3883
        %v3925 = vmul.f32 %v3673, %v3888
        %v3926 = vadd.f32 %v3890, %v3891
        %v3927 = vadd.f32 %v3926, %v3892
        %v3928 = vadd.f32 %v3927, %v3893
        %v3929 = vadd.f32 %v3928, %v3894
        %v3930 = vadd.f32 %v3929, %v3895
        %v3931 = vadd.f32 %v3930, %v3896
        %v3932 = vadd.f32 %v3931, %v3897
        %v3933 = vadd.f32 %v3932, %v3898
        %v3934 = vadd.f32 %v3933, %v3899
        %v3935 = vadd.f32 %v3934, %v3900
        %v3936 = vadd.f32 %v3935, %v3901
        %v3937 = vadd.f32 %v3936, %v3902
        %v3938 = vadd.f32 %v3937, %v3903
        %v3939 = vadd.f32 %v3938, %v3904
        %v3940 = vadd.f32 %v3939, %v3905
        %v3941 = vadd.f32 %v3940, %v3906
        %v3942 = vadd.f32 %v3941, %v3907
        %v3943 = vadd.f32 %v3942, %v3908
        %v3944 = vadd.f32 %v3943, %v3909
        %v3945 = vadd.f32 %v3944, %v3910
        %v3946 = vadd.f32 %v3945, %v3911
        %v3947 = vadd.f32 %v3946, %v3912
        %v3948 = vadd.f32 %v3947, %v3913
        %v3949 = vadd.f32 %v3948, %v3914
        %v3950 = vadd.f32 %v3949, %v3915
        %v3951 = vadd.f32 %v3950, %v3916
        %v3952 = vadd.f32 %v3951, %v3917
        %v3953 = vadd.f32 %v3952, %v3918
        %v3954 = vadd.f32 %v3953, %v3919
        %v3955 = vadd.f32 %v3954, %v3920
        %v3956 = vadd.f32 %v3955, %v3921
        %v3957 = vadd.f32 %v3956, %v3922
        %v3958 = vadd.f32 %v3957, %v3923
        %v3959 = vadd.f32 %v3958, %v3924
        %v3960 = vadd.f32 %v3959, %v3925
        %v3961 = vrot.slane %v3960, 4
        %v3962 = vadd.f32 %v3960, %v3961
        %v3963 = vrot.slane %v3962, 2
        %v3964 = vadd.f32 %v3962, %v3963
        %v3965 = vrot.slane %v3964, 1
        %v3966 = vadd.f32 %v3964, %v3965
        %v3967 = vmul.f32 %v3966, 0.00390625
        %3968 = vst [vmem:[%s388] sm:$0x1] %v3967
        %v3969 = vld [vmem:[%s4] sm:$0x1]
        %v3970 = vmul.f32 %v3967, %v3969
        %v3971 = vld [vmem:[%s5] sm:$0x1]
        %v3972 = vadd.f32 %v3970, %v3971
        %3973 = vst [vmem:[%s394] sm:$0x1] %v3972
        %v3974 = vmax.f32 %v3890, 0.0
        %v3975 = vmax.f32 %v3891, 0.0
        %v3976 = vmax.f32 %v3892, 0.0
        %v3977 = vmax.f32 %v3893, 0.0
        %v3978 = vmax.f32 %v3894, 0.0
        %v3979 = vmax.f32 %v3895, 0.0
        %v3980 = vmax.f32 %v3896, 0.0
        %v3981 = vmax.f32 %v3897, 0.0
        %v3982 = vmax.f32 %v3898, 0.0
        %v3983 = vmax.f32 %v3899, 0.0
        %v3984 = vmax.f32 %v3900, 0.0
        %v3985 = vmax.f32 %v3901, 0.0
        %v3986 = vmax.f32 %v3902, 0.0
        %v3987 = vmax.f32 %v3903, 0.0
        %v3988 = vmax.f32 %v3904, 0.0
        %v3989 = vmax.f32 %v3905, 0.0
        %v3990 = vmax.f32 %v3906, 0.0
        %v3991 = vmax.f32 %v3907, 0.0
        %v3992 = vmax.f32 %v3908, 0.0
        %v3993 = vmax.f32 %v3909, 0.0
        %v3994 = vmax.f32 %v3910, 0.0
        %v3995 = vmax.f32 %v3911, 0.0
        %v3996 = vmax.f32 %v3912, 0.0
        %v3997 = vmax.f32 %v3913, 0.0
        %v3998 = vmax.f32 %v3914, 0.0
        %v3999 = vmax.f32 %v3915, 0.0
        %v4000 = vmax.f32 %v3916, 0.0
        %v4001 = vmax.f32 %v3917, 0.0
        %v4002 = vmax.f32 %v3918, 0.0
        %v4003 = vmax.f32 %v3919, 0.0
        %v4004 = vmax.f32 %v3920, 0.0
        %v4005 = vmax.f32 %v3921, 0.0
        %v4006 = vmax.f32 %v3922, 0.0
        %v4007 = vmax.f32 %v3923, 0.0
        %v4008 = vmax.f32 %v3924, 0.0
        %v4009 = vmax.f32 %v3925, 0.0
        %v4010 = vadd.f32 %v3974, %v3975
        %v4011 = vadd.f32 %v4010, %v3976
        %v4012 = vadd.f32 %v4011, %v3977
        %v4013 = vadd.f32 %v4012, %v3978
        %v4014 = vadd.f32 %v4013, %v3979
        %v4015 = vadd.f32 %v4014, %v3980
        %v4016 = vadd.f32 %v4015, %v3981
        %v4017 = vadd.f32 %v4016, %v3982
        %v4018 = vadd.f32 %v4017, %v3983
        %v4019 = vadd.f32 %v4018, %v3984
        %v4020 = vadd.f32 %v4019, %v3985
        %v4021 = vadd.f32 %v4020, %v3986
        %v4022 = vadd.f32 %v4021, %v3987
        %v4023 = vadd.f32 %v4022, %v3988
        %v4024 = vadd.f32 %v4023, %v3989
        %v4025 = vadd.f32 %v4024, %v3990
        %v4026 = vadd.f32 %v4025, %v3991
        %v4027 = vadd.f32 %v4026, %v3992
        %v4028 = vadd.f32 %v4027, %v3993
        %v4029 = vadd.f32 %v4028, %v3994
        %v4030 = vadd.f32 %v4029, %v3995
        %v4031 = vadd.f32 %v4030, %v3996
        %v4032 = vadd.f32 %v4031, %v3997
        %v4033 = vadd.f32 %v4032, %v3998
        %v4034 = vadd.f32 %v4033, %v3999
        %v4035 = vadd.f32 %v4034, %v4000
        %v4036 = vadd.f32 %v4035, %v4001
        %v4037 = vadd.f32 %v4036, %v4002
        %v4038 = vadd.f32 %v4037, %v4003
        %v4039 = vadd.f32 %v4038, %v4004
        %v4040 = vadd.f32 %v4039, %v4005
        %v4041 = vadd.f32 %v4040, %v4006
        %v4042 = vadd.f32 %v4041, %v4007
        %v4043 = vadd.f32 %v4042, %v4008
        %v4044 = vadd.f32 %v4043, %v4009
        %v4045 = vrot.slane %v4044, 4
        %v4046 = vadd.f32 %v4044, %v4045
        %v4047 = vrot.slane %v4046, 2
        %v4048 = vadd.f32 %v4046, %v4047
        %v4049 = vrot.slane %v4048, 1
        %v4050 = vadd.f32 %v4048, %v4049
        %v4051 = vmul.f32 %v4050, 0.00390625
        %4052 = vst [vmem:[%s382] sm:$0x1] %v4051
        %vm4089 = vcmask 1042432
        %v4090 = vrot.slane %v3890, 5
        %v4091 = vrot.slane %v3891, 5
        %v4092 = vsel %vm4089, %v4090, %v4091
        %v4093 = vrot.slane %v3892, 5
        %v4094 = vsel %vm4089, %v4091, %v4093
        %v4095 = vrot.slane %v3893, 5
        %v4096 = vsel %vm4089, %v4093, %v4095
        %v4097 = vrot.slane %v3894, 5
        %v4098 = vsel %vm4089, %v4095, %v4097
        %v4099 = vrot.slane %v3895, 5
        %v4100 = vsel %vm4089, %v4097, %v4099
        %v4101 = vrot.slane %v3896, 5
        %v4102 = vsel %vm4089, %v4099, %v4101
        %v4103 = vrot.slane %v3897, 5
        %v4104 = vsel %vm4089, %v4101, %v4103
        %v4105 = vrot.slane %v3898, 5
        %v4106 = vsel %vm4089, %v4103, %v4105
        %v4107 = vrot.slane %v3899, 5
        %v4108 = vsel %vm4089, %v4105, %v4107
        %v4109 = vrot.slane %v3900, 5
        %v4110 = vsel %vm4089, %v4107, %v4109
        %v4111 = vrot.slane %v3901, 5
        %v4112 = vsel %vm4089, %v4109, %v4111
        %v4113 = vrot.slane %v3902, 5
        %v4114 = vsel %vm4089, %v4111, %v4113
        %v4115 = vrot.slane %v3903, 5
        %v4116 = vsel %vm4089, %v4113, %v4115
        %v4117 = vrot.slane %v3904, 5
        %v4118 = vsel %vm4089, %v4115, %v4117
        %v4119 = vrot.slane %v3905, 5
        %v4120 = vsel %vm4089, %v4117, %v4119
        %v4121 = vrot.slane %v3906, 5
        %v4122 = vsel %vm4089, %v4119, %v4121
        %v4123 = vrot.slane %v3907, 5
        %v4124 = vsel %vm4089, %v4121, %v4123
        %v4125 = vrot.slane %v3908, 5
        %v4126 = vsel %vm4089, %v4123, %v4125
        %v4127 = vrot.slane %v3909, 5
        %v4128 = vsel %vm4089, %v4125, %v4127
        %v4129 = vrot.slane %v3910, 5
        %v4130 = vsel %vm4089, %v4127, %v4129
        %v4131 = vrot.slane %v3911, 5
        %v4132 = vsel %vm4089, %v4129, %v4131
        %v4133 = vrot.slane %v3912, 5
        %v4134 = vsel %vm4089, %v4131, %v4133
        %v4135 = vrot.slane %v3913, 5
        %v4136 = vsel %vm4089, %v4133, %v4135
        %v4137 = vrot.slane %v3914, 5
        %v4138 = vsel %vm4089, %v4135, %v4137
        %v4139 = vrot.slane %v3915, 5
        %v4140 = vsel %vm4089, %v4137, %v4139
        %v4141 = vrot.slane %v3916, 5
        %v4142 = vsel %vm4089, %v4139, %v4141
        %v4143 = vrot.slane %v3917, 5
        %v4144 = vsel %vm4089, %v4141, %v4143
        %v4145 = vrot.slane %v3918, 5
        %v4146 = vsel %vm4089, %v4143, %v4145
        %v4147 = vrot.slane %v3919, 5
        %v4148 = vsel %vm4089, %v4145, %v4147
        %v4149 = vrot.slane %v3920, 5
        %v4150 = vsel %vm4089, %v4147, %v4149
        %v4151 = vrot.slane %v3921, 5
        %v4152 = vsel %vm4089, %v4149, %v4151
        %v4153 = vrot.slane %v3922, 5
        %v4154 = vsel %vm4089, %v4151, %v4153
        %v4155 = vrot.slane %v3923, 5
        %v4156 = vsel %vm4089, %v4153, %v4155
        %v4157 = vrot.slane %v3924, 5
        %v4158 = vsel %vm4089, %v4155, %v4157
        %v4159 = vrot.slane %v3925, 5
        %v4160 = vsel %vm4089, %v4157, %v4159
        %v4198 = vsel %vm4089, 0.0, %v4090
        %v4199 = vsel %vm4089, %v4159, 0.0
        %v4200 = vpack.c.bf16 0.0, 0.0
        %v4201 = vpack.c.bf16 %v4198, %v4198
        %v4202 = vpack.c.bf16 %v4092, %v4092
        %v4203 = vpack.c.bf16 %v4094, %v4094
        %v4204 = vpack.c.bf16 %v4096, %v4096
        %v4205 = vpack.c.bf16 %v4098, %v4098
        %v4206 = vpack.c.bf16 %v4100, %v4100
        %v4207 = vpack.c.bf16 %v4102, %v4102
        %v4208 = vpack.c.bf16 %v4104, %v4104
        %v4209 = vpack.c.bf16 %v4106, %v4106
        %v4210 = vpack.c.bf16 %v4108, %v4108
        %v4211 = vpack.c.bf16 %v4110, %v4110
        %v4212 = vpack.c.bf16 %v4112, %v4112
        %v4213 = vpack.c.bf16 %v4114, %v4114
        %v4214 = vpack.c.bf16 %v4116, %v4116
        %v4215 = vpack.c.bf16 %v4118, %v4118
        %v4216 = vpack.c.bf16 %v4120, %v4120
        %v4217 = vpack.c.bf16 %v4122, %v4122
        %v4218 = vpack.c.bf16 %v4124, %v4124
        %v4219 = vpack.c.bf16 %v4126, %v4126
        %v4220 = vpack.c.bf16 %v4128, %v4128
        %v4221 = vpack.c.bf16 %v4130, %v4130
        %v4222 = vpack.c.bf16 %v4132, %v4132
        %v4223 = vpack.c.bf16 %v4134, %v4134
        %v4224 = vpack.c.bf16 %v4136, %v4136
        %v4225 = vpack.c.bf16 %v4138, %v4138
        %v4226 = vpack.c.bf16 %v4140, %v4140
        %v4227 = vpack.c.bf16 %v4142, %v4142
        %v4228 = vpack.c.bf16 %v4144, %v4144
        %v4229 = vpack.c.bf16 %v4146, %v4146
        %v4230 = vpack.c.bf16 %v4148, %v4148
        %v4231 = vpack.c.bf16 %v4150, %v4150
        %v4232 = vpack.c.bf16 %v4152, %v4152
        %v4233 = vpack.c.bf16 %v4154, %v4154
        %v4234 = vpack.c.bf16 %v4156, %v4156
        %v4235 = vpack.c.bf16 %v4158, %v4158
        %v4236 = vpack.c.bf16 %v4160, %v4160
        %v4237 = vpack.c.bf16 %v4199, %v4199
        %4238 = vst [vmem:[%s376] sm:$0xf] %v4200
        %4239 = vst [vmem:[%s376 + $0x4] sm:$0xf] %v4200
        %4240 = vst [vmem:[%s376 + $0x8] sm:$0xf] %v4201
        %4241 = vst [vmem:[%s376 + $0xc] sm:$0xf] %v4202
        %4242 = vst [vmem:[%s376 + $0x10] sm:$0xf] %v4203
        %4243 = vst [vmem:[%s376 + $0x14] sm:$0xf] %v4204
        %4244 = vst [vmem:[%s376 + $0x18] sm:$0xf] %v4205
        %4245 = vst [vmem:[%s376 + $0x1c] sm:$0xf] %v4206
        %4246 = vst [vmem:[%s376 + $0x20] sm:$0xf] %v4207
        %4247 = vst [vmem:[%s376 + $0x24] sm:$0xf] %v4208
        %4248 = vst [vmem:[%s376 + $0x28] sm:$0xf] %v4209
        %4249 = vst [vmem:[%s376 + $0x2c] sm:$0xf] %v4210
        %4250 = vst [vmem:[%s376 + $0x30] sm:$0xf] %v4211
        %4251 = vst [vmem:[%s376 + $0x34] sm:$0xf] %v4212
        %4252 = vst [vmem:[%s376 + $0x38] sm:$0xf] %v4213
        %4253 = vst [vmem:[%s376 + $0x3c] sm:$0xf] %v4214
        %4254 = vst [vmem:[%s376 + $0x40] sm:$0xf] %v4215
        %4255 = vst [vmem:[%s376 + $0x44] sm:$0xf] %v4216
        %4256 = vst [vmem:[%s376 + $0x48] sm:$0xf] %v4217
        %4257 = vst [vmem:[%s376 + $0x4c] sm:$0xf] %v4218
        %4258 = vst [vmem:[%s376 + $0x50] sm:$0xf] %v4219
        %4259 = vst [vmem:[%s376 + $0x54] sm:$0xf] %v4220
        %4260 = vst [vmem:[%s376 + $0x58] sm:$0xf] %v4221
        %4261 = vst [vmem:[%s376 + $0x5c] sm:$0xf] %v4222
        %4262 = vst [vmem:[%s376 + $0x60] sm:$0xf] %v4223
        %4263 = vst [vmem:[%s376 + $0x64] sm:$0xf] %v4224
        %4264 = vst [vmem:[%s376 + $0x68] sm:$0xf] %v4225
        %4265 = vst [vmem:[%s376 + $0x6c] sm:$0xf] %v4226
        %4266 = vst [vmem:[%s376 + $0x70] sm:$0xf] %v4227
        %4267 = vst [vmem:[%s376 + $0x74] sm:$0xf] %v4228
        %4268 = vst [vmem:[%s376 + $0x78] sm:$0xf] %v4229
        %4269 = vst [vmem:[%s376 + $0x7c] sm:$0xf] %v4230
        %4270 = vst [vmem:[%s376 + $0x80] sm:$0xf] %v4231
        %4271 = vst [vmem:[%s376 + $0x84] sm:$0xf] %v4232
        %4272 = vst [vmem:[%s376 + $0x88] sm:$0xf] %v4233
        %4273 = vst [vmem:[%s376 + $0x8c] sm:$0xf] %v4234
        %4274 = vst [vmem:[%s376 + $0x90] sm:$0xf] %v4235
        %4275 = vst [vmem:[%s376 + $0x94] sm:$0xf] %v4236
        %4276 = vst [vmem:[%s376 + $0x98] sm:$0xf] %v4237
        %4277 = vst [vmem:[%s376 + $0x9c] sm:$0xf] %v4200
        %4278 = vst [vmem:[%s376 + $0xa0] sm:$0xf] %v4200
        %4279 = vst [vmem:[%s376 + $0xa4] sm:$0xf] %v4200
        %s4280 = sand.u32 %s173, 1
        %s4281 = scalar_lea.sflag [#allocation4], %s4280
        %s4282 = sand.u32 %s173, 1
        %s4283 = smul.addr %s4282, 168
        %s4284 = scalar_lea.vmem [#allocation7], %s4283
        %s4285 = sand.u32 %s34, 1
        %s4286 = scalar_lea.sflag [#allocation9], %s4285
        %s4287 = sand.u32 %s199, 1
        %s4288 = scalar_lea.vmem [#allocation8], %s4287
        %s4289 = sand.u32 %s34, 1
        %s4290 = scalar_lea.sflag [#allocation9], %s4289
        %s4291 = sand.u32 %s225, 1
        %s4292 = scalar_lea.vmem [#allocation10], %s4291
        %s4293 = sand.u32 %s251, 1
        %s4294 = scalar_lea.sflag [#allocation12], %s4293
        %s4295 = sand.u32 %s251, 1
        %s4296 = scalar_lea.vmem [#allocation11], %s4295
        // Predicated region
        $region53: #{tpu_custom_call.1} parent=43 // pred_check
          %p4297 = pneg %p183
        $region54: #{tpu_custom_call.1} parent=43 // pred_check_branch
          %4299 = sbr.rel (%p4297) target = $region56
        $region55: #{tpu_custom_call.1} parent=43 // pred_region
          %4301 = vsyncadd %s4281, 0
          %s4302 = smul.addr %s34, 42
          %s4303 = smul.addr %s4302, 4
          %s4304 = scalar_lea.hbm %s6, %s4303
          %s4305 = sshll.u32 %s4284, 4
          %s4306 = int_to_ptr.vmem [resolvable:$true] %s4305
          %s4307 = sshll.u32 %s4304, 4
          %s4308 = int_to_ptr.hbm [resolvable:$true] %s4307
          %4313 = dma.vmem_to_hbm [thread:$0]  %s4306, 2688, %s4308, %s4281, 64, 64, 4
        $region56: #{tpu_custom_call.1} parent=43 // pred_fallthru
          _
        // Predicated region
        $region57: #{tpu_custom_call.1} parent=43 // pred_check
          %p4314 = pneg %p209
        $region58: #{tpu_custom_call.1} parent=43 // pred_check_branch
          %4316 = sbr.rel (%p4314) target = $region60
        $region59: #{tpu_custom_call.1} parent=43 // pred_region
          %4318 = vsyncadd %s4286, 0
          %s4319 = scalar_lea.hbm %s7, %s34
          %s4321 = sshll.u32 %s4288, 4
          %s4322 = int_to_ptr.vmem [resolvable:$true] %s4321
          %s4323 = sshll.u32 %s4319, 4
          %s4324 = int_to_ptr.hbm [resolvable:$true] %s4323
          %4326 = dma.vmem_to_hbm [thread:$0]  %s4322, 16, %s4324, %s4286
        $region60: #{tpu_custom_call.1} parent=43 // pred_fallthru
          _
        // Predicated region
        $region61: #{tpu_custom_call.1} parent=43 // pred_check
          %p4327 = pneg %p235
        $region62: #{tpu_custom_call.1} parent=43 // pred_check_branch
          %4329 = sbr.rel (%p4327) target = $region64
        $region63: #{tpu_custom_call.1} parent=43 // pred_region
          %4331 = vsyncadd %s4290, 0
          %s4332 = scalar_lea.hbm %s8, %s34
          %s4334 = sshll.u32 %s4292, 4
          %s4335 = int_to_ptr.vmem [resolvable:$true] %s4334
          %s4336 = sshll.u32 %s4332, 4
          %s4337 = int_to_ptr.hbm [resolvable:$true] %s4336
          %4339 = dma.vmem_to_hbm [thread:$0]  %s4335, 16, %s4337, %s4290
        $region64: #{tpu_custom_call.1} parent=43 // pred_fallthru
          _
        // Predicated region
        $region65: #{tpu_custom_call.1} parent=43 // pred_check
          %p4340 = pneg %p261
        $region66: #{tpu_custom_call.1} parent=43 // pred_check_branch
          %4342 = sbr.rel (%p4340) target = $region68
        $region67: #{tpu_custom_call.1} parent=43 // pred_region
          %4344 = vsyncadd %s4294, 0
          %s4345 = scalar_lea.hbm %s9, %s34
          %s4347 = sshll.u32 %s4296, 4
          %s4348 = int_to_ptr.vmem [resolvable:$true] %s4347
          %s4349 = sshll.u32 %s4345, 4
          %s4350 = int_to_ptr.hbm [resolvable:$true] %s4349
          %4352 = dma.vmem_to_hbm [thread:$0]  %s4348, 16, %s4350, %s4294
        $region68: #{tpu_custom_call.1} parent=43 // pred_fallthru
          _
      $region44: #{tpu_custom_call.1} parent=5 // pred_fallthru
        _
      %p4353 = scmp.le.s32.totalorder 2, %s29
      // Predicated region
      $region69: #{tpu_custom_call.1} parent=5 // pred_check
        %p4354 = pneg %p4353
      $region70: #{tpu_custom_call.1} parent=5 // pred_check_branch
        %4356 = sbr.rel (%p4354) target = $region72
      $region71: #{tpu_custom_call.1} parent=5 // pred_region
        %s4357 = ssub.s32 %s29, 2
        // Predicated region
        $region73: #{tpu_custom_call.1} parent=71 // pred_check
          %p4358 = pneg %p189
        $region74: #{tpu_custom_call.1} parent=71 // pred_check_branch
          %4360 = sbr.rel (%p4358) target = $region76
        $region75: #{tpu_custom_call.1} parent=71 // pred_region
          %s4361 = sand.u32 %s174, 1
          %s4362 = scalar_lea.sflag [#allocation4], %s4361
          %s4363 = sand.u32 %s174, 1
          %s4364 = smul.addr %s4363, 168
          %s4365 = scalar_lea.vmem [#allocation7], %s4364
          %4367 = dma.done %s4362, 2688
        $region76: #{tpu_custom_call.1} parent=71 // pred_fallthru
          _
        // Predicated region
        $region77: #{tpu_custom_call.1} parent=71 // pred_check
          %p4368 = pneg %p215
        $region78: #{tpu_custom_call.1} parent=71 // pred_check_branch
          %4370 = sbr.rel (%p4368) target = $region80
        $region79: #{tpu_custom_call.1} parent=71 // pred_region
          %s4371 = sand.u32 %s35, 1
          %s4372 = scalar_lea.sflag [#allocation9], %s4371
          %s4373 = sand.u32 %s200, 1
          %s4374 = scalar_lea.vmem [#allocation8], %s4373
          %4376 = dma.done %s4372, 16
        $region80: #{tpu_custom_call.1} parent=71 // pred_fallthru
          _
        // Predicated region
        $region81: #{tpu_custom_call.1} parent=71 // pred_check
          %p4377 = pneg %p241
        $region82: #{tpu_custom_call.1} parent=71 // pred_check_branch
          %4379 = sbr.rel (%p4377) target = $region84
        $region83: #{tpu_custom_call.1} parent=71 // pred_region
          %s4380 = sand.u32 %s35, 1
          %s4381 = scalar_lea.sflag [#allocation9], %s4380
          %s4382 = sand.u32 %s226, 1
          %s4383 = scalar_lea.vmem [#allocation10], %s4382
          %4385 = dma.done %s4381, 16
        $region84: #{tpu_custom_call.1} parent=71 // pred_fallthru
          _
        // Predicated region
        $region85: #{tpu_custom_call.1} parent=71 // pred_check
          %p4386 = pneg %p267
        $region86: #{tpu_custom_call.1} parent=71 // pred_check_branch
          %4388 = sbr.rel (%p4386) target = $region88
        $region87: #{tpu_custom_call.1} parent=71 // pred_region
          %s4389 = sand.u32 %s252, 1
          %s4390 = scalar_lea.sflag [#allocation12], %s4389
          %s4391 = sand.u32 %s252, 1
          %s4392 = scalar_lea.vmem [#allocation11], %s4391
          %4394 = dma.done %s4390, 16
        $region88: #{tpu_custom_call.1} parent=71 // pred_fallthru
          _
      $region72: #{tpu_custom_call.1} parent=5 // pred_fallthru
        _
    $region6: #{tpu_custom_call.1} parent=1 // loop_footer
      %s33 = sadd.s32 1, %s29
    $region7: #{tpu_custom_call.1} parent=1 // loop_footer_branch
      %28 = sbr.rel target = $region3
    $region8: #{tpu_custom_call.1} parent=1 // loop_exit
      _
    %4395 = vsyncpa [#allocation3], 1
    %s4396 = scalar_lea.sflag [#allocation3], 1
    %4397 = vsyncpa %s4396, 1
    %4398 = vsyncpa [#allocation6], 1
    %4399 = vsyncpa [#allocation4], 1
    %s4400 = scalar_lea.sflag [#allocation4], 1
    %4401 = vsyncpa %s4400, 1
    %4402 = vsyncpa [#allocation9], 1
    %s4403 = scalar_lea.sflag [#allocation9], 1
    %4404 = vsyncpa %s4403, 1
    %4405 = vsyncpa [#allocation12], 1
    %s4406 = scalar_lea.sflag [#allocation12], 1
    %4407 = vsyncpa %s4406, 1

</llo_original>
